<compile_context>
chip_gen: v7x
topology: tpu7x:2x2x1
jax: 0.10.0
libtpu: 0.0.40
codegen_flags: <defaults>
</compile_context>

<pallas_src>
import math

import jax
import jax.numpy as jnp
from jax.experimental import pallas as pl
from jax.experimental.pallas import tpu as pltpu

# ----------------------- small, self-consistent config -----------------------
D_MODEL  = 32     # d_model
N_HEADS  = 4      # n_heads
D_K      = 8      # d_k
D_V      = 8      # d_v
D_FF     = 64     # d_ff
N_LAYERS = 2      # n_layers
VOCAB    = 64     # vocab_size
MAX_LEN  = 16     # max_len
N_SEG    = 2      # n_segments
BATCH    = 2
SEQ      = 8
N_MASK   = 2      # number of masked positions per sequence
LN_EPS   = 1e-5   # PyTorch nn.LayerNorm default
QKV_COLS = N_HEADS * (2 * D_K + D_V)   # fused [Wq | Wk | Wv] width = 96


# --------------------------- in-kernel math helpers ---------------------------
def _layernorm(x, g, b):
    mu = jnp.mean(x, axis=-1, keepdims=True)
    var = jnp.mean(jnp.square(x - mu), axis=-1, keepdims=True)
    return (x - mu) * jax.lax.rsqrt(var + LN_EPS) * g + b


def _erf(x):
    # Abramowitz & Stegun 7.1.26 rational approximation, |abs err| < 1.5e-7.
    p  = jnp.float32(0.3275911)
    a1 = jnp.float32(0.254829592)
    a2 = jnp.float32(-0.284496736)
    a3 = jnp.float32(1.421413741)
    a4 = jnp.float32(-1.453152027)
    a5 = jnp.float32(1.061405429)
    sgn = jnp.where(x >= 0, jnp.float32(1.0), jnp.float32(-1.0))
    ax = jnp.abs(x)
    t = 1.0 / (1.0 + p * ax)
    poly = ((((a5 * t + a4) * t + a3) * t + a2) * t + a1) * t
    return sgn * (1.0 - poly * jnp.exp(-ax * ax))


def _gelu_exact(x):
    # gelu(x) = 0.5 * x * (1 + erf(x / sqrt(2)))  (F.gelu default)
    return 0.5 * x * (1.0 + _erf(x * jnp.float32(0.7071067811865476)))


def _encoder_layer(x, bias, wqkv, bqkv, wo, bo, ln_g, ln_b, w1, b1, w2, b2):
    """One encoder layer for a single batch element. x: (S, D), bias: (S, S)."""
    scale = jnp.float32(1.0 / math.sqrt(D_K))
    # fused QKV projection (single wide matmul, N = 3*H*d_k)
    qkv = jnp.dot(x, wqkv, preferred_element_type=jnp.float32) + bqkv  # (S, 96)
    k_off = N_HEADS * D_K
    v_off = N_HEADS * D_K * 2
    ctx_parts = []
    for h in range(N_HEADS):                      # unrolled; no (B,H) grid steps
        qh = qkv[:, h * D_K:(h + 1) * D_K]                       # (S, d_k)
        kh = qkv[:, k_off + h * D_K:k_off + (h + 1) * D_K]       # (S, d_k)
        vh = qkv[:, v_off + h * D_V:v_off + (h + 1) * D_V]       # (S, d_v)
        # scores = Q @ K^T / sqrt(d_k) + additive pad bias
        s = jax.lax.dot_general(qh, kh, (((1,), (1,)), ((), ())),
                                preferred_element_type=jnp.float32) * scale
        s = s + bias
        # numerically-stable softmax (f32), reciprocal on the EUP
        s = s - jnp.max(s, axis=-1, keepdims=True)
        e = jnp.exp(s)
        attn = e * pl.reciprocal(jnp.sum(e, axis=-1, keepdims=True), approx=True)
        ctx_parts.append(jnp.dot(attn, vh, preferred_element_type=jnp.float32))
    ctx = jnp.concatenate(ctx_parts, axis=-1)                    # (S, H*d_v)
    # output projection + residual + LayerNorm (fused epilogue)
    y = _layernorm(jnp.dot(ctx, wo, preferred_element_type=jnp.float32) + bo + x,
                   ln_g, ln_b)
    # position-wise FFN: W1 + bias + exact GELU + W2 + bias (no residual/norm,
    # matching the reference PoswiseFeedForwardNet usage)
    h_ff = _gelu_exact(jnp.dot(y, w1, preferred_element_type=jnp.float32) + b1)
    return jnp.dot(h_ff, w2, preferred_element_type=jnp.float32) + b2


# ------------------------------ the fused kernel ------------------------------
def _bert_kernel(mp_ref,                                   # SMEM scalar prefetch
                 emb_ref, bias_ref, eg_ref, eb_ref,
                 wqkv_ref, bqkv_ref, wo_ref, bo_ref, lng_ref, lnb_ref,
                 w1_ref, b1_ref, w2_ref, b2_ref,
                 fcw_ref, fcb_ref, clsw_ref, clsb_ref,
                 linw_ref, linb_ref, ng_ref, nb_ref, embw_ref, decb_ref,
                 o_ref, nsp_ref, lm_ref):
    # One grid step == one batch element (grid axis is "parallel" for megacore).
    b = pl.program_id(0)
    bias = bias_ref[0]                                   # (S, S) additive mask
    x = _layernorm(emb_ref[0], eg_ref[...], eb_ref[...]) # embedding LayerNorm
    for l in range(N_LAYERS):                            # unrolled layer loop
        x = _encoder_layer(x, bias,
                           wqkv_ref[l], bqkv_ref[l], wo_ref[l], bo_ref[l],
                           lng_ref[l], lnb_ref[l],
                           w1_ref[l], b1_ref[l], w2_ref[l], b2_ref[l])
    o_ref[0] = x                                         # encoder output

    # ---- NSP head: tanh(fc(cls)) -> classifier (tanh on EUP, fused) ----
    cls_tok = x[0:1, :]                                  # (1, D) static slice
    h_pooled = jnp.tanh(
        jnp.dot(cls_tok, fcw_ref[...], preferred_element_type=jnp.float32)
        + fcb_ref[...])
    nsp_ref[0] = (jnp.dot(h_pooled, clsw_ref[...],
                          preferred_element_type=jnp.float32) + clsb_ref[...])

    # ---- masked-LM head: in-kernel gather (one-hot matmul) -> linear ->
    #      exact GELU -> LayerNorm -> tied decoder ----
    iota_s = jax.lax.broadcasted_iota(jnp.int32, (1, SEQ), 1)
    rows = []
    for m in range(N_MASK):                              # unrolled, M is tiny
        pos = mp_ref[b, m]                               # SMEM scalar read
        rows.append((iota_s == pos).astype(jnp.float32))
    one_hot = jnp.concatenate(rows, axis=0)              # (M, S)
    hm = jnp.dot(one_hot, x, preferred_element_type=jnp.float32)      # (M, D)
    hm = (jnp.dot(hm, linw_ref[...], preferred_element_type=jnp.float32)
          + linb_ref[...])
    hm = _layernorm(_gelu_exact(hm), ng_ref[...], nb_ref[...])
    # tied decoder: hm @ tok_embed.T without materializing the transpose
    lm_ref[0] = (jax.lax.dot_general(hm, embw_ref[...],
                                     (((1,), (1,)), ((), ())),
                                     preferred_element_type=jnp.float32)
                 + decb_ref[...])


# ------------------------------ kernel wrapper --------------------------------
def pallas_bert(emb, bias, masked_pos, p):
    B, S, D = emb.shape
    L = p["Wqkv"].shape[0]
    F = p["W1"].shape[-1]
    M = masked_pos.shape[1]

    def fixed(shape):   # whole-array block, same every grid step (no re-DMA)
        nd = len(shape)

        def idx(b, *prefetch):
            return (0,) * nd
        return pl.BlockSpec(shape, idx)

    def per_batch(shape):
        nd = len(shape)

        def idx(b, *prefetch):
            return (b,) + (0,) * (nd - 1)
        return pl.BlockSpec(shape, idx)

    grid_spec = pltpu.PrefetchScalarGridSpec(
        num_scalar_prefetch=1,                            # masked_pos -> SMEM
        grid=(B,),
        in_specs=[
            per_batch((1, S, D)),                         # embeddings
            per_batch((1, S, S)),                         # additive pad bias
            fixed((1, D)), fixed((1, D)),                 # embedding LN
            fixed((L, D, QKV_COLS)), fixed((L, 1, QKV_COLS)),  # fused QKV
            fixed((L, N_HEADS * D_V, D)), fixed((L, 1, D)),     # Wo, bo
            fixed((L, 1, D)), fixed((L, 1, D)),           # post-attn LN
            fixed((L, D, F)), fixed((L, 1, F)),           # W1, b1
            fixed((L, F, D)), fixed((L, 1, D)),           # W2, b2
            fixed((D, D)), fixed((1, D)),                 # NSP fc
            fixed((D, 2)), fixed((1, 2)),                 # NSP classifier
            fixed((D, D)), fixed((1, D)),                 # MLM linear
            fixed((1, D)), fixed((1, D)),                 # MLM LayerNorm
            fixed((VOCAB, D)), fixed((1, VOCAB)),         # tied decoder
        ],
        out_specs=[
            per_batch((1, S, D)),                         # encoder output
            per_batch((1, 1, 2)),                         # NSP logits
            per_batch((1, M, VOCAB)),                     # masked-LM logits
        ],
    )

    x, nsp, lm = pl.pallas_call(
        _bert_kernel,
        out_shape=(
            jax.ShapeDtypeStruct((B, S, D), jnp.float32),
            jax.ShapeDtypeStruct((B, 1, 2), jnp.float32),
            jax.ShapeDtypeStruct((B, M, VOCAB), jnp.float32),
        ),
        grid_spec=grid_spec,
        compiler_params=pltpu.CompilerParams(
            dimension_semantics=("parallel",)),           # v7x: 2 TensorCores
    )(masked_pos, emb, bias,
      p["emb_ln_g"], p["emb_ln_b"],
      p["Wqkv"], p["bqkv"], p["Wo"], p["bo"], p["ln1_g"], p["ln1_b"],
      p["W1"], p["b1"], p["W2"], p["b2"],
      p["fc_w"], p["fc_b"], p["cls_w"], p["cls_b"],
      p["lin_w"], p["lin_b"], p["norm_g"], p["norm_b"],
      p["tok_embed"], p["dec_b"])
    return x, nsp[:, 0, :], lm


# ------------------------------ parameter init --------------------------------
def init_params(key):
    def nrm(k, shape, scale=0.02):
        return scale * jax.random.normal(k, shape, dtype=jnp.float32)

    keys = iter(jax.random.split(key, 32))
    # NOTE: the reference MultiHeadAttention creates its output Linear and
    # LayerNorm freshly (random) inside forward(); here they are fixed,
    # deterministically-initialized per-layer parameters.
    params = {
        "tok_embed": nrm(next(keys), (VOCAB, D_MODEL)),
        "pos_embed": nrm(next(keys), (MAX_LEN, D_MODEL)),
        "seg_embed": nrm(next(keys), (N_SEG, D_MODEL)),
        "emb_ln_g": jnp.ones((1, D_MODEL), jnp.float32),
        "emb_ln_b": jnp.zeros((1, D_MODEL), jnp.float32),
        # layer-stacked encoder weights (leading dim = layer)
        "Wqkv": nrm(next(keys), (N_LAYERS, D_MODEL, QKV_COLS)),   # [Wq|Wk|Wv]
        "bqkv": jnp.zeros((N_LAYERS, 1, QKV_COLS), jnp.float32),
        "Wo": nrm(next(keys), (N_LAYERS, N_HEADS * D_V, D_MODEL)),
        "bo": jnp.zeros((N_LAYERS, 1, D_MODEL), jnp.float32),
        "ln1_g": jnp.ones((N_LAYERS, 1, D_MODEL), jnp.float32),
        "ln1_b": jnp.zeros((N_LAYERS, 1, D_MODEL), jnp.float32),
        "W1": nrm(next(keys), (N_LAYERS, D_MODEL, D_FF)),
        "b1": jnp.zeros((N_LAYERS, 1, D_FF), jnp.float32),
        "W2": nrm(next(keys), (N_LAYERS, D_FF, D_MODEL)),
        "b2": jnp.zeros((N_LAYERS, 1, D_MODEL), jnp.float32),
        # heads
        "fc_w": nrm(next(keys), (D_MODEL, D_MODEL)),
        "fc_b": jnp.zeros((1, D_MODEL), jnp.float32),
        "cls_w": nrm(next(keys), (D_MODEL, 2)),
        "cls_b": jnp.zeros((1, 2), jnp.float32),
        "lin_w": nrm(next(keys), (D_MODEL, D_MODEL)),
        "lin_b": jnp.zeros((1, D_MODEL), jnp.float32),
        "norm_g": jnp.ones((1, D_MODEL), jnp.float32),
        "norm_b": jnp.zeros((1, D_MODEL), jnp.float32),
        "dec_b": jnp.zeros((1, VOCAB), jnp.float32),
    }
    return params


# -------------------------------- forward pass --------------------------------
def bert_forward(params, input_ids, segment_ids, masked_pos):
    B, S = input_ids.shape

    # TODO(synk): embedding-table gathers stay in plain JAX; a Pallas gather at
    # this size would need manual DMA machinery for no benefit.
    tok = params["tok_embed"][input_ids]                     # (B, S, D)
    pos = params["pos_embed"][jnp.arange(S)][None, :, :]     # (1, S, D)
    seg = params["seg_embed"][segment_ids]                   # (B, S, D)
    emb = tok + pos + seg                                    # (B, S, D)

    # additive key-padding bias (-1e9 where key id == 0), shared by all layers
    bias = jnp.where(input_ids == 0, jnp.float32(-1e9), jnp.float32(0.0))
    bias = jnp.broadcast_to(bias[:, None, :], (B, S, S))

    # --- single fused pallas_call: encoder + NSP head + masked-LM head ---
    x, logits_nsp, logits_lm = pallas_bert(emb, bias, masked_pos, params)
    return logits_lm, logits_nsp, x


# ------------------------------------ main -------------------------------------
if __name__ == "__main__":
    key = jax.random.PRNGKey(0)
    k_par, k_ids = jax.random.split(key)

    params = init_params(k_par)

    input_ids = jax.random.randint(k_ids, (BATCH, SEQ), 1, VOCAB, dtype=jnp.int32)
    input_ids = input_ids.at[:, -2:].set(0)  # pad last two tokens -> exercises mask
    segment_ids = jnp.concatenate(
        [jnp.zeros((BATCH, SEQ // 2), jnp.int32),
         jnp.ones((BATCH, SEQ // 2), jnp.int32)],
        axis=1,
    )
    masked_pos = jnp.array([[1, 3], [2, 4]], dtype=jnp.int32)

    fwd = jax.jit(bert_forward)
    logits_lm, logits_nsp, output = fwd(params, input_ids, segment_ids, masked_pos)
    jax.block_until_ready((logits_lm, logits_nsp, output))

    assert logits_lm.shape == (BATCH, N_MASK, VOCAB)
    assert logits_nsp.shape == (BATCH, 2)
    assert output.shape == (BATCH, SEQ, D_MODEL)
    assert bool(jnp.all(jnp.isfinite(logits_lm)))
    assert bool(jnp.all(jnp.isfinite(logits_nsp)))
    print("KERNEL_OK")
</pallas_src>

<mosaic_0001>
module attributes {stable_mosaic.version = 11 : i64} {
  func.func @_bert_kernel(%arg0: i32, %arg1: memref<2x2xi32, #tpu.memory_space<smem>>, %arg2: memref<1x8x32xf32, #tpu.memory_space<vmem>>, %arg3: memref<1x8x8xf32, #tpu.memory_space<vmem>>, %arg4: memref<1x32xf32, #tpu.memory_space<vmem>>, %arg5: memref<1x32xf32, #tpu.memory_space<vmem>>, %arg6: memref<2x32x96xf32, #tpu.memory_space<vmem>>, %arg7: memref<2x1x96xf32, #tpu.memory_space<vmem>>, %arg8: memref<2x32x32xf32, #tpu.memory_space<vmem>>, %arg9: memref<2x1x32xf32, #tpu.memory_space<vmem>>, %arg10: memref<2x1x32xf32, #tpu.memory_space<vmem>>, %arg11: memref<2x1x32xf32, #tpu.memory_space<vmem>>, %arg12: memref<2x32x64xf32, #tpu.memory_space<vmem>>, %arg13: memref<2x1x64xf32, #tpu.memory_space<vmem>>, %arg14: memref<2x64x32xf32, #tpu.memory_space<vmem>>, %arg15: memref<2x1x32xf32, #tpu.memory_space<vmem>>, %arg16: memref<32x32xf32, #tpu.memory_space<vmem>>, %arg17: memref<1x32xf32, #tpu.memory_space<vmem>>, %arg18: memref<32x2xf32, #tpu.memory_space<vmem>>, %arg19: memref<1x2xf32, #tpu.memory_space<vmem>>, %arg20: memref<32x32xf32, #tpu.memory_space<vmem>>, %arg21: memref<1x32xf32, #tpu.memory_space<vmem>>, %arg22: memref<1x32xf32, #tpu.memory_space<vmem>>, %arg23: memref<1x32xf32, #tpu.memory_space<vmem>>, %arg24: memref<64x32xf32, #tpu.memory_space<vmem>>, %arg25: memref<1x64xf32, #tpu.memory_space<vmem>>, %arg26: memref<1x8x32xf32, #tpu.memory_space<vmem>>, %arg27: memref<1x1x2xf32, #tpu.memory_space<vmem>>, %arg28: memref<1x2x64xf32, #tpu.memory_space<vmem>>) attributes {dimension_semantics = [#tpu.dimension_semantics<parallel>], iteration_bounds = array<i64: 2>, scalar_prefetch = 1 : i64, scratch_operands = 0 : i64, tpu.core_type = #tpu.core_type<tc>, window_params = [{transform_indices = @transform_0, window_bounds = array<i64: 1, 8, 32>}, {transform_indices = @transform_1, window_bounds = array<i64: 1, 8, 8>}, {pipeline_mode = #tpu.pipeline_mode<synchronous>, transform_indices = @transform_2, window_bounds = array<i64: 1, 32>}, {pipeline_mode = #tpu.pipeline_mode<synchronous>, transform_indices = @transform_3, window_bounds = array<i64: 1, 32>}, {pipeline_mode = #tpu.pipeline_mode<synchronous>, transform_indices = @transform_4, window_bounds = array<i64: 2, 32, 96>}, {pipeline_mode = #tpu.pipeline_mode<synchronous>, transform_indices = @transform_5, window_bounds = array<i64: 2, 1, 96>}, {pipeline_mode = #tpu.pipeline_mode<synchronous>, transform_indices = @transform_6, window_bounds = array<i64: 2, 32, 32>}, {pipeline_mode = #tpu.pipeline_mode<synchronous>, transform_indices = @transform_7, window_bounds = array<i64: 2, 1, 32>}, {pipeline_mode = #tpu.pipeline_mode<synchronous>, transform_indices = @transform_8, window_bounds = array<i64: 2, 1, 32>}, {pipeline_mode = #tpu.pipeline_mode<synchronous>, transform_indices = @transform_9, window_bounds = array<i64: 2, 1, 32>}, {pipeline_mode = #tpu.pipeline_mode<synchronous>, transform_indices = @transform_10, window_bounds = array<i64: 2, 32, 64>}, {pipeline_mode = #tpu.pipeline_mode<synchronous>, transform_indices = @transform_11, window_bounds = array<i64: 2, 1, 64>}, {pipeline_mode = #tpu.pipeline_mode<synchronous>, transform_indices = @transform_12, window_bounds = array<i64: 2, 64, 32>}, {pipeline_mode = #tpu.pipeline_mode<synchronous>, transform_indices = @transform_13, window_bounds = array<i64: 2, 1, 32>}, {pipeline_mode = #tpu.pipeline_mode<synchronous>, transform_indices = @transform_14, window_bounds = array<i64: 32, 32>}, {pipeline_mode = #tpu.pipeline_mode<synchronous>, transform_indices = @transform_15, window_bounds = array<i64: 1, 32>}, {pipeline_mode = #tpu.pipeline_mode<synchronous>, transform_indices = @transform_16, window_bounds = array<i64: 32, 2>}, {pipeline_mode = #tpu.pipeline_mode<synchronous>, transform_indices = @transform_17, window_bounds = array<i64: 1, 2>}, {pipeline_mode = #tpu.pipeline_mode<synchronous>, transform_indices = @transform_18, window_bounds = array<i64: 32, 32>}, {pipeline_mode = #tpu.pipeline_mode<synchronous>, transform_indices = @transform_19, window_bounds = array<i64: 1, 32>}, {pipeline_mode = #tpu.pipeline_mode<synchronous>, transform_indices = @transform_20, window_bounds = array<i64: 1, 32>}, {pipeline_mode = #tpu.pipeline_mode<synchronous>, transform_indices = @transform_21, window_bounds = array<i64: 1, 32>}, {pipeline_mode = #tpu.pipeline_mode<synchronous>, transform_indices = @transform_22, window_bounds = array<i64: 64, 32>}, {pipeline_mode = #tpu.pipeline_mode<synchronous>, transform_indices = @transform_23, window_bounds = array<i64: 1, 64>}, {transform_indices = @transform_24, window_bounds = array<i64: 1, 8, 32>}, {transform_indices = @transform_25, window_bounds = array<i64: 1, 1, 2>}, {transform_indices = @transform_26, window_bounds = array<i64: 1, 2, 64>}]} {
    %c0 = arith.constant 0 : index
    %c0_0 = arith.constant 0 : index
    %c0_1 = arith.constant 0 : index
    %0 = vector.load %arg3[%c0, %c0_0, %c0_1] : memref<1x8x8xf32, #tpu.memory_space<vmem>>, vector<1x8x8xf32>
    %1 = vector.shape_cast %0 : vector<1x8x8xf32> to vector<8x8xf32>
    %c0_2 = arith.constant 0 : index
    %c0_3 = arith.constant 0 : index
    %c0_4 = arith.constant 0 : index
    %2 = vector.load %arg2[%c0_2, %c0_3, %c0_4] : memref<1x8x32xf32, #tpu.memory_space<vmem>>, vector<1x8x32xf32>
    %3 = vector.shape_cast %2 : vector<1x8x32xf32> to vector<8x32xf32>
    %c0_5 = arith.constant 0 : index
    %c0_6 = arith.constant 0 : index
    %4 = vector.load %arg4[%c0_5, %c0_6] : memref<1x32xf32, #tpu.memory_space<vmem>>, vector<1x32xf32>
    %c0_7 = arith.constant 0 : index
    %c0_8 = arith.constant 0 : index
    %5 = vector.load %arg5[%c0_7, %c0_8] : memref<1x32xf32, #tpu.memory_space<vmem>>, vector<1x32xf32>
    %cst = arith.constant dense<0.000000e+00> : vector<8xf32>
    %6 = vector.multi_reduction <add>, %3, %cst [1] : vector<8x32xf32> to vector<8xf32>
    %7 = vector.shape_cast %6 : vector<8xf32> to vector<8x1xf32>
    %cst_9 = arith.constant 3.200000e+01 : f32
    %8 = vector.broadcast %cst_9 : f32 to vector<8x1xf32>
    %9 = arith.divf %7, %8 : vector<8x1xf32>
    %10 = vector.broadcast %9 : vector<8x1xf32> to vector<8x32xf32>
    %11 = arith.subf %3, %10 : vector<8x32xf32>
    %12 = arith.mulf %11, %11 : vector<8x32xf32>
    %cst_10 = arith.constant dense<0.000000e+00> : vector<8xf32>
    %13 = vector.multi_reduction <add>, %12, %cst_10 [1] : vector<8x32xf32> to vector<8xf32>
    %14 = vector.shape_cast %13 : vector<8xf32> to vector<8x1xf32>
    %cst_11 = arith.constant 3.200000e+01 : f32
    %15 = vector.broadcast %cst_11 : f32 to vector<8x1xf32>
    %16 = arith.divf %14, %15 : vector<8x1xf32>
    %17 = vector.broadcast %9 : vector<8x1xf32> to vector<8x32xf32>
    %18 = arith.subf %3, %17 : vector<8x32xf32>
    %cst_12 = arith.constant 9.99999974E-6 : f32
    %19 = vector.broadcast %cst_12 : f32 to vector<8x1xf32>
    %20 = arith.addf %16, %19 : vector<8x1xf32>
    %21 = math.rsqrt %20 : vector<8x1xf32>
    %22 = vector.broadcast %21 : vector<8x1xf32> to vector<8x32xf32>
    %23 = arith.mulf %18, %22 : vector<8x32xf32>
    %24 = vector.broadcast %4 : vector<1x32xf32> to vector<8x32xf32>
    %25 = arith.mulf %23, %24 : vector<8x32xf32>
    %26 = vector.broadcast %5 : vector<1x32xf32> to vector<8x32xf32>
    %27 = arith.addf %25, %26 : vector<8x32xf32>
    %c0_13 = arith.constant 0 : index
    %c0_14 = arith.constant 0 : index
    %c0_15 = arith.constant 0 : index
    %28 = vector.load %arg6[%c0_13, %c0_14, %c0_15] : memref<2x32x96xf32, #tpu.memory_space<vmem>>, vector<1x32x96xf32>
    %29 = vector.shape_cast %28 : vector<1x32x96xf32> to vector<32x96xf32>
    %c0_16 = arith.constant 0 : index
    %c0_17 = arith.constant 0 : index
    %c0_18 = arith.constant 0 : index
    %30 = vector.load %arg7[%c0_16, %c0_17, %c0_18] : memref<2x1x96xf32, #tpu.memory_space<vmem>>, vector<1x1x96xf32>
    %31 = vector.shape_cast %30 : vector<1x1x96xf32> to vector<1x96xf32>
    %c0_19 = arith.constant 0 : index
    %c0_20 = arith.constant 0 : index
    %c0_21 = arith.constant 0 : index
    %32 = vector.load %arg8[%c0_19, %c0_20, %c0_21] : memref<2x32x32xf32, #tpu.memory_space<vmem>>, vector<1x32x32xf32>
    %33 = vector.shape_cast %32 : vector<1x32x32xf32> to vector<32x32xf32>
    %c0_22 = arith.constant 0 : index
    %c0_23 = arith.constant 0 : index
    %c0_24 = arith.constant 0 : index
    %34 = vector.load %arg9[%c0_22, %c0_23, %c0_24] : memref<2x1x32xf32, #tpu.memory_space<vmem>>, vector<1x1x32xf32>
    %35 = vector.shape_cast %34 : vector<1x1x32xf32> to vector<1x32xf32>
    %c0_25 = arith.constant 0 : index
    %c0_26 = arith.constant 0 : index
    %c0_27 = arith.constant 0 : index
    %36 = vector.load %arg10[%c0_25, %c0_26, %c0_27] : memref<2x1x32xf32, #tpu.memory_space<vmem>>, vector<1x1x32xf32>
    %37 = vector.shape_cast %36 : vector<1x1x32xf32> to vector<1x32xf32>
    %c0_28 = arith.constant 0 : index
    %c0_29 = arith.constant 0 : index
    %c0_30 = arith.constant 0 : index
    %38 = vector.load %arg11[%c0_28, %c0_29, %c0_30] : memref<2x1x32xf32, #tpu.memory_space<vmem>>, vector<1x1x32xf32>
    %39 = vector.shape_cast %38 : vector<1x1x32xf32> to vector<1x32xf32>
    %c0_31 = arith.constant 0 : index
    %c0_32 = arith.constant 0 : index
    %c0_33 = arith.constant 0 : index
    %40 = vector.load %arg12[%c0_31, %c0_32, %c0_33] : memref<2x32x64xf32, #tpu.memory_space<vmem>>, vector<1x32x64xf32>
    %41 = vector.shape_cast %40 : vector<1x32x64xf32> to vector<32x64xf32>
    %c0_34 = arith.constant 0 : index
    %c0_35 = arith.constant 0 : index
    %c0_36 = arith.constant 0 : index
    %42 = vector.load %arg13[%c0_34, %c0_35, %c0_36] : memref<2x1x64xf32, #tpu.memory_space<vmem>>, vector<1x1x64xf32>
    %43 = vector.shape_cast %42 : vector<1x1x64xf32> to vector<1x64xf32>
    %c0_37 = arith.constant 0 : index
    %c0_38 = arith.constant 0 : index
    %c0_39 = arith.constant 0 : index
    %44 = vector.load %arg14[%c0_37, %c0_38, %c0_39] : memref<2x64x32xf32, #tpu.memory_space<vmem>>, vector<1x64x32xf32>
    %45 = vector.shape_cast %44 : vector<1x64x32xf32> to vector<64x32xf32>
    %c0_40 = arith.constant 0 : index
    %c0_41 = arith.constant 0 : index
    %c0_42 = arith.constant 0 : index
    %46 = vector.load %arg15[%c0_40, %c0_41, %c0_42] : memref<2x1x32xf32, #tpu.memory_space<vmem>>, vector<1x1x32xf32>
    %47 = vector.shape_cast %46 : vector<1x1x32xf32> to vector<1x32xf32>
    %cst_43 = arith.constant dense<0.000000e+00> : vector<8x96xf32>
    %48 = tpu.matmul %27, %29, %cst_43 {dimension_numbers = #tpu.dot_dimension_numbers<[1], [0], [0], [1], [0, 0, 1, 1], [], []>} : vector<8x32xf32>, vector<32x96xf32>, vector<8x96xf32> -> vector<8x96xf32>
    %49 = vector.broadcast %31 : vector<1x96xf32> to vector<8x96xf32>
    %50 = arith.addf %48, %49 : vector<8x96xf32>
    %51 = vector.extract_strided_slice %50 {offsets = [0, 0], sizes = [8, 8], strides = [1, 1]} : vector<8x96xf32> to vector<8x8xf32>
    %52 = vector.extract_strided_slice %50 {offsets = [0, 32], sizes = [8, 8], strides = [1, 1]} : vector<8x96xf32> to vector<8x8xf32>
    %53 = vector.extract_strided_slice %50 {offsets = [0, 64], sizes = [8, 8], strides = [1, 1]} : vector<8x96xf32> to vector<8x8xf32>
    %cst_44 = arith.constant dense<0.000000e+00> : vector<8x8xf32>
    %54 = tpu.matmul %51, %52, %cst_44 {dimension_numbers = #tpu.dot_dimension_numbers<[1], [1], [0], [0], [0, 0, 1, 0], [], []>} : vector<8x8xf32>, vector<8x8xf32>, vector<8x8xf32> -> vector<8x8xf32>
    %cst_45 = arith.constant 0.353553385 : f32
    %55 = vector.broadcast %cst_45 : f32 to vector<8x8xf32>
    %56 = arith.mulf %54, %55 : vector<8x8xf32>
    %57 = arith.addf %56, %1 : vector<8x8xf32>
    %cst_46 = arith.constant dense<0xFF800000> : vector<8xf32>
    %58 = vector.multi_reduction <maximumf>, %57, %cst_46 [1] : vector<8x8xf32> to vector<8xf32>
    %59 = vector.shape_cast %58 : vector<8xf32> to vector<8x1xf32>
    %60 = vector.broadcast %59 : vector<8x1xf32> to vector<8x8xf32>
    %61 = arith.subf %57, %60 : vector<8x8xf32>
    %62 = math.exp %61 : vector<8x8xf32>
    %cst_47 = arith.constant dense<0.000000e+00> : vector<8xf32>
    %63 = vector.multi_reduction <add>, %62, %cst_47 [1] : vector<8x8xf32> to vector<8xf32>
    %64 = vector.shape_cast %63 : vector<8xf32> to vector<8x1xf32>
    %65 = tpu.reciprocal %64 {approx = true} : vector<8x1xf32> -> vector<8x1xf32>
    %66 = vector.broadcast %65 : vector<8x1xf32> to vector<8x8xf32>
    %67 = arith.mulf %62, %66 : vector<8x8xf32>
    %cst_48 = arith.constant dense<0.000000e+00> : vector<8x8xf32>
    %68 = tpu.matmul %67, %53, %cst_48 {dimension_numbers = #tpu.dot_dimension_numbers<[1], [0], [0], [1], [0, 0, 1, 1], [], []>} : vector<8x8xf32>, vector<8x8xf32>, vector<8x8xf32> -> vector<8x8xf32>
    %69 = vector.extract_strided_slice %50 {offsets = [0, 8], sizes = [8, 8], strides = [1, 1]} : vector<8x96xf32> to vector<8x8xf32>
    %70 = vector.extract_strided_slice %50 {offsets = [0, 40], sizes = [8, 8], strides = [1, 1]} : vector<8x96xf32> to vector<8x8xf32>
    %71 = vector.extract_strided_slice %50 {offsets = [0, 72], sizes = [8, 8], strides = [1, 1]} : vector<8x96xf32> to vector<8x8xf32>
    %cst_49 = arith.constant dense<0.000000e+00> : vector<8x8xf32>
    %72 = tpu.matmul %69, %70, %cst_49 {dimension_numbers = #tpu.dot_dimension_numbers<[1], [1], [0], [0], [0, 0, 1, 0], [], []>} : vector<8x8xf32>, vector<8x8xf32>, vector<8x8xf32> -> vector<8x8xf32>
    %cst_50 = arith.constant 0.353553385 : f32
    %73 = vector.broadcast %cst_50 : f32 to vector<8x8xf32>
    %74 = arith.mulf %72, %73 : vector<8x8xf32>
    %75 = arith.addf %74, %1 : vector<8x8xf32>
    %cst_51 = arith.constant dense<0xFF800000> : vector<8xf32>
    %76 = vector.multi_reduction <maximumf>, %75, %cst_51 [1] : vector<8x8xf32> to vector<8xf32>
    %77 = vector.shape_cast %76 : vector<8xf32> to vector<8x1xf32>
    %78 = vector.broadcast %77 : vector<8x1xf32> to vector<8x8xf32>
    %79 = arith.subf %75, %78 : vector<8x8xf32>
    %80 = math.exp %79 : vector<8x8xf32>
    %cst_52 = arith.constant dense<0.000000e+00> : vector<8xf32>
    %81 = vector.multi_reduction <add>, %80, %cst_52 [1] : vector<8x8xf32> to vector<8xf32>
    %82 = vector.shape_cast %81 : vector<8xf32> to vector<8x1xf32>
    %83 = tpu.reciprocal %82 {approx = true} : vector<8x1xf32> -> vector<8x1xf32>
    %84 = vector.broadcast %83 : vector<8x1xf32> to vector<8x8xf32>
    %85 = arith.mulf %80, %84 : vector<8x8xf32>
    %cst_53 = arith.constant dense<0.000000e+00> : vector<8x8xf32>
    %86 = tpu.matmul %85, %71, %cst_53 {dimension_numbers = #tpu.dot_dimension_numbers<[1], [0], [0], [1], [0, 0, 1, 1], [], []>} : vector<8x8xf32>, vector<8x8xf32>, vector<8x8xf32> -> vector<8x8xf32>
    %87 = vector.extract_strided_slice %50 {offsets = [0, 16], sizes = [8, 8], strides = [1, 1]} : vector<8x96xf32> to vector<8x8xf32>
    %88 = vector.extract_strided_slice %50 {offsets = [0, 48], sizes = [8, 8], strides = [1, 1]} : vector<8x96xf32> to vector<8x8xf32>
    %89 = vector.extract_strided_slice %50 {offsets = [0, 80], sizes = [8, 8], strides = [1, 1]} : vector<8x96xf32> to vector<8x8xf32>
    %cst_54 = arith.constant dense<0.000000e+00> : vector<8x8xf32>
    %90 = tpu.matmul %87, %88, %cst_54 {dimension_numbers = #tpu.dot_dimension_numbers<[1], [1], [0], [0], [0, 0, 1, 0], [], []>} : vector<8x8xf32>, vector<8x8xf32>, vector<8x8xf32> -> vector<8x8xf32>
    %cst_55 = arith.constant 0.353553385 : f32
    %91 = vector.broadcast %cst_55 : f32 to vector<8x8xf32>
    %92 = arith.mulf %90, %91 : vector<8x8xf32>
    %93 = arith.addf %92, %1 : vector<8x8xf32>
    %cst_56 = arith.constant dense<0xFF800000> : vector<8xf32>
    %94 = vector.multi_reduction <maximumf>, %93, %cst_56 [1] : vector<8x8xf32> to vector<8xf32>
    %95 = vector.shape_cast %94 : vector<8xf32> to vector<8x1xf32>
    %96 = vector.broadcast %95 : vector<8x1xf32> to vector<8x8xf32>
    %97 = arith.subf %93, %96 : vector<8x8xf32>
    %98 = math.exp %97 : vector<8x8xf32>
    %cst_57 = arith.constant dense<0.000000e+00> : vector<8xf32>
    %99 = vector.multi_reduction <add>, %98, %cst_57 [1] : vector<8x8xf32> to vector<8xf32>
    %100 = vector.shape_cast %99 : vector<8xf32> to vector<8x1xf32>
    %101 = tpu.reciprocal %100 {approx = true} : vector<8x1xf32> -> vector<8x1xf32>
    %102 = vector.broadcast %101 : vector<8x1xf32> to vector<8x8xf32>
    %103 = arith.mulf %98, %102 : vector<8x8xf32>
    %cst_58 = arith.constant dense<0.000000e+00> : vector<8x8xf32>
    %104 = tpu.matmul %103, %89, %cst_58 {dimension_numbers = #tpu.dot_dimension_numbers<[1], [0], [0], [1], [0, 0, 1, 1], [], []>} : vector<8x8xf32>, vector<8x8xf32>, vector<8x8xf32> -> vector<8x8xf32>
    %105 = vector.extract_strided_slice %50 {offsets = [0, 24], sizes = [8, 8], strides = [1, 1]} : vector<8x96xf32> to vector<8x8xf32>
    %106 = vector.extract_strided_slice %50 {offsets = [0, 56], sizes = [8, 8], strides = [1, 1]} : vector<8x96xf32> to vector<8x8xf32>
    %107 = vector.extract_strided_slice %50 {offsets = [0, 88], sizes = [8, 8], strides = [1, 1]} : vector<8x96xf32> to vector<8x8xf32>
    %cst_59 = arith.constant dense<0.000000e+00> : vector<8x8xf32>
    %108 = tpu.matmul %105, %106, %cst_59 {dimension_numbers = #tpu.dot_dimension_numbers<[1], [1], [0], [0], [0, 0, 1, 0], [], []>} : vector<8x8xf32>, vector<8x8xf32>, vector<8x8xf32> -> vector<8x8xf32>
    %cst_60 = arith.constant 0.353553385 : f32
    %109 = vector.broadcast %cst_60 : f32 to vector<8x8xf32>
    %110 = arith.mulf %108, %109 : vector<8x8xf32>
    %111 = arith.addf %110, %1 : vector<8x8xf32>
    %cst_61 = arith.constant dense<0xFF800000> : vector<8xf32>
    %112 = vector.multi_reduction <maximumf>, %111, %cst_61 [1] : vector<8x8xf32> to vector<8xf32>
    %113 = vector.shape_cast %112 : vector<8xf32> to vector<8x1xf32>
    %114 = vector.broadcast %113 : vector<8x1xf32> to vector<8x8xf32>
    %115 = arith.subf %111, %114 : vector<8x8xf32>
    %116 = math.exp %115 : vector<8x8xf32>
    %cst_62 = arith.constant dense<0.000000e+00> : vector<8xf32>
    %117 = vector.multi_reduction <add>, %116, %cst_62 [1] : vector<8x8xf32> to vector<8xf32>
    %118 = vector.shape_cast %117 : vector<8xf32> to vector<8x1xf32>
    %119 = tpu.reciprocal %118 {approx = true} : vector<8x1xf32> -> vector<8x1xf32>
    %120 = vector.broadcast %119 : vector<8x1xf32> to vector<8x8xf32>
    %121 = arith.mulf %116, %120 : vector<8x8xf32>
    %cst_63 = arith.constant dense<0.000000e+00> : vector<8x8xf32>
    %122 = tpu.matmul %121, %107, %cst_63 {dimension_numbers = #tpu.dot_dimension_numbers<[1], [0], [0], [1], [0, 0, 1, 1], [], []>} : vector<8x8xf32>, vector<8x8xf32>, vector<8x8xf32> -> vector<8x8xf32>
    %123 = tpu.concatenate %68, %86, %104, %122 in 1 : vector<8x8xf32>, vector<8x8xf32>, vector<8x8xf32>, vector<8x8xf32> -> vector<8x32xf32>
    %cst_64 = arith.constant dense<0.000000e+00> : vector<8x32xf32>
    %124 = tpu.matmul %123, %33, %cst_64 {dimension_numbers = #tpu.dot_dimension_numbers<[1], [0], [0], [1], [0, 0, 1, 1], [], []>} : vector<8x32xf32>, vector<32x32xf32>, vector<8x32xf32> -> vector<8x32xf32>
    %125 = vector.broadcast %35 : vector<1x32xf32> to vector<8x32xf32>
    %126 = arith.addf %124, %125 : vector<8x32xf32>
    %127 = arith.addf %126, %27 : vector<8x32xf32>
    %cst_65 = arith.constant dense<0.000000e+00> : vector<8xf32>
    %128 = vector.multi_reduction <add>, %127, %cst_65 [1] : vector<8x32xf32> to vector<8xf32>
    %129 = vector.shape_cast %128 : vector<8xf32> to vector<8x1xf32>
    %cst_66 = arith.constant 3.200000e+01 : f32
    %130 = vector.broadcast %cst_66 : f32 to vector<8x1xf32>
    %131 = arith.divf %129, %130 : vector<8x1xf32>
    %132 = vector.broadcast %131 : vector<8x1xf32> to vector<8x32xf32>
    %133 = arith.subf %127, %132 : vector<8x32xf32>
    %134 = arith.mulf %133, %133 : vector<8x32xf32>
    %cst_67 = arith.constant dense<0.000000e+00> : vector<8xf32>
    %135 = vector.multi_reduction <add>, %134, %cst_67 [1] : vector<8x32xf32> to vector<8xf32>
    %136 = vector.shape_cast %135 : vector<8xf32> to vector<8x1xf32>
    %cst_68 = arith.constant 3.200000e+01 : f32
    %137 = vector.broadcast %cst_68 : f32 to vector<8x1xf32>
    %138 = arith.divf %136, %137 : vector<8x1xf32>
    %139 = vector.broadcast %131 : vector<8x1xf32> to vector<8x32xf32>
    %140 = arith.subf %127, %139 : vector<8x32xf32>
    %cst_69 = arith.constant 9.99999974E-6 : f32
    %141 = vector.broadcast %cst_69 : f32 to vector<8x1xf32>
    %142 = arith.addf %138, %141 : vector<8x1xf32>
    %143 = math.rsqrt %142 : vector<8x1xf32>
    %144 = vector.broadcast %143 : vector<8x1xf32> to vector<8x32xf32>
    %145 = arith.mulf %140, %144 : vector<8x32xf32>
    %146 = vector.broadcast %37 : vector<1x32xf32> to vector<8x32xf32>
    %147 = arith.mulf %145, %146 : vector<8x32xf32>
    %148 = vector.broadcast %39 : vector<1x32xf32> to vector<8x32xf32>
    %149 = arith.addf %147, %148 : vector<8x32xf32>
    %cst_70 = arith.constant dense<0.000000e+00> : vector<8x64xf32>
    %150 = tpu.matmul %149, %41, %cst_70 {dimension_numbers = #tpu.dot_dimension_numbers<[1], [0], [0], [1], [0, 0, 1, 1], [], []>} : vector<8x32xf32>, vector<32x64xf32>, vector<8x64xf32> -> vector<8x64xf32>
    %151 = vector.broadcast %43 : vector<1x64xf32> to vector<8x64xf32>
    %152 = arith.addf %150, %151 : vector<8x64xf32>
    %cst_71 = arith.constant 5.000000e-01 : f32
    %153 = vector.broadcast %cst_71 : f32 to vector<8x64xf32>
    %154 = arith.mulf %153, %152 : vector<8x64xf32>
    %cst_72 = arith.constant 0.707106769 : f32
    %155 = vector.broadcast %cst_72 : f32 to vector<8x64xf32>
    %156 = arith.mulf %152, %155 : vector<8x64xf32>
    %cst_73 = arith.constant 0.000000e+00 : f32
    %157 = vector.broadcast %cst_73 : f32 to vector<8x64xf32>
    %158 = arith.cmpf oge, %156, %157 : vector<8x64xf32>
    %cst_74 = arith.constant 1.000000e+00 : f32
    %cst_75 = arith.constant -1.000000e+00 : f32
    %159 = vector.broadcast %cst_74 : f32 to vector<8x64xf32>
    %160 = vector.broadcast %cst_75 : f32 to vector<8x64xf32>
    %161 = arith.select %158, %159, %160 : vector<8x64xi1>, vector<8x64xf32>
    %162 = math.absf %156 : vector<8x64xf32>
    %cst_76 = arith.constant 0.327591091 : f32
    %163 = vector.broadcast %cst_76 : f32 to vector<8x64xf32>
    %164 = arith.mulf %163, %162 : vector<8x64xf32>
    %cst_77 = arith.constant 1.000000e+00 : f32
    %165 = vector.broadcast %cst_77 : f32 to vector<8x64xf32>
    %166 = arith.addf %165, %164 : vector<8x64xf32>
    %cst_78 = arith.constant 1.000000e+00 : f32
    %167 = vector.broadcast %cst_78 : f32 to vector<8x64xf32>
    %168 = arith.divf %167, %166 : vector<8x64xf32>
    %cst_79 = arith.constant 1.06140542 : f32
    %169 = vector.broadcast %cst_79 : f32 to vector<8x64xf32>
    %170 = arith.mulf %169, %168 : vector<8x64xf32>
    %cst_80 = arith.constant -1.45315206 : f32
    %171 = vector.broadcast %cst_80 : f32 to vector<8x64xf32>
    %172 = arith.addf %170, %171 : vector<8x64xf32>
    %173 = arith.mulf %172, %168 : vector<8x64xf32>
    %cst_81 = arith.constant 1.42141378 : f32
    %174 = vector.broadcast %cst_81 : f32 to vector<8x64xf32>
    %175 = arith.addf %173, %174 : vector<8x64xf32>
    %176 = arith.mulf %175, %168 : vector<8x64xf32>
    %cst_82 = arith.constant -0.284496725 : f32
    %177 = vector.broadcast %cst_82 : f32 to vector<8x64xf32>
    %178 = arith.addf %176, %177 : vector<8x64xf32>
    %179 = arith.mulf %178, %168 : vector<8x64xf32>
    %cst_83 = arith.constant 0.254829586 : f32
    %180 = vector.broadcast %cst_83 : f32 to vector<8x64xf32>
    %181 = arith.addf %179, %180 : vector<8x64xf32>
    %182 = arith.mulf %181, %168 : vector<8x64xf32>
    %cst_84 = arith.constant 0.000000e+00 : f32
    %183 = vector.broadcast %cst_84 : f32 to vector<8x64xf32>
    %184 = arith.subf %183, %162 : vector<8x64xf32>
    %185 = arith.mulf %184, %162 : vector<8x64xf32>
    %186 = math.exp %185 : vector<8x64xf32>
    %187 = arith.mulf %182, %186 : vector<8x64xf32>
    %cst_85 = arith.constant 1.000000e+00 : f32
    %188 = vector.broadcast %cst_85 : f32 to vector<8x64xf32>
    %189 = arith.subf %188, %187 : vector<8x64xf32>
    %190 = arith.mulf %161, %189 : vector<8x64xf32>
    %cst_86 = arith.constant 1.000000e+00 : f32
    %191 = vector.broadcast %cst_86 : f32 to vector<8x64xf32>
    %192 = arith.addf %191, %190 : vector<8x64xf32>
    %193 = arith.mulf %154, %192 : vector<8x64xf32>
    %cst_87 = arith.constant dense<0.000000e+00> : vector<8x32xf32>
    %194 = tpu.matmul %193, %45, %cst_87 {dimension_numbers = #tpu.dot_dimension_numbers<[1], [0], [0], [1], [0, 0, 1, 1], [], []>} : vector<8x64xf32>, vector<64x32xf32>, vector<8x32xf32> -> vector<8x32xf32>
    %195 = vector.broadcast %47 : vector<1x32xf32> to vector<8x32xf32>
    %196 = arith.addf %194, %195 : vector<8x32xf32>
    %c1 = arith.constant 1 : index
    %c0_88 = arith.constant 0 : index
    %c0_89 = arith.constant 0 : index
    %197 = vector.load %arg6[%c1, %c0_88, %c0_89] : memref<2x32x96xf32, #tpu.memory_space<vmem>>, vector<1x32x96xf32>
    %198 = vector.shape_cast %197 : vector<1x32x96xf32> to vector<32x96xf32>
    %c1_90 = arith.constant 1 : index
    %c0_91 = arith.constant 0 : index
    %c0_92 = arith.constant 0 : index
    %199 = vector.load %arg7[%c1_90, %c0_91, %c0_92] : memref<2x1x96xf32, #tpu.memory_space<vmem>>, vector<1x1x96xf32>
    %200 = vector.shape_cast %199 : vector<1x1x96xf32> to vector<1x96xf32>
    %c1_93 = arith.constant 1 : index
    %c0_94 = arith.constant 0 : index
    %c0_95 = arith.constant 0 : index
    %201 = vector.load %arg8[%c1_93, %c0_94, %c0_95] : memref<2x32x32xf32, #tpu.memory_space<vmem>>, vector<1x32x32xf32>
    %202 = vector.shape_cast %201 : vector<1x32x32xf32> to vector<32x32xf32>
    %c1_96 = arith.constant 1 : index
    %c0_97 = arith.constant 0 : index
    %c0_98 = arith.constant 0 : index
    %203 = vector.load %arg9[%c1_96, %c0_97, %c0_98] : memref<2x1x32xf32, #tpu.memory_space<vmem>>, vector<1x1x32xf32>
    %204 = vector.shape_cast %203 : vector<1x1x32xf32> to vector<1x32xf32>
    %c1_99 = arith.constant 1 : index
    %c0_100 = arith.constant 0 : index
    %c0_101 = arith.constant 0 : index
    %205 = vector.load %arg10[%c1_99, %c0_100, %c0_101] : memref<2x1x32xf32, #tpu.memory_space<vmem>>, vector<1x1x32xf32>
    %206 = vector.shape_cast %205 : vector<1x1x32xf32> to vector<1x32xf32>
    %c1_102 = arith.constant 1 : index
    %c0_103 = arith.constant 0 : index
    %c0_104 = arith.constant 0 : index
    %207 = vector.load %arg11[%c1_102, %c0_103, %c0_104] : memref<2x1x32xf32, #tpu.memory_space<vmem>>, vector<1x1x32xf32>
    %208 = vector.shape_cast %207 : vector<1x1x32xf32> to vector<1x32xf32>
    %c1_105 = arith.constant 1 : index
    %c0_106 = arith.constant 0 : index
    %c0_107 = arith.constant 0 : index
    %209 = vector.load %arg12[%c1_105, %c0_106, %c0_107] : memref<2x32x64xf32, #tpu.memory_space<vmem>>, vector<1x32x64xf32>
    %210 = vector.shape_cast %209 : vector<1x32x64xf32> to vector<32x64xf32>
    %c1_108 = arith.constant 1 : index
    %c0_109 = arith.constant 0 : index
    %c0_110 = arith.constant 0 : index
    %211 = vector.load %arg13[%c1_108, %c0_109, %c0_110] : memref<2x1x64xf32, #tpu.memory_space<vmem>>, vector<1x1x64xf32>
    %212 = vector.shape_cast %211 : vector<1x1x64xf32> to vector<1x64xf32>
    %c1_111 = arith.constant 1 : index
    %c0_112 = arith.constant 0 : index
    %c0_113 = arith.constant 0 : index
    %213 = vector.load %arg14[%c1_111, %c0_112, %c0_113] : memref<2x64x32xf32, #tpu.memory_space<vmem>>, vector<1x64x32xf32>
    %214 = vector.shape_cast %213 : vector<1x64x32xf32> to vector<64x32xf32>
    %c1_114 = arith.constant 1 : index
    %c0_115 = arith.constant 0 : index
    %c0_116 = arith.constant 0 : index
    %215 = vector.load %arg15[%c1_114, %c0_115, %c0_116] : memref<2x1x32xf32, #tpu.memory_space<vmem>>, vector<1x1x32xf32>
    %216 = vector.shape_cast %215 : vector<1x1x32xf32> to vector<1x32xf32>
    %cst_117 = arith.constant dense<0.000000e+00> : vector<8x96xf32>
    %217 = tpu.matmul %196, %198, %cst_117 {dimension_numbers = #tpu.dot_dimension_numbers<[1], [0], [0], [1], [0, 0, 1, 1], [], []>} : vector<8x32xf32>, vector<32x96xf32>, vector<8x96xf32> -> vector<8x96xf32>
    %218 = vector.broadcast %200 : vector<1x96xf32> to vector<8x96xf32>
    %219 = arith.addf %217, %218 : vector<8x96xf32>
    %220 = vector.extract_strided_slice %219 {offsets = [0, 0], sizes = [8, 8], strides = [1, 1]} : vector<8x96xf32> to vector<8x8xf32>
    %221 = vector.extract_strided_slice %219 {offsets = [0, 32], sizes = [8, 8], strides = [1, 1]} : vector<8x96xf32> to vector<8x8xf32>
    %222 = vector.extract_strided_slice %219 {offsets = [0, 64], sizes = [8, 8], strides = [1, 1]} : vector<8x96xf32> to vector<8x8xf32>
    %cst_118 = arith.constant dense<0.000000e+00> : vector<8x8xf32>
    %223 = tpu.matmul %220, %221, %cst_118 {dimension_numbers = #tpu.dot_dimension_numbers<[1], [1], [0], [0], [0, 0, 1, 0], [], []>} : vector<8x8xf32>, vector<8x8xf32>, vector<8x8xf32> -> vector<8x8xf32>
    %cst_119 = arith.constant 0.353553385 : f32
    %224 = vector.broadcast %cst_119 : f32 to vector<8x8xf32>
    %225 = arith.mulf %223, %224 : vector<8x8xf32>
    %226 = arith.addf %225, %1 : vector<8x8xf32>
    %cst_120 = arith.constant dense<0xFF800000> : vector<8xf32>
    %227 = vector.multi_reduction <maximumf>, %226, %cst_120 [1] : vector<8x8xf32> to vector<8xf32>
    %228 = vector.shape_cast %227 : vector<8xf32> to vector<8x1xf32>
    %229 = vector.broadcast %228 : vector<8x1xf32> to vector<8x8xf32>
    %230 = arith.subf %226, %229 : vector<8x8xf32>
    %231 = math.exp %230 : vector<8x8xf32>
    %cst_121 = arith.constant dense<0.000000e+00> : vector<8xf32>
    %232 = vector.multi_reduction <add>, %231, %cst_121 [1] : vector<8x8xf32> to vector<8xf32>
    %233 = vector.shape_cast %232 : vector<8xf32> to vector<8x1xf32>
    %234 = tpu.reciprocal %233 {approx = true} : vector<8x1xf32> -> vector<8x1xf32>
    %235 = vector.broadcast %234 : vector<8x1xf32> to vector<8x8xf32>
    %236 = arith.mulf %231, %235 : vector<8x8xf32>
    %cst_122 = arith.constant dense<0.000000e+00> : vector<8x8xf32>
    %237 = tpu.matmul %236, %222, %cst_122 {dimension_numbers = #tpu.dot_dimension_numbers<[1], [0], [0], [1], [0, 0, 1, 1], [], []>} : vector<8x8xf32>, vector<8x8xf32>, vector<8x8xf32> -> vector<8x8xf32>
    %238 = vector.extract_strided_slice %219 {offsets = [0, 8], sizes = [8, 8], strides = [1, 1]} : vector<8x96xf32> to vector<8x8xf32>
    %239 = vector.extract_strided_slice %219 {offsets = [0, 40], sizes = [8, 8], strides = [1, 1]} : vector<8x96xf32> to vector<8x8xf32>
    %240 = vector.extract_strided_slice %219 {offsets = [0, 72], sizes = [8, 8], strides = [1, 1]} : vector<8x96xf32> to vector<8x8xf32>
    %cst_123 = arith.constant dense<0.000000e+00> : vector<8x8xf32>
    %241 = tpu.matmul %238, %239, %cst_123 {dimension_numbers = #tpu.dot_dimension_numbers<[1], [1], [0], [0], [0, 0, 1, 0], [], []>} : vector<8x8xf32>, vector<8x8xf32>, vector<8x8xf32> -> vector<8x8xf32>
    %cst_124 = arith.constant 0.353553385 : f32
    %242 = vector.broadcast %cst_124 : f32 to vector<8x8xf32>
    %243 = arith.mulf %241, %242 : vector<8x8xf32>
    %244 = arith.addf %243, %1 : vector<8x8xf32>
    %cst_125 = arith.constant dense<0xFF800000> : vector<8xf32>
    %245 = vector.multi_reduction <maximumf>, %244, %cst_125 [1] : vector<8x8xf32> to vector<8xf32>
    %246 = vector.shape_cast %245 : vector<8xf32> to vector<8x1xf32>
    %247 = vector.broadcast %246 : vector<8x1xf32> to vector<8x8xf32>
    %248 = arith.subf %244, %247 : vector<8x8xf32>
    %249 = math.exp %248 : vector<8x8xf32>
    %cst_126 = arith.constant dense<0.000000e+00> : vector<8xf32>
    %250 = vector.multi_reduction <add>, %249, %cst_126 [1] : vector<8x8xf32> to vector<8xf32>
    %251 = vector.shape_cast %250 : vector<8xf32> to vector<8x1xf32>
    %252 = tpu.reciprocal %251 {approx = true} : vector<8x1xf32> -> vector<8x1xf32>
    %253 = vector.broadcast %252 : vector<8x1xf32> to vector<8x8xf32>
    %254 = arith.mulf %249, %253 : vector<8x8xf32>
    %cst_127 = arith.constant dense<0.000000e+00> : vector<8x8xf32>
    %255 = tpu.matmul %254, %240, %cst_127 {dimension_numbers = #tpu.dot_dimension_numbers<[1], [0], [0], [1], [0, 0, 1, 1], [], []>} : vector<8x8xf32>, vector<8x8xf32>, vector<8x8xf32> -> vector<8x8xf32>
    %256 = vector.extract_strided_slice %219 {offsets = [0, 16], sizes = [8, 8], strides = [1, 1]} : vector<8x96xf32> to vector<8x8xf32>
    %257 = vector.extract_strided_slice %219 {offsets = [0, 48], sizes = [8, 8], strides = [1, 1]} : vector<8x96xf32> to vector<8x8xf32>
    %258 = vector.extract_strided_slice %219 {offsets = [0, 80], sizes = [8, 8], strides = [1, 1]} : vector<8x96xf32> to vector<8x8xf32>
    %cst_128 = arith.constant dense<0.000000e+00> : vector<8x8xf32>
    %259 = tpu.matmul %256, %257, %cst_128 {dimension_numbers = #tpu.dot_dimension_numbers<[1], [1], [0], [0], [0, 0, 1, 0], [], []>} : vector<8x8xf32>, vector<8x8xf32>, vector<8x8xf32> -> vector<8x8xf32>
    %cst_129 = arith.constant 0.353553385 : f32
    %260 = vector.broadcast %cst_129 : f32 to vector<8x8xf32>
    %261 = arith.mulf %259, %260 : vector<8x8xf32>
    %262 = arith.addf %261, %1 : vector<8x8xf32>
    %cst_130 = arith.constant dense<0xFF800000> : vector<8xf32>
    %263 = vector.multi_reduction <maximumf>, %262, %cst_130 [1] : vector<8x8xf32> to vector<8xf32>
    %264 = vector.shape_cast %263 : vector<8xf32> to vector<8x1xf32>
    %265 = vector.broadcast %264 : vector<8x1xf32> to vector<8x8xf32>
    %266 = arith.subf %262, %265 : vector<8x8xf32>
    %267 = math.exp %266 : vector<8x8xf32>
    %cst_131 = arith.constant dense<0.000000e+00> : vector<8xf32>
    %268 = vector.multi_reduction <add>, %267, %cst_131 [1] : vector<8x8xf32> to vector<8xf32>
    %269 = vector.shape_cast %268 : vector<8xf32> to vector<8x1xf32>
    %270 = tpu.reciprocal %269 {approx = true} : vector<8x1xf32> -> vector<8x1xf32>
    %271 = vector.broadcast %270 : vector<8x1xf32> to vector<8x8xf32>
    %272 = arith.mulf %267, %271 : vector<8x8xf32>
    %cst_132 = arith.constant dense<0.000000e+00> : vector<8x8xf32>
    %273 = tpu.matmul %272, %258, %cst_132 {dimension_numbers = #tpu.dot_dimension_numbers<[1], [0], [0], [1], [0, 0, 1, 1], [], []>} : vector<8x8xf32>, vector<8x8xf32>, vector<8x8xf32> -> vector<8x8xf32>
    %274 = vector.extract_strided_slice %219 {offsets = [0, 24], sizes = [8, 8], strides = [1, 1]} : vector<8x96xf32> to vector<8x8xf32>
    %275 = vector.extract_strided_slice %219 {offsets = [0, 56], sizes = [8, 8], strides = [1, 1]} : vector<8x96xf32> to vector<8x8xf32>
    %276 = vector.extract_strided_slice %219 {offsets = [0, 88], sizes = [8, 8], strides = [1, 1]} : vector<8x96xf32> to vector<8x8xf32>
    %cst_133 = arith.constant dense<0.000000e+00> : vector<8x8xf32>
    %277 = tpu.matmul %274, %275, %cst_133 {dimension_numbers = #tpu.dot_dimension_numbers<[1], [1], [0], [0], [0, 0, 1, 0], [], []>} : vector<8x8xf32>, vector<8x8xf32>, vector<8x8xf32> -> vector<8x8xf32>
    %cst_134 = arith.constant 0.353553385 : f32
    %278 = vector.broadcast %cst_134 : f32 to vector<8x8xf32>
    %279 = arith.mulf %277, %278 : vector<8x8xf32>
    %280 = arith.addf %279, %1 : vector<8x8xf32>
    %cst_135 = arith.constant dense<0xFF800000> : vector<8xf32>
    %281 = vector.multi_reduction <maximumf>, %280, %cst_135 [1] : vector<8x8xf32> to vector<8xf32>
    %282 = vector.shape_cast %281 : vector<8xf32> to vector<8x1xf32>
    %283 = vector.broadcast %282 : vector<8x1xf32> to vector<8x8xf32>
    %284 = arith.subf %280, %283 : vector<8x8xf32>
    %285 = math.exp %284 : vector<8x8xf32>
    %cst_136 = arith.constant dense<0.000000e+00> : vector<8xf32>
    %286 = vector.multi_reduction <add>, %285, %cst_136 [1] : vector<8x8xf32> to vector<8xf32>
    %287 = vector.shape_cast %286 : vector<8xf32> to vector<8x1xf32>
    %288 = tpu.reciprocal %287 {approx = true} : vector<8x1xf32> -> vector<8x1xf32>
    %289 = vector.broadcast %288 : vector<8x1xf32> to vector<8x8xf32>
    %290 = arith.mulf %285, %289 : vector<8x8xf32>
    %cst_137 = arith.constant dense<0.000000e+00> : vector<8x8xf32>
    %291 = tpu.matmul %290, %276, %cst_137 {dimension_numbers = #tpu.dot_dimension_numbers<[1], [0], [0], [1], [0, 0, 1, 1], [], []>} : vector<8x8xf32>, vector<8x8xf32>, vector<8x8xf32> -> vector<8x8xf32>
    %292 = tpu.concatenate %237, %255, %273, %291 in 1 : vector<8x8xf32>, vector<8x8xf32>, vector<8x8xf32>, vector<8x8xf32> -> vector<8x32xf32>
    %cst_138 = arith.constant dense<0.000000e+00> : vector<8x32xf32>
    %293 = tpu.matmul %292, %202, %cst_138 {dimension_numbers = #tpu.dot_dimension_numbers<[1], [0], [0], [1], [0, 0, 1, 1], [], []>} : vector<8x32xf32>, vector<32x32xf32>, vector<8x32xf32> -> vector<8x32xf32>
    %294 = vector.broadcast %204 : vector<1x32xf32> to vector<8x32xf32>
    %295 = arith.addf %293, %294 : vector<8x32xf32>
    %296 = arith.addf %295, %196 : vector<8x32xf32>
    %cst_139 = arith.constant dense<0.000000e+00> : vector<8xf32>
    %297 = vector.multi_reduction <add>, %296, %cst_139 [1] : vector<8x32xf32> to vector<8xf32>
    %298 = vector.shape_cast %297 : vector<8xf32> to vector<8x1xf32>
    %cst_140 = arith.constant 3.200000e+01 : f32
    %299 = vector.broadcast %cst_140 : f32 to vector<8x1xf32>
    %300 = arith.divf %298, %299 : vector<8x1xf32>
    %301 = vector.broadcast %300 : vector<8x1xf32> to vector<8x32xf32>
    %302 = arith.subf %296, %301 : vector<8x32xf32>
    %303 = arith.mulf %302, %302 : vector<8x32xf32>
    %cst_141 = arith.constant dense<0.000000e+00> : vector<8xf32>
    %304 = vector.multi_reduction <add>, %303, %cst_141 [1] : vector<8x32xf32> to vector<8xf32>
    %305 = vector.shape_cast %304 : vector<8xf32> to vector<8x1xf32>
    %cst_142 = arith.constant 3.200000e+01 : f32
    %306 = vector.broadcast %cst_142 : f32 to vector<8x1xf32>
    %307 = arith.divf %305, %306 : vector<8x1xf32>
    %308 = vector.broadcast %300 : vector<8x1xf32> to vector<8x32xf32>
    %309 = arith.subf %296, %308 : vector<8x32xf32>
    %cst_143 = arith.constant 9.99999974E-6 : f32
    %310 = vector.broadcast %cst_143 : f32 to vector<8x1xf32>
    %311 = arith.addf %307, %310 : vector<8x1xf32>
    %312 = math.rsqrt %311 : vector<8x1xf32>
    %313 = vector.broadcast %312 : vector<8x1xf32> to vector<8x32xf32>
    %314 = arith.mulf %309, %313 : vector<8x32xf32>
    %315 = vector.broadcast %206 : vector<1x32xf32> to vector<8x32xf32>
    %316 = arith.mulf %314, %315 : vector<8x32xf32>
    %317 = vector.broadcast %208 : vector<1x32xf32> to vector<8x32xf32>
    %318 = arith.addf %316, %317 : vector<8x32xf32>
    %cst_144 = arith.constant dense<0.000000e+00> : vector<8x64xf32>
    %319 = tpu.matmul %318, %210, %cst_144 {dimension_numbers = #tpu.dot_dimension_numbers<[1], [0], [0], [1], [0, 0, 1, 1], [], []>} : vector<8x32xf32>, vector<32x64xf32>, vector<8x64xf32> -> vector<8x64xf32>
    %320 = vector.broadcast %212 : vector<1x64xf32> to vector<8x64xf32>
    %321 = arith.addf %319, %320 : vector<8x64xf32>
    %cst_145 = arith.constant 5.000000e-01 : f32
    %322 = vector.broadcast %cst_145 : f32 to vector<8x64xf32>
    %323 = arith.mulf %322, %321 : vector<8x64xf32>
    %cst_146 = arith.constant 0.707106769 : f32
    %324 = vector.broadcast %cst_146 : f32 to vector<8x64xf32>
    %325 = arith.mulf %321, %324 : vector<8x64xf32>
    %cst_147 = arith.constant 0.000000e+00 : f32
    %326 = vector.broadcast %cst_147 : f32 to vector<8x64xf32>
    %327 = arith.cmpf oge, %325, %326 : vector<8x64xf32>
    %cst_148 = arith.constant 1.000000e+00 : f32
    %cst_149 = arith.constant -1.000000e+00 : f32
    %328 = vector.broadcast %cst_148 : f32 to vector<8x64xf32>
    %329 = vector.broadcast %cst_149 : f32 to vector<8x64xf32>
    %330 = arith.select %327, %328, %329 : vector<8x64xi1>, vector<8x64xf32>
    %331 = math.absf %325 : vector<8x64xf32>
    %cst_150 = arith.constant 0.327591091 : f32
    %332 = vector.broadcast %cst_150 : f32 to vector<8x64xf32>
    %333 = arith.mulf %332, %331 : vector<8x64xf32>
    %cst_151 = arith.constant 1.000000e+00 : f32
    %334 = vector.broadcast %cst_151 : f32 to vector<8x64xf32>
    %335 = arith.addf %334, %333 : vector<8x64xf32>
    %cst_152 = arith.constant 1.000000e+00 : f32
    %336 = vector.broadcast %cst_152 : f32 to vector<8x64xf32>
    %337 = arith.divf %336, %335 : vector<8x64xf32>
    %cst_153 = arith.constant 1.06140542 : f32
    %338 = vector.broadcast %cst_153 : f32 to vector<8x64xf32>
    %339 = arith.mulf %338, %337 : vector<8x64xf32>
    %cst_154 = arith.constant -1.45315206 : f32
    %340 = vector.broadcast %cst_154 : f32 to vector<8x64xf32>
    %341 = arith.addf %339, %340 : vector<8x64xf32>
    %342 = arith.mulf %341, %337 : vector<8x64xf32>
    %cst_155 = arith.constant 1.42141378 : f32
    %343 = vector.broadcast %cst_155 : f32 to vector<8x64xf32>
    %344 = arith.addf %342, %343 : vector<8x64xf32>
    %345 = arith.mulf %344, %337 : vector<8x64xf32>
    %cst_156 = arith.constant -0.284496725 : f32
    %346 = vector.broadcast %cst_156 : f32 to vector<8x64xf32>
    %347 = arith.addf %345, %346 : vector<8x64xf32>
    %348 = arith.mulf %347, %337 : vector<8x64xf32>
    %cst_157 = arith.constant 0.254829586 : f32
    %349 = vector.broadcast %cst_157 : f32 to vector<8x64xf32>
    %350 = arith.addf %348, %349 : vector<8x64xf32>
    %351 = arith.mulf %350, %337 : vector<8x64xf32>
    %cst_158 = arith.constant 0.000000e+00 : f32
    %352 = vector.broadcast %cst_158 : f32 to vector<8x64xf32>
    %353 = arith.subf %352, %331 : vector<8x64xf32>
    %354 = arith.mulf %353, %331 : vector<8x64xf32>
    %355 = math.exp %354 : vector<8x64xf32>
    %356 = arith.mulf %351, %355 : vector<8x64xf32>
    %cst_159 = arith.constant 1.000000e+00 : f32
    %357 = vector.broadcast %cst_159 : f32 to vector<8x64xf32>
    %358 = arith.subf %357, %356 : vector<8x64xf32>
    %359 = arith.mulf %330, %358 : vector<8x64xf32>
    %cst_160 = arith.constant 1.000000e+00 : f32
    %360 = vector.broadcast %cst_160 : f32 to vector<8x64xf32>
    %361 = arith.addf %360, %359 : vector<8x64xf32>
    %362 = arith.mulf %323, %361 : vector<8x64xf32>
    %cst_161 = arith.constant dense<0.000000e+00> : vector<8x32xf32>
    %363 = tpu.matmul %362, %214, %cst_161 {dimension_numbers = #tpu.dot_dimension_numbers<[1], [0], [0], [1], [0, 0, 1, 1], [], []>} : vector<8x64xf32>, vector<64x32xf32>, vector<8x32xf32> -> vector<8x32xf32>
    %364 = vector.broadcast %216 : vector<1x32xf32> to vector<8x32xf32>
    %365 = arith.addf %363, %364 : vector<8x32xf32>
    %c0_162 = arith.constant 0 : index
    %c0_163 = arith.constant 0 : index
    %c0_164 = arith.constant 0 : index
    %366 = vector.load %arg26[%c0_162, %c0_163, %c0_164] : memref<1x8x32xf32, #tpu.memory_space<vmem>>, vector<1x8x32xf32>
    %367 = vector.shape_cast %366 : vector<1x8x32xf32> to vector<8x32xf32>
    %368 = vector.shape_cast %365 : vector<8x32xf32> to vector<1x8x32xf32>
    tpu.vector_store %arg26[%c0_162, %c0_163, %c0_164], %368 {strides = array<i32>} : memref<1x8x32xf32, #tpu.memory_space<vmem>>, vector<1x8x32xf32>,
    %369 = vector.extract_strided_slice %365 {offsets = [0, 0], sizes = [1, 32], strides = [1, 1]} : vector<8x32xf32> to vector<1x32xf32>
    %c0_165 = arith.constant 0 : index
    %c0_166 = arith.constant 0 : index
    %370 = vector.load %arg16[%c0_165, %c0_166] : memref<32x32xf32, #tpu.memory_space<vmem>>, vector<32x32xf32>
    %cst_167 = arith.constant dense<0.000000e+00> : vector<1x32xf32>
    %371 = tpu.matmul %369, %370, %cst_167 {dimension_numbers = #tpu.dot_dimension_numbers<[1], [0], [0], [1], [0, 0, 1, 1], [], []>} : vector<1x32xf32>, vector<32x32xf32>, vector<1x32xf32> -> vector<1x32xf32>
    %c0_168 = arith.constant 0 : index
    %c0_169 = arith.constant 0 : index
    %372 = vector.load %arg17[%c0_168, %c0_169] : memref<1x32xf32, #tpu.memory_space<vmem>>, vector<1x32xf32>
    %373 = arith.addf %371, %372 : vector<1x32xf32>
    %374 = math.tanh %373 : vector<1x32xf32>
    %c0_170 = arith.constant 0 : index
    %c0_171 = arith.constant 0 : index
    %375 = vector.load %arg18[%c0_170, %c0_171] : memref<32x2xf32, #tpu.memory_space<vmem>>, vector<32x2xf32>
    %cst_172 = arith.constant dense<0.000000e+00> : vector<1x2xf32>
    %376 = tpu.matmul %374, %375, %cst_172 {dimension_numbers = #tpu.dot_dimension_numbers<[1], [0], [0], [1], [0, 0, 1, 1], [], []>} : vector<1x32xf32>, vector<32x2xf32>, vector<1x2xf32> -> vector<1x2xf32>
    %c0_173 = arith.constant 0 : index
    %c0_174 = arith.constant 0 : index
    %377 = vector.load %arg19[%c0_173, %c0_174] : memref<1x2xf32, #tpu.memory_space<vmem>>, vector<1x2xf32>
    %378 = arith.addf %376, %377 : vector<1x2xf32>
    %c0_175 = arith.constant 0 : index
    %c0_176 = arith.constant 0 : index
    %c0_177 = arith.constant 0 : index
    %379 = vector.load %arg27[%c0_175, %c0_176, %c0_177] : memref<1x1x2xf32, #tpu.memory_space<vmem>>, vector<1x1x2xf32>
    %380 = vector.shape_cast %379 : vector<1x1x2xf32> to vector<1x2xf32>
    %381 = vector.shape_cast %378 : vector<1x2xf32> to vector<1x1x2xf32>
    tpu.vector_store %arg27[%c0_175, %c0_176, %c0_177], %381 {strides = array<i32>} : memref<1x1x2xf32, #tpu.memory_space<vmem>>, vector<1x1x2xf32>,
    %382 = tpu.iota {dimensions = array<i32: 1>} : vector<1x8xi32>
    %383 = arith.index_cast %arg0 : i32 to index
    %c0_178 = arith.constant 0 : index
    %384 = memref.load %arg1[%383, %c0_178] : memref<2x2xi32, #tpu.memory_space<smem>>
    %385 = vector.broadcast %384 : i32 to vector<1x8xi32>
    %386 = arith.cmpi eq, %382, %385 : vector<1x8xi32>
    %387 = arith.extui %386 : vector<1x8xi1> to vector<1x8xi32>
    %388 = arith.sitofp %387 : vector<1x8xi32> to vector<1x8xf32>
    %389 = arith.index_cast %arg0 : i32 to index
    %c1_179 = arith.constant 1 : index
    %390 = memref.load %arg1[%389, %c1_179] : memref<2x2xi32, #tpu.memory_space<smem>>
    %391 = vector.broadcast %390 : i32 to vector<1x8xi32>
    %392 = arith.cmpi eq, %382, %391 : vector<1x8xi32>
    %393 = arith.extui %392 : vector<1x8xi1> to vector<1x8xi32>
    %394 = arith.sitofp %393 : vector<1x8xi32> to vector<1x8xf32>
    %395 = tpu.concatenate %388, %394 in 0 : vector<1x8xf32>, vector<1x8xf32> -> vector<2x8xf32>
    %cst_180 = arith.constant dense<0.000000e+00> : vector<2x32xf32>
    %396 = tpu.matmul %395, %365, %cst_180 {dimension_numbers = #tpu.dot_dimension_numbers<[1], [0], [0], [1], [0, 0, 1, 1], [], []>} : vector<2x8xf32>, vector<8x32xf32>, vector<2x32xf32> -> vector<2x32xf32>
    %c0_181 = arith.constant 0 : index
    %c0_182 = arith.constant 0 : index
    %397 = vector.load %arg20[%c0_181, %c0_182] : memref<32x32xf32, #tpu.memory_space<vmem>>, vector<32x32xf32>
    %cst_183 = arith.constant dense<0.000000e+00> : vector<2x32xf32>
    %398 = tpu.matmul %396, %397, %cst_183 {dimension_numbers = #tpu.dot_dimension_numbers<[1], [0], [0], [1], [0, 0, 1, 1], [], []>} : vector<2x32xf32>, vector<32x32xf32>, vector<2x32xf32> -> vector<2x32xf32>
    %c0_184 = arith.constant 0 : index
    %c0_185 = arith.constant 0 : index
    %399 = vector.load %arg21[%c0_184, %c0_185] : memref<1x32xf32, #tpu.memory_space<vmem>>, vector<1x32xf32>
    %400 = vector.broadcast %399 : vector<1x32xf32> to vector<2x32xf32>
    %401 = arith.addf %398, %400 : vector<2x32xf32>
    %cst_186 = arith.constant 5.000000e-01 : f32
    %402 = vector.broadcast %cst_186 : f32 to vector<2x32xf32>
    %403 = arith.mulf %402, %401 : vector<2x32xf32>
    %cst_187 = arith.constant 0.707106769 : f32
    %404 = vector.broadcast %cst_187 : f32 to vector<2x32xf32>
    %405 = arith.mulf %401, %404 : vector<2x32xf32>
    %cst_188 = arith.constant 0.000000e+00 : f32
    %406 = vector.broadcast %cst_188 : f32 to vector<2x32xf32>
    %407 = arith.cmpf oge, %405, %406 : vector<2x32xf32>
    %cst_189 = arith.constant 1.000000e+00 : f32
    %cst_190 = arith.constant -1.000000e+00 : f32
    %408 = vector.broadcast %cst_189 : f32 to vector<2x32xf32>
    %409 = vector.broadcast %cst_190 : f32 to vector<2x32xf32>
    %410 = arith.select %407, %408, %409 : vector<2x32xi1>, vector<2x32xf32>
    %411 = math.absf %405 : vector<2x32xf32>
    %cst_191 = arith.constant 0.327591091 : f32
    %412 = vector.broadcast %cst_191 : f32 to vector<2x32xf32>
    %413 = arith.mulf %412, %411 : vector<2x32xf32>
    %cst_192 = arith.constant 1.000000e+00 : f32
    %414 = vector.broadcast %cst_192 : f32 to vector<2x32xf32>
    %415 = arith.addf %414, %413 : vector<2x32xf32>
    %cst_193 = arith.constant 1.000000e+00 : f32
    %416 = vector.broadcast %cst_193 : f32 to vector<2x32xf32>
    %417 = arith.divf %416, %415 : vector<2x32xf32>
    %cst_194 = arith.constant 1.06140542 : f32
    %418 = vector.broadcast %cst_194 : f32 to vector<2x32xf32>
    %419 = arith.mulf %418, %417 : vector<2x32xf32>
    %cst_195 = arith.constant -1.45315206 : f32
    %420 = vector.broadcast %cst_195 : f32 to vector<2x32xf32>
    %421 = arith.addf %419, %420 : vector<2x32xf32>
    %422 = arith.mulf %421, %417 : vector<2x32xf32>
    %cst_196 = arith.constant 1.42141378 : f32
    %423 = vector.broadcast %cst_196 : f32 to vector<2x32xf32>
    %424 = arith.addf %422, %423 : vector<2x32xf32>
    %425 = arith.mulf %424, %417 : vector<2x32xf32>
    %cst_197 = arith.constant -0.284496725 : f32
    %426 = vector.broadcast %cst_197 : f32 to vector<2x32xf32>
    %427 = arith.addf %425, %426 : vector<2x32xf32>
    %428 = arith.mulf %427, %417 : vector<2x32xf32>
    %cst_198 = arith.constant 0.254829586 : f32
    %429 = vector.broadcast %cst_198 : f32 to vector<2x32xf32>
    %430 = arith.addf %428, %429 : vector<2x32xf32>
    %431 = arith.mulf %430, %417 : vector<2x32xf32>
    %cst_199 = arith.constant 0.000000e+00 : f32
    %432 = vector.broadcast %cst_199 : f32 to vector<2x32xf32>
    %433 = arith.subf %432, %411 : vector<2x32xf32>
    %434 = arith.mulf %433, %411 : vector<2x32xf32>
    %435 = math.exp %434 : vector<2x32xf32>
    %436 = arith.mulf %431, %435 : vector<2x32xf32>
    %cst_200 = arith.constant 1.000000e+00 : f32
    %437 = vector.broadcast %cst_200 : f32 to vector<2x32xf32>
    %438 = arith.subf %437, %436 : vector<2x32xf32>
    %439 = arith.mulf %410, %438 : vector<2x32xf32>
    %cst_201 = arith.constant 1.000000e+00 : f32
    %440 = vector.broadcast %cst_201 : f32 to vector<2x32xf32>
    %441 = arith.addf %440, %439 : vector<2x32xf32>
    %442 = arith.mulf %403, %441 : vector<2x32xf32>
    %c0_202 = arith.constant 0 : index
    %c0_203 = arith.constant 0 : index
    %443 = vector.load %arg22[%c0_202, %c0_203] : memref<1x32xf32, #tpu.memory_space<vmem>>, vector<1x32xf32>
    %c0_204 = arith.constant 0 : index
    %c0_205 = arith.constant 0 : index
    %444 = vector.load %arg23[%c0_204, %c0_205] : memref<1x32xf32, #tpu.memory_space<vmem>>, vector<1x32xf32>
    %cst_206 = arith.constant dense<0.000000e+00> : vector<2xf32>
    %445 = vector.multi_reduction <add>, %442, %cst_206 [1] : vector<2x32xf32> to vector<2xf32>
    %446 = vector.shape_cast %445 : vector<2xf32> to vector<2x1xf32>
    %cst_207 = arith.constant 3.200000e+01 : f32
    %447 = vector.broadcast %cst_207 : f32 to vector<2x1xf32>
    %448 = arith.divf %446, %447 : vector<2x1xf32>
    %449 = vector.broadcast %448 : vector<2x1xf32> to vector<2x32xf32>
    %450 = arith.subf %442, %449 : vector<2x32xf32>
    %451 = arith.mulf %450, %450 : vector<2x32xf32>
    %cst_208 = arith.constant dense<0.000000e+00> : vector<2xf32>
    %452 = vector.multi_reduction <add>, %451, %cst_208 [1] : vector<2x32xf32> to vector<2xf32>
    %453 = vector.shape_cast %452 : vector<2xf32> to vector<2x1xf32>
    %cst_209 = arith.constant 3.200000e+01 : f32
    %454 = vector.broadcast %cst_209 : f32 to vector<2x1xf32>
    %455 = arith.divf %453, %454 : vector<2x1xf32>
    %456 = vector.broadcast %448 : vector<2x1xf32> to vector<2x32xf32>
    %457 = arith.subf %442, %456 : vector<2x32xf32>
    %cst_210 = arith.constant 9.99999974E-6 : f32
    %458 = vector.broadcast %cst_210 : f32 to vector<2x1xf32>
    %459 = arith.addf %455, %458 : vector<2x1xf32>
    %460 = math.rsqrt %459 : vector<2x1xf32>
    %461 = vector.broadcast %460 : vector<2x1xf32> to vector<2x32xf32>
    %462 = arith.mulf %457, %461 : vector<2x32xf32>
    %463 = vector.broadcast %443 : vector<1x32xf32> to vector<2x32xf32>
    %464 = arith.mulf %462, %463 : vector<2x32xf32>
    %465 = vector.broadcast %444 : vector<1x32xf32> to vector<2x32xf32>
    %466 = arith.addf %464, %465 : vector<2x32xf32>
    %c0_211 = arith.constant 0 : index
    %c0_212 = arith.constant 0 : index
    %467 = vector.load %arg24[%c0_211, %c0_212] : memref<64x32xf32, #tpu.memory_space<vmem>>, vector<64x32xf32>
    %cst_213 = arith.constant dense<0.000000e+00> : vector<2x64xf32>
    %468 = tpu.matmul %466, %467, %cst_213 {dimension_numbers = #tpu.dot_dimension_numbers<[1], [1], [0], [0], [0, 0, 1, 0], [], []>} : vector<2x32xf32>, vector<64x32xf32>, vector<2x64xf32> -> vector<2x64xf32>
    %c0_214 = arith.constant 0 : index
    %c0_215 = arith.constant 0 : index
    %469 = vector.load %arg25[%c0_214, %c0_215] : memref<1x64xf32, #tpu.memory_space<vmem>>, vector<1x64xf32>
    %470 = vector.broadcast %469 : vector<1x64xf32> to vector<2x64xf32>
    %471 = arith.addf %468, %470 : vector<2x64xf32>
    %c0_216 = arith.constant 0 : index
    %c0_217 = arith.constant 0 : index
    %c0_218 = arith.constant 0 : index
    %472 = vector.load %arg28[%c0_216, %c0_217, %c0_218] : memref<1x2x64xf32, #tpu.memory_space<vmem>>, vector<1x2x64xf32>
    %473 = vector.shape_cast %472 : vector<1x2x64xf32> to vector<2x64xf32>
    %474 = vector.shape_cast %471 : vector<2x64xf32> to vector<1x2x64xf32>
    tpu.vector_store %arg28[%c0_216, %c0_217, %c0_218], %474 {strides = array<i32>} : memref<1x2x64xf32, #tpu.memory_space<vmem>>, vector<1x2x64xf32>,
    return
  }
  func.func @transform_0(%arg0: i32, %arg1: memref<2x2xi32, #tpu.memory_space<smem>>) -> (i32, i32, i32) {
    %c0_i32 = arith.constant 0 : i32
    %c0_i32_0 = arith.constant 0 : i32
    %c0_i32_1 = arith.constant 0 : i32
    return %arg0, %c0_i32, %c0_i32_0 : i32, i32, i32
  }
  func.func @transform_1(%arg0: i32, %arg1: memref<2x2xi32, #tpu.memory_space<smem>>) -> (i32, i32, i32) {
    %c0_i32 = arith.constant 0 : i32
    %c0_i32_0 = arith.constant 0 : i32
    %c0_i32_1 = arith.constant 0 : i32
    return %arg0, %c0_i32, %c0_i32_0 : i32, i32, i32
  }
  func.func @transform_2(%arg0: i32, %arg1: memref<2x2xi32, #tpu.memory_space<smem>>) -> (i32, i32) {
    %c0_i32 = arith.constant 0 : i32
    %c0_i32_0 = arith.constant 0 : i32
    %c0_i32_1 = arith.constant 0 : i32
    return %c0_i32, %c0_i32_0 : i32, i32
  }
  func.func @transform_3(%arg0: i32, %arg1: memref<2x2xi32, #tpu.memory_space<smem>>) -> (i32, i32) {
    %c0_i32 = arith.constant 0 : i32
    %c0_i32_0 = arith.constant 0 : i32
    %c0_i32_1 = arith.constant 0 : i32
    return %c0_i32, %c0_i32_0 : i32, i32
  }
  func.func @transform_4(%arg0: i32, %arg1: memref<2x2xi32, #tpu.memory_space<smem>>) -> (i32, i32, i32) {
    %c0_i32 = arith.constant 0 : i32
    %c0_i32_0 = arith.constant 0 : i32
    %c0_i32_1 = arith.constant 0 : i32
    %c0_i32_2 = arith.constant 0 : i32
    return %c0_i32, %c0_i32_0, %c0_i32_1 : i32, i32, i32
  }
  func.func @transform_5(%arg0: i32, %arg1: memref<2x2xi32, #tpu.memory_space<smem>>) -> (i32, i32, i32) {
    %c0_i32 = arith.constant 0 : i32
    %c0_i32_0 = arith.constant 0 : i32
    %c0_i32_1 = arith.constant 0 : i32
    %c0_i32_2 = arith.constant 0 : i32
    return %c0_i32, %c0_i32_0, %c0_i32_1 : i32, i32, i32
  }
  func.func @transform_6(%arg0: i32, %arg1: memref<2x2xi32, #tpu.memory_space<smem>>) -> (i32, i32, i32) {
    %c0_i32 = arith.constant 0 : i32
    %c0_i32_0 = arith.constant 0 : i32
    %c0_i32_1 = arith.constant 0 : i32
    %c0_i32_2 = arith.constant 0 : i32
    return %c0_i32, %c0_i32_0, %c0_i32_1 : i32, i32, i32
  }
  func.func @transform_7(%arg0: i32, %arg1: memref<2x2xi32, #tpu.memory_space<smem>>) -> (i32, i32, i32) {
    %c0_i32 = arith.constant 0 : i32
    %c0_i32_0 = arith.constant 0 : i32
    %c0_i32_1 = arith.constant 0 : i32
    %c0_i32_2 = arith.constant 0 : i32
    return %c0_i32, %c0_i32_0, %c0_i32_1 : i32, i32, i32
  }
  func.func @transform_8(%arg0: i32, %arg1: memref<2x2xi32, #tpu.memory_space<smem>>) -> (i32, i32, i32) {
    %c0_i32 = arith.constant 0 : i32
    %c0_i32_0 = arith.constant 0 : i32
    %c0_i32_1 = arith.constant 0 : i32
    %c0_i32_2 = arith.constant 0 : i32
    return %c0_i32, %c0_i32_0, %c0_i32_1 : i32, i32, i32
  }
  func.func @transform_9(%arg0: i32, %arg1: memref<2x2xi32, #tpu.memory_space<smem>>) -> (i32, i32, i32) {
    %c0_i32 = arith.constant 0 : i32
    %c0_i32_0 = arith.constant 0 : i32
    %c0_i32_1 = arith.constant 0 : i32
    %c0_i32_2 = arith.constant 0 : i32
    return %c0_i32, %c0_i32_0, %c0_i32_1 : i32, i32, i32
  }
  func.func @transform_10(%arg0: i32, %arg1: memref<2x2xi32, #tpu.memory_space<smem>>) -> (i32, i32, i32) {
    %c0_i32 = arith.constant 0 : i32
    %c0_i32_0 = arith.constant 0 : i32
    %c0_i32_1 = arith.constant 0 : i32
    %c0_i32_2 = arith.constant 0 : i32
    return %c0_i32, %c0_i32_0, %c0_i32_1 : i32, i32, i32
  }
  func.func @transform_11(%arg0: i32, %arg1: memref<2x2xi32, #tpu.memory_space<smem>>) -> (i32, i32, i32) {
    %c0_i32 = arith.constant 0 : i32
    %c0_i32_0 = arith.constant 0 : i32
    %c0_i32_1 = arith.constant 0 : i32
    %c0_i32_2 = arith.constant 0 : i32
    return %c0_i32, %c0_i32_0, %c0_i32_1 : i32, i32, i32
  }
  func.func @transform_12(%arg0: i32, %arg1: memref<2x2xi32, #tpu.memory_space<smem>>) -> (i32, i32, i32) {
    %c0_i32 = arith.constant 0 : i32
    %c0_i32_0 = arith.constant 0 : i32
    %c0_i32_1 = arith.constant 0 : i32
    %c0_i32_2 = arith.constant 0 : i32
    return %c0_i32, %c0_i32_0, %c0_i32_1 : i32, i32, i32
  }
  func.func @transform_13(%arg0: i32, %arg1: memref<2x2xi32, #tpu.memory_space<smem>>) -> (i32, i32, i32) {
    %c0_i32 = arith.constant 0 : i32
    %c0_i32_0 = arith.constant 0 : i32
    %c0_i32_1 = arith.constant 0 : i32
    %c0_i32_2 = arith.constant 0 : i32
    return %c0_i32, %c0_i32_0, %c0_i32_1 : i32, i32, i32
  }
  func.func @transform_14(%arg0: i32, %arg1: memref<2x2xi32, #tpu.memory_space<smem>>) -> (i32, i32) {
    %c0_i32 = arith.constant 0 : i32
    %c0_i32_0 = arith.constant 0 : i32
    %c0_i32_1 = arith.constant 0 : i32
    return %c0_i32, %c0_i32_0 : i32, i32
  }
  func.func @transform_15(%arg0: i32, %arg1: memref<2x2xi32, #tpu.memory_space<smem>>) -> (i32, i32) {
    %c0_i32 = arith.constant 0 : i32
    %c0_i32_0 = arith.constant 0 : i32
    %c0_i32_1 = arith.constant 0 : i32
    return %c0_i32, %c0_i32_0 : i32, i32
  }
  func.func @transform_16(%arg0: i32, %arg1: memref<2x2xi32, #tpu.memory_space<smem>>) -> (i32, i32) {
    %c0_i32 = arith.constant 0 : i32
    %c0_i32_0 = arith.constant 0 : i32
    %c0_i32_1 = arith.constant 0 : i32
    return %c0_i32, %c0_i32_0 : i32, i32
  }
  func.func @transform_17(%arg0: i32, %arg1: memref<2x2xi32, #tpu.memory_space<smem>>) -> (i32, i32) {
    %c0_i32 = arith.constant 0 : i32
    %c0_i32_0 = arith.constant 0 : i32
    %c0_i32_1 = arith.constant 0 : i32
    return %c0_i32, %c0_i32_0 : i32, i32
  }
  func.func @transform_18(%arg0: i32, %arg1: memref<2x2xi32, #tpu.memory_space<smem>>) -> (i32, i32) {
    %c0_i32 = arith.constant 0 : i32
    %c0_i32_0 = arith.constant 0 : i32
    %c0_i32_1 = arith.constant 0 : i32
    return %c0_i32, %c0_i32_0 : i32, i32
  }
  func.func @transform_19(%arg0: i32, %arg1: memref<2x2xi32, #tpu.memory_space<smem>>) -> (i32, i32) {
    %c0_i32 = arith.constant 0 : i32
    %c0_i32_0 = arith.constant 0 : i32
    %c0_i32_1 = arith.constant 0 : i32
    return %c0_i32, %c0_i32_0 : i32, i32
  }
  func.func @transform_20(%arg0: i32, %arg1: memref<2x2xi32, #tpu.memory_space<smem>>) -> (i32, i32) {
    %c0_i32 = arith.constant 0 : i32
    %c0_i32_0 = arith.constant 0 : i32
    %c0_i32_1 = arith.constant 0 : i32
    return %c0_i32, %c0_i32_0 : i32, i32
  }
  func.func @transform_21(%arg0: i32, %arg1: memref<2x2xi32, #tpu.memory_space<smem>>) -> (i32, i32) {
    %c0_i32 = arith.constant 0 : i32
    %c0_i32_0 = arith.constant 0 : i32
    %c0_i32_1 = arith.constant 0 : i32
    return %c0_i32, %c0_i32_0 : i32, i32
  }
  func.func @transform_22(%arg0: i32, %arg1: memref<2x2xi32, #tpu.memory_space<smem>>) -> (i32, i32) {
    %c0_i32 = arith.constant 0 : i32
    %c0_i32_0 = arith.constant 0 : i32
    %c0_i32_1 = arith.constant 0 : i32
    return %c0_i32, %c0_i32_0 : i32, i32
  }
  func.func @transform_23(%arg0: i32, %arg1: memref<2x2xi32, #tpu.memory_space<smem>>) -> (i32, i32) {
    %c0_i32 = arith.constant 0 : i32
    %c0_i32_0 = arith.constant 0 : i32
    %c0_i32_1 = arith.constant 0 : i32
    return %c0_i32, %c0_i32_0 : i32, i32
  }
  func.func @transform_24(%arg0: i32, %arg1: memref<2x2xi32, #tpu.memory_space<smem>>) -> (i32, i32, i32) {
    %c0_i32 = arith.constant 0 : i32
    %c0_i32_0 = arith.constant 0 : i32
    %c0_i32_1 = arith.constant 0 : i32
    return %arg0, %c0_i32, %c0_i32_0 : i32, i32, i32
  }
  func.func @transform_25(%arg0: i32, %arg1: memref<2x2xi32, #tpu.memory_space<smem>>) -> (i32, i32, i32) {
    %c0_i32 = arith.constant 0 : i32
    %c0_i32_0 = arith.constant 0 : i32
    %c0_i32_1 = arith.constant 0 : i32
    return %arg0, %c0_i32, %c0_i32_0 : i32, i32, i32
  }
  func.func @transform_26(%arg0: i32, %arg1: memref<2x2xi32, #tpu.memory_space<smem>>) -> (i32, i32, i32) {
    %c0_i32 = arith.constant 0 : i32
    %c0_i32_0 = arith.constant 0 : i32
    %c0_i32_1 = arith.constant 0 : i32
    return %arg0, %c0_i32, %c0_i32_0 : i32, i32, i32
  }
}

</mosaic_0001>

<llo_original>
// kernel: bert_forward.1
$region0: #{bert_forward.1}
  #allocation0 [shape = 'u32[]', space=smem, size = 0x4, offset = 0x4, fixed_abs, tag = 'smem constant byte address 0x4 - core index']
  #allocation1 [shape = 'u32[144,128]{1,0:T(1,128)}', space=vmem, size = 0x12000, scoped, tag = 'internal scratch']
  #allocation2 [shape = 's32[1]{0}', space=sflag, size = 0x4, scoped, tag = 'scoped memory for bert_forward.1']
  #allocation3 [shape = 'u8[1024]{0}', space=smem, size = 0x400, scoped, tag = 'prefetched SMEM operand 0']
  %s0 = inlined_call_operand.vmem [shape: s32[2,2], index: 0, kind: input, shape index: {}]
  %s1 = inlined_call_operand.vmem [shape: f32[2,8,32], index: 1, kind: input, shape index: {}]
  %s2 = inlined_call_operand.vmem [shape: f32[2,8,8], index: 2, kind: input, shape index: {}]
  %s3 = inlined_call_operand.vmem [shape: f32[1,32], index: 3, kind: input, shape index: {}]
  %s4 = inlined_call_operand.vmem [shape: f32[1,32], index: 4, kind: input, shape index: {}]
  %s5 = inlined_call_operand.vmem [shape: f32[2,32,96], index: 5, kind: input, shape index: {}]
  %s6 = inlined_call_operand.vmem [shape: f32[2,1,96], index: 6, kind: input, shape index: {}]
  %s7 = inlined_call_operand.vmem [shape: f32[2,32,32], index: 7, kind: input, shape index: {}]
  %s8 = inlined_call_operand.vmem [shape: f32[2,1,32], index: 8, kind: input, shape index: {}]
  %s9 = inlined_call_operand.vmem [shape: f32[2,1,32], index: 9, kind: input, shape index: {}]
  %s10 = inlined_call_operand.vmem [shape: f32[2,1,32], index: 10, kind: input, shape index: {}]
  %s11 = inlined_call_operand.vmem [shape: f32[2,32,64], index: 11, kind: input, shape index: {}]
  %s12 = inlined_call_operand.vmem [shape: f32[2,1,64], index: 12, kind: input, shape index: {}]
  %s13 = inlined_call_operand.vmem [shape: f32[2,64,32], index: 13, kind: input, shape index: {}]
  %s14 = inlined_call_operand.vmem [shape: f32[2,1,32], index: 14, kind: input, shape index: {}]
  %s15 = inlined_call_operand.vmem [shape: f32[32,32], index: 15, kind: input, shape index: {}]
  %s16 = inlined_call_operand.vmem [shape: f32[1,32], index: 16, kind: input, shape index: {}]
  %s17 = inlined_call_operand.vmem [shape: f32[32,2], index: 17, kind: input, shape index: {}]
  %s18 = inlined_call_operand.vmem [shape: f32[1,2], index: 18, kind: input, shape index: {}]
  %s19 = inlined_call_operand.vmem [shape: f32[32,32], index: 19, kind: input, shape index: {}]
  %s20 = inlined_call_operand.vmem [shape: f32[1,32], index: 20, kind: input, shape index: {}]
  %s21 = inlined_call_operand.vmem [shape: f32[1,32], index: 21, kind: input, shape index: {}]
  %s22 = inlined_call_operand.vmem [shape: f32[1,32], index: 22, kind: input, shape index: {}]
  %s23 = inlined_call_operand.vmem [shape: f32[64,32], index: 23, kind: input, shape index: {}]
  %s24 = inlined_call_operand.vmem [shape: f32[1,64], index: 24, kind: input, shape index: {}]
  %s25 = inlined_call_operand.hbm [shape: f32[2,8,32], index: 25, kind: output, shape index: {0}]
  %s26 = inlined_call_operand.hbm [shape: f32[2,1,2], index: 26, kind: output, shape index: {1}]
  %s27 = inlined_call_operand.hbm [shape: f32[2,2,64], index: 27, kind: output, shape index: {2}]
  %28 = xla_tuple %s25, %s26, %s27
  %s29 = sld [smem:[#allocation0]]
  $region145: #{bert_forward.1} parent=0
    _
  %s31 = ssub.s32 1, %s29
  %s32 = scalar_select 0, %s31, %s29
  %s33 = sshll.u32 %s0, 4
  %s34 = int_to_ptr.vmem [resolvable:$true] %s33
  %36 = dma.vmem_to_smem %s34, 32, [#allocation3], [#allocation2]
  %37 = dma.done [#allocation2], 32
  %38 = sfence
  $region1: #{bert_forward.1} parent=0
    #allocation4 [shape = 'u8[8192]{0}', space=vmem, size = 0x2000, scoped, tag = 'output window, operand 0']
    #allocation5 [shape = 's32[2]{0}', space=sflag, size = 0x8, scoped, tag = 'scoped memory for bert_forward.1']
    #allocation6 [shape = 'u8[1024]{0}', space=vmem, size = 0x400, scoped, tag = 'output window, operand 1']
    #allocation7 [shape = 's32[2]{0}', space=sflag, size = 0x8, scoped, tag = 'scoped memory for bert_forward.1']
    #allocation8 [shape = 'u8[2048]{0}', space=vmem, size = 0x800, scoped, tag = 'output window, operand 2']
    %39 = vsyncpa [#allocation5], 0
    %s40 = scalar_lea.sflag [#allocation5], 1
    %41 = vsyncpa %s40, 0
    %42 = vsyncpa [#allocation7], 0
    %s43 = scalar_lea.sflag [#allocation7], 1
    %44 = vsyncpa %s43, 0
    loop: start=0, step=1, limit=4
    $region2: #{bert_forward.1} parent=1 // loop_pre_header
      _
    $region3: #{bert_forward.1} parent=1 // loop_header
      %s46 = sphi 0, %s50
      %p47 = scmp.ge.s32.totalorder %s46, 4
      %s56 = sphi 0, %s58
      %s59 = sphi 0, %s56
      %s60 = sphi 0, %s59
      %s76 = sphi 0, %s60
      %s82 = sphi 0, %s84
      %s85 = sphi 0, %s82
      %s86 = sphi 0, %s85
      %s102 = sphi 0, %s86
      %s106 = sphi 0, %s106
      %s108 = sphi 0, %s106
      %s109 = sphi 0, %s108
      %s123 = sphi 0, %s109
      %s127 = sphi 0, %s127
      %s129 = sphi 0, %s127
      %s130 = sphi 0, %s129
      %s144 = sphi 0, %s130
      %s148 = sphi 0, %s148
      %s150 = sphi 0, %s148
      %s151 = sphi 0, %s150
      %s165 = sphi 0, %s151
      %s169 = sphi 0, %s169
      %s171 = sphi 0, %s169
      %s172 = sphi 0, %s171
      %s186 = sphi 0, %s172
      %s190 = sphi 0, %s190
      %s192 = sphi 0, %s190
      %s193 = sphi 0, %s192
      %s207 = sphi 0, %s193
      %s211 = sphi 0, %s211
      %s213 = sphi 0, %s211
      %s214 = sphi 0, %s213
      %s228 = sphi 0, %s214
      %s232 = sphi 0, %s232
      %s234 = sphi 0, %s232
      %s235 = sphi 0, %s234
      %s249 = sphi 0, %s235
      %s253 = sphi 0, %s253
      %s255 = sphi 0, %s253
      %s256 = sphi 0, %s255
      %s270 = sphi 0, %s256
      %s274 = sphi 0, %s274
      %s276 = sphi 0, %s274
      %s277 = sphi 0, %s276
      %s291 = sphi 0, %s277
      %s295 = sphi 0, %s295
      %s297 = sphi 0, %s295
      %s298 = sphi 0, %s297
      %s312 = sphi 0, %s298
      %s316 = sphi 0, %s316
      %s318 = sphi 0, %s316
      %s319 = sphi 0, %s318
      %s333 = sphi 0, %s319
      %s337 = sphi 0, %s337
      %s339 = sphi 0, %s337
      %s340 = sphi 0, %s339
      %s354 = sphi 0, %s340
      %s358 = sphi 0, %s358
      %s360 = sphi 0, %s358
      %s361 = sphi 0, %s360
      %s375 = sphi 0, %s361
      %s379 = sphi 0, %s379
      %s381 = sphi 0, %s379
      %s382 = sphi 0, %s381
      %s396 = sphi 0, %s382
      %s400 = sphi 0, %s400
      %s402 = sphi 0, %s400
      %s403 = sphi 0, %s402
      %s417 = sphi 0, %s403
      %s421 = sphi 0, %s421
      %s423 = sphi 0, %s421
      %s424 = sphi 0, %s423
      %s438 = sphi 0, %s424
      %s442 = sphi 0, %s442
      %s444 = sphi 0, %s442
      %s445 = sphi 0, %s444
      %s459 = sphi 0, %s445
      %s463 = sphi 0, %s463
      %s465 = sphi 0, %s463
      %s466 = sphi 0, %s465
      %s480 = sphi 0, %s466
      %s484 = sphi 0, %s484
      %s486 = sphi 0, %s484
      %s487 = sphi 0, %s486
      %s501 = sphi 0, %s487
      %s505 = sphi 0, %s505
      %s507 = sphi 0, %s505
      %s508 = sphi 0, %s507
      %s522 = sphi 0, %s508
      %s526 = sphi 0, %s526
      %s528 = sphi 0, %s526
      %s529 = sphi 0, %s528
      %s543 = sphi 0, %s529
      %s547 = sphi 0, %s547
      %s549 = sphi 0, %s547
      %s550 = sphi 0, %s549
      %s564 = sphi 0, %s550
      %s570 = sphi 0, %s572
      %s573 = sphi 0, %s570
      %s574 = sphi 0, %s573
      %s590 = sphi 0, %s574
      %s596 = sphi 0, %s598
      %s599 = sphi 0, %s596
      %s600 = sphi 0, %s599
      %s616 = sphi 0, %s600
      %s622 = sphi 0, %s624
      %s625 = sphi 0, %s622
      %s626 = sphi 0, %s625
      %s642 = sphi 0, %s626
    $region4: #{bert_forward.1} parent=1 // loop_header_branch
      %49 = sbr.rel (%p47) target = $region8
    $region5: #{bert_forward.1} parent=1 // loop_body
      %s51 = ssub.s32 %s46, 1
      %s52 = ssub.s32 %s46, 2
      %s53 = sadd.s32 %s46, 1
      %s54 = ssub.s32 %s46, %s53
      %p55 = scmp.eq.s32.totalorder %s54, 0
      %s57 = sadd.s32 %s56, 1
      %s58 = scalar_select %p55, %s56, %s57
      %p61 = pneg %p55
      %p62 = scmp.eq.s32.totalorder %s46, 1
      %p63 = por %p61, %p62
      %p64 = scmp.ne.s32.totalorder %s56, %s59
      %p65 = scmp.eq.s32.totalorder %s46, 0
      %p66 = por %p64, %p65
      %p67 = scmp.ne.s32.totalorder %s56, %s59
      %p68 = scmp.eq.s32.totalorder %s51, 1
      %p69 = por %p67, %p68
      %p70 = scmp.ne.s32.totalorder %s59, %s60
      %p71 = scmp.eq.s32.totalorder %s51, 0
      %p72 = por %p70, %p71
      %p73 = scmp.ne.s32.totalorder %s59, %s60
      %p74 = scmp.eq.s32.totalorder %s52, 1
      %p75 = por %p73, %p74
      %p77 = scmp.ne.s32.totalorder %s60, %s76
      %p78 = scmp.eq.s32.totalorder %s52, 0
      %p79 = por %p77, %p78
      %s80 = ssub.s32 %s46, %s53
      %p81 = scmp.eq.s32.totalorder %s80, 0
      %s83 = sadd.s32 %s82, 1
      %s84 = scalar_select %p81, %s82, %s83
      %p87 = pneg %p81
      %p88 = scmp.eq.s32.totalorder %s46, 1
      %p89 = por %p87, %p88
      %p90 = scmp.ne.s32.totalorder %s82, %s85
      %p91 = scmp.eq.s32.totalorder %s46, 0
      %p92 = por %p90, %p91
      %p93 = scmp.ne.s32.totalorder %s82, %s85
      %p94 = scmp.eq.s32.totalorder %s51, 1
      %p95 = por %p93, %p94
      %p96 = scmp.ne.s32.totalorder %s85, %s86
      %p97 = scmp.eq.s32.totalorder %s51, 0
      %p98 = por %p96, %p97
      %p99 = scmp.ne.s32.totalorder %s85, %s86
      %p100 = scmp.eq.s32.totalorder %s52, 1
      %p101 = por %p99, %p100
      %p103 = scmp.ne.s32.totalorder %s86, %s102
      %p104 = scmp.eq.s32.totalorder %s52, 0
      %p105 = por %p103, %p104
      %s107 = sadd.s32 %s106, 1
      %p110 = scmp.eq.s32.totalorder %s46, 1
      %p111 = scmp.ne.s32.totalorder %s106, %s108
      %p112 = scmp.eq.s32.totalorder %s46, 0
      %p113 = por %p111, %p112
      %p114 = scmp.ne.s32.totalorder %s106, %s108
      %p115 = scmp.eq.s32.totalorder %s51, 1
      %p116 = por %p114, %p115
      %p117 = scmp.ne.s32.totalorder %s108, %s109
      %p118 = scmp.eq.s32.totalorder %s51, 0
      %p119 = por %p117, %p118
      %p120 = scmp.ne.s32.totalorder %s108, %s109
      %p121 = scmp.eq.s32.totalorder %s52, 1
      %p122 = por %p120, %p121
      %p124 = scmp.ne.s32.totalorder %s109, %s123
      %p125 = scmp.eq.s32.totalorder %s52, 0
      %p126 = por %p124, %p125
      %s128 = sadd.s32 %s127, 1
      %p131 = scmp.eq.s32.totalorder %s46, 1
      %p132 = scmp.ne.s32.totalorder %s127, %s129
      %p133 = scmp.eq.s32.totalorder %s46, 0
      %p134 = por %p132, %p133
      %p135 = scmp.ne.s32.totalorder %s127, %s129
      %p136 = scmp.eq.s32.totalorder %s51, 1
      %p137 = por %p135, %p136
      %p138 = scmp.ne.s32.totalorder %s129, %s130
      %p139 = scmp.eq.s32.totalorder %s51, 0
      %p140 = por %p138, %p139
      %p141 = scmp.ne.s32.totalorder %s129, %s130
      %p142 = scmp.eq.s32.totalorder %s52, 1
      %p143 = por %p141, %p142
      %p145 = scmp.ne.s32.totalorder %s130, %s144
      %p146 = scmp.eq.s32.totalorder %s52, 0
      %p147 = por %p145, %p146
      %s149 = sadd.s32 %s148, 1
      %p152 = scmp.eq.s32.totalorder %s46, 1
      %p153 = scmp.ne.s32.totalorder %s148, %s150
      %p154 = scmp.eq.s32.totalorder %s46, 0
      %p155 = por %p153, %p154
      %p156 = scmp.ne.s32.totalorder %s148, %s150
      %p157 = scmp.eq.s32.totalorder %s51, 1
      %p158 = por %p156, %p157
      %p159 = scmp.ne.s32.totalorder %s150, %s151
      %p160 = scmp.eq.s32.totalorder %s51, 0
      %p161 = por %p159, %p160
      %p162 = scmp.ne.s32.totalorder %s150, %s151
      %p163 = scmp.eq.s32.totalorder %s52, 1
      %p164 = por %p162, %p163
      %p166 = scmp.ne.s32.totalorder %s151, %s165
      %p167 = scmp.eq.s32.totalorder %s52, 0
      %p168 = por %p166, %p167
      %s170 = sadd.s32 %s169, 1
      %p173 = scmp.eq.s32.totalorder %s46, 1
      %p174 = scmp.ne.s32.totalorder %s169, %s171
      %p175 = scmp.eq.s32.totalorder %s46, 0
      %p176 = por %p174, %p175
      %p177 = scmp.ne.s32.totalorder %s169, %s171
      %p178 = scmp.eq.s32.totalorder %s51, 1
      %p179 = por %p177, %p178
      %p180 = scmp.ne.s32.totalorder %s171, %s172
      %p181 = scmp.eq.s32.totalorder %s51, 0
      %p182 = por %p180, %p181
      %p183 = scmp.ne.s32.totalorder %s171, %s172
      %p184 = scmp.eq.s32.totalorder %s52, 1
      %p185 = por %p183, %p184
      %p187 = scmp.ne.s32.totalorder %s172, %s186
      %p188 = scmp.eq.s32.totalorder %s52, 0
      %p189 = por %p187, %p188
      %s191 = sadd.s32 %s190, 1
      %p194 = scmp.eq.s32.totalorder %s46, 1
      %p195 = scmp.ne.s32.totalorder %s190, %s192
      %p196 = scmp.eq.s32.totalorder %s46, 0
      %p197 = por %p195, %p196
      %p198 = scmp.ne.s32.totalorder %s190, %s192
      %p199 = scmp.eq.s32.totalorder %s51, 1
      %p200 = por %p198, %p199
      %p201 = scmp.ne.s32.totalorder %s192, %s193
      %p202 = scmp.eq.s32.totalorder %s51, 0
      %p203 = por %p201, %p202
      %p204 = scmp.ne.s32.totalorder %s192, %s193
      %p205 = scmp.eq.s32.totalorder %s52, 1
      %p206 = por %p204, %p205
      %p208 = scmp.ne.s32.totalorder %s193, %s207
      %p209 = scmp.eq.s32.totalorder %s52, 0
      %p210 = por %p208, %p209
      %s212 = sadd.s32 %s211, 1
      %p215 = scmp.eq.s32.totalorder %s46, 1
      %p216 = scmp.ne.s32.totalorder %s211, %s213
      %p217 = scmp.eq.s32.totalorder %s46, 0
      %p218 = por %p216, %p217
      %p219 = scmp.ne.s32.totalorder %s211, %s213
      %p220 = scmp.eq.s32.totalorder %s51, 1
      %p221 = por %p219, %p220
      %p222 = scmp.ne.s32.totalorder %s213, %s214
      %p223 = scmp.eq.s32.totalorder %s51, 0
      %p224 = por %p222, %p223
      %p225 = scmp.ne.s32.totalorder %s213, %s214
      %p226 = scmp.eq.s32.totalorder %s52, 1
      %p227 = por %p225, %p226
      %p229 = scmp.ne.s32.totalorder %s214, %s228
      %p230 = scmp.eq.s32.totalorder %s52, 0
      %p231 = por %p229, %p230
      %s233 = sadd.s32 %s232, 1
      %p236 = scmp.eq.s32.totalorder %s46, 1
      %p237 = scmp.ne.s32.totalorder %s232, %s234
      %p238 = scmp.eq.s32.totalorder %s46, 0
      %p239 = por %p237, %p238
      %p240 = scmp.ne.s32.totalorder %s232, %s234
      %p241 = scmp.eq.s32.totalorder %s51, 1
      %p242 = por %p240, %p241
      %p243 = scmp.ne.s32.totalorder %s234, %s235
      %p244 = scmp.eq.s32.totalorder %s51, 0
      %p245 = por %p243, %p244
      %p246 = scmp.ne.s32.totalorder %s234, %s235
      %p247 = scmp.eq.s32.totalorder %s52, 1
      %p248 = por %p246, %p247
      %p250 = scmp.ne.s32.totalorder %s235, %s249
      %p251 = scmp.eq.s32.totalorder %s52, 0
      %p252 = por %p250, %p251
      %s254 = sadd.s32 %s253, 1
      %p257 = scmp.eq.s32.totalorder %s46, 1
      %p258 = scmp.ne.s32.totalorder %s253, %s255
      %p259 = scmp.eq.s32.totalorder %s46, 0
      %p260 = por %p258, %p259
      %p261 = scmp.ne.s32.totalorder %s253, %s255
      %p262 = scmp.eq.s32.totalorder %s51, 1
      %p263 = por %p261, %p262
      %p264 = scmp.ne.s32.totalorder %s255, %s256
      %p265 = scmp.eq.s32.totalorder %s51, 0
      %p266 = por %p264, %p265
      %p267 = scmp.ne.s32.totalorder %s255, %s256
      %p268 = scmp.eq.s32.totalorder %s52, 1
      %p269 = por %p267, %p268
      %p271 = scmp.ne.s32.totalorder %s256, %s270
      %p272 = scmp.eq.s32.totalorder %s52, 0
      %p273 = por %p271, %p272
      %s275 = sadd.s32 %s274, 1
      %p278 = scmp.eq.s32.totalorder %s46, 1
      %p279 = scmp.ne.s32.totalorder %s274, %s276
      %p280 = scmp.eq.s32.totalorder %s46, 0
      %p281 = por %p279, %p280
      %p282 = scmp.ne.s32.totalorder %s274, %s276
      %p283 = scmp.eq.s32.totalorder %s51, 1
      %p284 = por %p282, %p283
      %p285 = scmp.ne.s32.totalorder %s276, %s277
      %p286 = scmp.eq.s32.totalorder %s51, 0
      %p287 = por %p285, %p286
      %p288 = scmp.ne.s32.totalorder %s276, %s277
      %p289 = scmp.eq.s32.totalorder %s52, 1
      %p290 = por %p288, %p289
      %p292 = scmp.ne.s32.totalorder %s277, %s291
      %p293 = scmp.eq.s32.totalorder %s52, 0
      %p294 = por %p292, %p293
      %s296 = sadd.s32 %s295, 1
      %p299 = scmp.eq.s32.totalorder %s46, 1
      %p300 = scmp.ne.s32.totalorder %s295, %s297
      %p301 = scmp.eq.s32.totalorder %s46, 0
      %p302 = por %p300, %p301
      %p303 = scmp.ne.s32.totalorder %s295, %s297
      %p304 = scmp.eq.s32.totalorder %s51, 1
      %p305 = por %p303, %p304
      %p306 = scmp.ne.s32.totalorder %s297, %s298
      %p307 = scmp.eq.s32.totalorder %s51, 0
      %p308 = por %p306, %p307
      %p309 = scmp.ne.s32.totalorder %s297, %s298
      %p310 = scmp.eq.s32.totalorder %s52, 1
      %p311 = por %p309, %p310
      %p313 = scmp.ne.s32.totalorder %s298, %s312
      %p314 = scmp.eq.s32.totalorder %s52, 0
      %p315 = por %p313, %p314
      %s317 = sadd.s32 %s316, 1
      %p320 = scmp.eq.s32.totalorder %s46, 1
      %p321 = scmp.ne.s32.totalorder %s316, %s318
      %p322 = scmp.eq.s32.totalorder %s46, 0
      %p323 = por %p321, %p322
      %p324 = scmp.ne.s32.totalorder %s316, %s318
      %p325 = scmp.eq.s32.totalorder %s51, 1
      %p326 = por %p324, %p325
      %p327 = scmp.ne.s32.totalorder %s318, %s319
      %p328 = scmp.eq.s32.totalorder %s51, 0
      %p329 = por %p327, %p328
      %p330 = scmp.ne.s32.totalorder %s318, %s319
      %p331 = scmp.eq.s32.totalorder %s52, 1
      %p332 = por %p330, %p331
      %p334 = scmp.ne.s32.totalorder %s319, %s333
      %p335 = scmp.eq.s32.totalorder %s52, 0
      %p336 = por %p334, %p335
      %s338 = sadd.s32 %s337, 1
      %p341 = scmp.eq.s32.totalorder %s46, 1
      %p342 = scmp.ne.s32.totalorder %s337, %s339
      %p343 = scmp.eq.s32.totalorder %s46, 0
      %p344 = por %p342, %p343
      %p345 = scmp.ne.s32.totalorder %s337, %s339
      %p346 = scmp.eq.s32.totalorder %s51, 1
      %p347 = por %p345, %p346
      %p348 = scmp.ne.s32.totalorder %s339, %s340
      %p349 = scmp.eq.s32.totalorder %s51, 0
      %p350 = por %p348, %p349
      %p351 = scmp.ne.s32.totalorder %s339, %s340
      %p352 = scmp.eq.s32.totalorder %s52, 1
      %p353 = por %p351, %p352
      %p355 = scmp.ne.s32.totalorder %s340, %s354
      %p356 = scmp.eq.s32.totalorder %s52, 0
      %p357 = por %p355, %p356
      %s359 = sadd.s32 %s358, 1
      %p362 = scmp.eq.s32.totalorder %s46, 1
      %p363 = scmp.ne.s32.totalorder %s358, %s360
      %p364 = scmp.eq.s32.totalorder %s46, 0
      %p365 = por %p363, %p364
      %p366 = scmp.ne.s32.totalorder %s358, %s360
      %p367 = scmp.eq.s32.totalorder %s51, 1
      %p368 = por %p366, %p367
      %p369 = scmp.ne.s32.totalorder %s360, %s361
      %p370 = scmp.eq.s32.totalorder %s51, 0
      %p371 = por %p369, %p370
      %p372 = scmp.ne.s32.totalorder %s360, %s361
      %p373 = scmp.eq.s32.totalorder %s52, 1
      %p374 = por %p372, %p373
      %p376 = scmp.ne.s32.totalorder %s361, %s375
      %p377 = scmp.eq.s32.totalorder %s52, 0
      %p378 = por %p376, %p377
      %s380 = sadd.s32 %s379, 1
      %p383 = scmp.eq.s32.totalorder %s46, 1
      %p384 = scmp.ne.s32.totalorder %s379, %s381
      %p385 = scmp.eq.s32.totalorder %s46, 0
      %p386 = por %p384, %p385
      %p387 = scmp.ne.s32.totalorder %s379, %s381
      %p388 = scmp.eq.s32.totalorder %s51, 1
      %p389 = por %p387, %p388
      %p390 = scmp.ne.s32.totalorder %s381, %s382
      %p391 = scmp.eq.s32.totalorder %s51, 0
      %p392 = por %p390, %p391
      %p393 = scmp.ne.s32.totalorder %s381, %s382
      %p394 = scmp.eq.s32.totalorder %s52, 1
      %p395 = por %p393, %p394
      %p397 = scmp.ne.s32.totalorder %s382, %s396
      %p398 = scmp.eq.s32.totalorder %s52, 0
      %p399 = por %p397, %p398
      %s401 = sadd.s32 %s400, 1
      %p404 = scmp.eq.s32.totalorder %s46, 1
      %p405 = scmp.ne.s32.totalorder %s400, %s402
      %p406 = scmp.eq.s32.totalorder %s46, 0
      %p407 = por %p405, %p406
      %p408 = scmp.ne.s32.totalorder %s400, %s402
      %p409 = scmp.eq.s32.totalorder %s51, 1
      %p410 = por %p408, %p409
      %p411 = scmp.ne.s32.totalorder %s402, %s403
      %p412 = scmp.eq.s32.totalorder %s51, 0
      %p413 = por %p411, %p412
      %p414 = scmp.ne.s32.totalorder %s402, %s403
      %p415 = scmp.eq.s32.totalorder %s52, 1
      %p416 = por %p414, %p415
      %p418 = scmp.ne.s32.totalorder %s403, %s417
      %p419 = scmp.eq.s32.totalorder %s52, 0
      %p420 = por %p418, %p419
      %s422 = sadd.s32 %s421, 1
      %p425 = scmp.eq.s32.totalorder %s46, 1
      %p426 = scmp.ne.s32.totalorder %s421, %s423
      %p427 = scmp.eq.s32.totalorder %s46, 0
      %p428 = por %p426, %p427
      %p429 = scmp.ne.s32.totalorder %s421, %s423
      %p430 = scmp.eq.s32.totalorder %s51, 1
      %p431 = por %p429, %p430
      %p432 = scmp.ne.s32.totalorder %s423, %s424
      %p433 = scmp.eq.s32.totalorder %s51, 0
      %p434 = por %p432, %p433
      %p435 = scmp.ne.s32.totalorder %s423, %s424
      %p436 = scmp.eq.s32.totalorder %s52, 1
      %p437 = por %p435, %p436
      %p439 = scmp.ne.s32.totalorder %s424, %s438
      %p440 = scmp.eq.s32.totalorder %s52, 0
      %p441 = por %p439, %p440
      %s443 = sadd.s32 %s442, 1
      %p446 = scmp.eq.s32.totalorder %s46, 1
      %p447 = scmp.ne.s32.totalorder %s442, %s444
      %p448 = scmp.eq.s32.totalorder %s46, 0
      %p449 = por %p447, %p448
      %p450 = scmp.ne.s32.totalorder %s442, %s444
      %p451 = scmp.eq.s32.totalorder %s51, 1
      %p452 = por %p450, %p451
      %p453 = scmp.ne.s32.totalorder %s444, %s445
      %p454 = scmp.eq.s32.totalorder %s51, 0
      %p455 = por %p453, %p454
      %p456 = scmp.ne.s32.totalorder %s444, %s445
      %p457 = scmp.eq.s32.totalorder %s52, 1
      %p458 = por %p456, %p457
      %p460 = scmp.ne.s32.totalorder %s445, %s459
      %p461 = scmp.eq.s32.totalorder %s52, 0
      %p462 = por %p460, %p461
      %s464 = sadd.s32 %s463, 1
      %p467 = scmp.eq.s32.totalorder %s46, 1
      %p468 = scmp.ne.s32.totalorder %s463, %s465
      %p469 = scmp.eq.s32.totalorder %s46, 0
      %p470 = por %p468, %p469
      %p471 = scmp.ne.s32.totalorder %s463, %s465
      %p472 = scmp.eq.s32.totalorder %s51, 1
      %p473 = por %p471, %p472
      %p474 = scmp.ne.s32.totalorder %s465, %s466
      %p475 = scmp.eq.s32.totalorder %s51, 0
      %p476 = por %p474, %p475
      %p477 = scmp.ne.s32.totalorder %s465, %s466
      %p478 = scmp.eq.s32.totalorder %s52, 1
      %p479 = por %p477, %p478
      %p481 = scmp.ne.s32.totalorder %s466, %s480
      %p482 = scmp.eq.s32.totalorder %s52, 0
      %p483 = por %p481, %p482
      %s485 = sadd.s32 %s484, 1
      %p488 = scmp.eq.s32.totalorder %s46, 1
      %p489 = scmp.ne.s32.totalorder %s484, %s486
      %p490 = scmp.eq.s32.totalorder %s46, 0
      %p491 = por %p489, %p490
      %p492 = scmp.ne.s32.totalorder %s484, %s486
      %p493 = scmp.eq.s32.totalorder %s51, 1
      %p494 = por %p492, %p493
      %p495 = scmp.ne.s32.totalorder %s486, %s487
      %p496 = scmp.eq.s32.totalorder %s51, 0
      %p497 = por %p495, %p496
      %p498 = scmp.ne.s32.totalorder %s486, %s487
      %p499 = scmp.eq.s32.totalorder %s52, 1
      %p500 = por %p498, %p499
      %p502 = scmp.ne.s32.totalorder %s487, %s501
      %p503 = scmp.eq.s32.totalorder %s52, 0
      %p504 = por %p502, %p503
      %s506 = sadd.s32 %s505, 1
      %p509 = scmp.eq.s32.totalorder %s46, 1
      %p510 = scmp.ne.s32.totalorder %s505, %s507
      %p511 = scmp.eq.s32.totalorder %s46, 0
      %p512 = por %p510, %p511
      %p513 = scmp.ne.s32.totalorder %s505, %s507
      %p514 = scmp.eq.s32.totalorder %s51, 1
      %p515 = por %p513, %p514
      %p516 = scmp.ne.s32.totalorder %s507, %s508
      %p517 = scmp.eq.s32.totalorder %s51, 0
      %p518 = por %p516, %p517
      %p519 = scmp.ne.s32.totalorder %s507, %s508
      %p520 = scmp.eq.s32.totalorder %s52, 1
      %p521 = por %p519, %p520
      %p523 = scmp.ne.s32.totalorder %s508, %s522
      %p524 = scmp.eq.s32.totalorder %s52, 0
      %p525 = por %p523, %p524
      %s527 = sadd.s32 %s526, 1
      %p530 = scmp.eq.s32.totalorder %s46, 1
      %p531 = scmp.ne.s32.totalorder %s526, %s528
      %p532 = scmp.eq.s32.totalorder %s46, 0
      %p533 = por %p531, %p532
      %p534 = scmp.ne.s32.totalorder %s526, %s528
      %p535 = scmp.eq.s32.totalorder %s51, 1
      %p536 = por %p534, %p535
      %p537 = scmp.ne.s32.totalorder %s528, %s529
      %p538 = scmp.eq.s32.totalorder %s51, 0
      %p539 = por %p537, %p538
      %p540 = scmp.ne.s32.totalorder %s528, %s529
      %p541 = scmp.eq.s32.totalorder %s52, 1
      %p542 = por %p540, %p541
      %p544 = scmp.ne.s32.totalorder %s529, %s543
      %p545 = scmp.eq.s32.totalorder %s52, 0
      %p546 = por %p544, %p545
      %s548 = sadd.s32 %s547, 1
      %p551 = scmp.eq.s32.totalorder %s46, 1
      %p552 = scmp.ne.s32.totalorder %s547, %s549
      %p553 = scmp.eq.s32.totalorder %s46, 0
      %p554 = por %p552, %p553
      %p555 = scmp.ne.s32.totalorder %s547, %s549
      %p556 = scmp.eq.s32.totalorder %s51, 1
      %p557 = por %p555, %p556
      %p558 = scmp.ne.s32.totalorder %s549, %s550
      %p559 = scmp.eq.s32.totalorder %s51, 0
      %p560 = por %p558, %p559
      %p561 = scmp.ne.s32.totalorder %s549, %s550
      %p562 = scmp.eq.s32.totalorder %s52, 1
      %p563 = por %p561, %p562
      %p565 = scmp.ne.s32.totalorder %s550, %s564
      %p566 = scmp.eq.s32.totalorder %s52, 0
      %p567 = por %p565, %p566
      %s568 = ssub.s32 %s46, %s53
      %p569 = scmp.eq.s32.totalorder %s568, 0
      %s571 = sadd.s32 %s570, 1
      %s572 = scalar_select %p569, %s570, %s571
      %p575 = pneg %p569
      %p576 = scmp.eq.s32.totalorder %s46, 1
      %p577 = por %p575, %p576
      %p578 = scmp.ne.s32.totalorder %s570, %s573
      %p579 = scmp.eq.s32.totalorder %s46, 0
      %p580 = por %p578, %p579
      %p581 = scmp.ne.s32.totalorder %s570, %s573
      %p582 = scmp.eq.s32.totalorder %s51, 1
      %p583 = por %p581, %p582
      %p584 = scmp.ne.s32.totalorder %s573, %s574
      %p585 = scmp.eq.s32.totalorder %s51, 0
      %p586 = por %p584, %p585
      %p587 = scmp.ne.s32.totalorder %s573, %s574
      %p588 = scmp.eq.s32.totalorder %s52, 1
      %p589 = por %p587, %p588
      %p591 = scmp.ne.s32.totalorder %s574, %s590
      %p592 = scmp.eq.s32.totalorder %s52, 0
      %p593 = por %p591, %p592
      %s594 = ssub.s32 %s46, %s53
      %p595 = scmp.eq.s32.totalorder %s594, 0
      %s597 = sadd.s32 %s596, 1
      %s598 = scalar_select %p595, %s596, %s597
      %p601 = pneg %p595
      %p602 = scmp.eq.s32.totalorder %s46, 1
      %p603 = por %p601, %p602
      %p604 = scmp.ne.s32.totalorder %s596, %s599
      %p605 = scmp.eq.s32.totalorder %s46, 0
      %p606 = por %p604, %p605
      %p607 = scmp.ne.s32.totalorder %s596, %s599
      %p608 = scmp.eq.s32.totalorder %s51, 1
      %p609 = por %p607, %p608
      %p610 = scmp.ne.s32.totalorder %s599, %s600
      %p611 = scmp.eq.s32.totalorder %s51, 0
      %p612 = por %p610, %p611
      %p613 = scmp.ne.s32.totalorder %s599, %s600
      %p614 = scmp.eq.s32.totalorder %s52, 1
      %p615 = por %p613, %p614
      %p617 = scmp.ne.s32.totalorder %s600, %s616
      %p618 = scmp.eq.s32.totalorder %s52, 0
      %p619 = por %p617, %p618
      %s620 = ssub.s32 %s46, %s53
      %p621 = scmp.eq.s32.totalorder %s620, 0
      %s623 = sadd.s32 %s622, 1
      %s624 = scalar_select %p621, %s622, %s623
      %p627 = pneg %p621
      %p628 = scmp.eq.s32.totalorder %s46, 1
      %p629 = por %p627, %p628
      %p630 = scmp.ne.s32.totalorder %s622, %s625
      %p631 = scmp.eq.s32.totalorder %s46, 0
      %p632 = por %p630, %p631
      %p633 = scmp.ne.s32.totalorder %s622, %s625
      %p634 = scmp.eq.s32.totalorder %s51, 1
      %p635 = por %p633, %p634
      %p636 = scmp.ne.s32.totalorder %s625, %s626
      %p637 = scmp.eq.s32.totalorder %s51, 0
      %p638 = por %p636, %p637
      %p639 = scmp.ne.s32.totalorder %s625, %s626
      %p640 = scmp.eq.s32.totalorder %s52, 1
      %p641 = por %p639, %p640
      %p643 = scmp.ne.s32.totalorder %s626, %s642
      %p644 = scmp.eq.s32.totalorder %s52, 0
      %p645 = por %p643, %p644
      %p646 = scmp.le.s32.totalorder 1, %s46
      %p647 = scmp.lt.s32.totalorder %s46, 3
      %p648 = pnand %p646, %p647
      %p649 = pneg %p648
      // Predicated region
      $region9: #{bert_forward.1} parent=5 // pred_check
        _
      $region10: #{bert_forward.1} parent=5 // pred_check_branch
        %651 = sbr.rel (%p648) target = $region12
      $region11: #{bert_forward.1} parent=5 // pred_region
        %s652 = ssub.s32 %s46, 1
        // Predicated region
        $region13: #{bert_forward.1} parent=11 // pred_check
          %p653 = pneg %p119
        $region14: #{bert_forward.1} parent=11 // pred_check_branch
          %655 = sbr.rel (%p653) target = $region16
        $region15: #{bert_forward.1} parent=11 // pred_region
          _
        $region16: #{bert_forward.1} parent=11 // pred_fallthru
          _
        // Predicated region
        $region17: #{bert_forward.1} parent=11 // pred_check
          %p656 = pneg %p140
        $region18: #{bert_forward.1} parent=11 // pred_check_branch
          %658 = sbr.rel (%p656) target = $region20
        $region19: #{bert_forward.1} parent=11 // pred_region
          _
        $region20: #{bert_forward.1} parent=11 // pred_fallthru
          _
        // Predicated region
        $region21: #{bert_forward.1} parent=11 // pred_check
          %p659 = pneg %p161
        $region22: #{bert_forward.1} parent=11 // pred_check_branch
          %661 = sbr.rel (%p659) target = $region24
        $region23: #{bert_forward.1} parent=11 // pred_region
          _
        $region24: #{bert_forward.1} parent=11 // pred_fallthru
          _
        // Predicated region
        $region25: #{bert_forward.1} parent=11 // pred_check
          %p662 = pneg %p182
        $region26: #{bert_forward.1} parent=11 // pred_check_branch
          %664 = sbr.rel (%p662) target = $region28
        $region27: #{bert_forward.1} parent=11 // pred_region
          _
        $region28: #{bert_forward.1} parent=11 // pred_fallthru
          _
        // Predicated region
        $region29: #{bert_forward.1} parent=11 // pred_check
          %p665 = pneg %p203
        $region30: #{bert_forward.1} parent=11 // pred_check_branch
          %667 = sbr.rel (%p665) target = $region32
        $region31: #{bert_forward.1} parent=11 // pred_region
          _
        $region32: #{bert_forward.1} parent=11 // pred_fallthru
          _
        // Predicated region
        $region33: #{bert_forward.1} parent=11 // pred_check
          %p668 = pneg %p224
        $region34: #{bert_forward.1} parent=11 // pred_check_branch
          %670 = sbr.rel (%p668) target = $region36
        $region35: #{bert_forward.1} parent=11 // pred_region
          _
        $region36: #{bert_forward.1} parent=11 // pred_fallthru
          _
        // Predicated region
        $region37: #{bert_forward.1} parent=11 // pred_check
          %p671 = pneg %p245
        $region38: #{bert_forward.1} parent=11 // pred_check_branch
          %673 = sbr.rel (%p671) target = $region40
        $region39: #{bert_forward.1} parent=11 // pred_region
          _
        $region40: #{bert_forward.1} parent=11 // pred_fallthru
          _
        // Predicated region
        $region41: #{bert_forward.1} parent=11 // pred_check
          %p674 = pneg %p266
        $region42: #{bert_forward.1} parent=11 // pred_check_branch
          %676 = sbr.rel (%p674) target = $region44
        $region43: #{bert_forward.1} parent=11 // pred_region
          _
        $region44: #{bert_forward.1} parent=11 // pred_fallthru
          _
        // Predicated region
        $region45: #{bert_forward.1} parent=11 // pred_check
          %p677 = pneg %p287
        $region46: #{bert_forward.1} parent=11 // pred_check_branch
          %679 = sbr.rel (%p677) target = $region48
        $region47: #{bert_forward.1} parent=11 // pred_region
          _
        $region48: #{bert_forward.1} parent=11 // pred_fallthru
          _
        // Predicated region
        $region49: #{bert_forward.1} parent=11 // pred_check
          %p680 = pneg %p308
        $region50: #{bert_forward.1} parent=11 // pred_check_branch
          %682 = sbr.rel (%p680) target = $region52
        $region51: #{bert_forward.1} parent=11 // pred_region
          _
        $region52: #{bert_forward.1} parent=11 // pred_fallthru
          _
        // Predicated region
        $region53: #{bert_forward.1} parent=11 // pred_check
          %p683 = pneg %p329
        $region54: #{bert_forward.1} parent=11 // pred_check_branch
          %685 = sbr.rel (%p683) target = $region56
        $region55: #{bert_forward.1} parent=11 // pred_region
          _
        $region56: #{bert_forward.1} parent=11 // pred_fallthru
          _
        // Predicated region
        $region57: #{bert_forward.1} parent=11 // pred_check
          %p686 = pneg %p350
        $region58: #{bert_forward.1} parent=11 // pred_check_branch
          %688 = sbr.rel (%p686) target = $region60
        $region59: #{bert_forward.1} parent=11 // pred_region
          _
        $region60: #{bert_forward.1} parent=11 // pred_fallthru
          _
        // Predicated region
        $region61: #{bert_forward.1} parent=11 // pred_check
          %p689 = pneg %p371
        $region62: #{bert_forward.1} parent=11 // pred_check_branch
          %691 = sbr.rel (%p689) target = $region64
        $region63: #{bert_forward.1} parent=11 // pred_region
          _
        $region64: #{bert_forward.1} parent=11 // pred_fallthru
          _
        // Predicated region
        $region65: #{bert_forward.1} parent=11 // pred_check
          %p692 = pneg %p392
        $region66: #{bert_forward.1} parent=11 // pred_check_branch
          %694 = sbr.rel (%p692) target = $region68
        $region67: #{bert_forward.1} parent=11 // pred_region
          _
        $region68: #{bert_forward.1} parent=11 // pred_fallthru
          _
        // Predicated region
        $region69: #{bert_forward.1} parent=11 // pred_check
          %p695 = pneg %p413
        $region70: #{bert_forward.1} parent=11 // pred_check_branch
          %697 = sbr.rel (%p695) target = $region72
        $region71: #{bert_forward.1} parent=11 // pred_region
          _
        $region72: #{bert_forward.1} parent=11 // pred_fallthru
          _
        // Predicated region
        $region73: #{bert_forward.1} parent=11 // pred_check
          %p698 = pneg %p434
        $region74: #{bert_forward.1} parent=11 // pred_check_branch
          %700 = sbr.rel (%p698) target = $region76
        $region75: #{bert_forward.1} parent=11 // pred_region
          _
        $region76: #{bert_forward.1} parent=11 // pred_fallthru
          _
        // Predicated region
        $region77: #{bert_forward.1} parent=11 // pred_check
          %p701 = pneg %p455
        $region78: #{bert_forward.1} parent=11 // pred_check_branch
          %703 = sbr.rel (%p701) target = $region80
        $region79: #{bert_forward.1} parent=11 // pred_region
          _
        $region80: #{bert_forward.1} parent=11 // pred_fallthru
          _
        // Predicated region
        $region81: #{bert_forward.1} parent=11 // pred_check
          %p704 = pneg %p476
        $region82: #{bert_forward.1} parent=11 // pred_check_branch
          %706 = sbr.rel (%p704) target = $region84
        $region83: #{bert_forward.1} parent=11 // pred_region
          _
        $region84: #{bert_forward.1} parent=11 // pred_fallthru
          _
        // Predicated region
        $region85: #{bert_forward.1} parent=11 // pred_check
          %p707 = pneg %p497
        $region86: #{bert_forward.1} parent=11 // pred_check_branch
          %709 = sbr.rel (%p707) target = $region88
        $region87: #{bert_forward.1} parent=11 // pred_region
          _
        $region88: #{bert_forward.1} parent=11 // pred_fallthru
          _
        // Predicated region
        $region89: #{bert_forward.1} parent=11 // pred_check
          %p710 = pneg %p518
        $region90: #{bert_forward.1} parent=11 // pred_check_branch
          %712 = sbr.rel (%p710) target = $region92
        $region91: #{bert_forward.1} parent=11 // pred_region
          _
        $region92: #{bert_forward.1} parent=11 // pred_fallthru
          _
        // Predicated region
        $region93: #{bert_forward.1} parent=11 // pred_check
          %p713 = pneg %p539
        $region94: #{bert_forward.1} parent=11 // pred_check_branch
          %715 = sbr.rel (%p713) target = $region96
        $region95: #{bert_forward.1} parent=11 // pred_region
          _
        $region96: #{bert_forward.1} parent=11 // pred_fallthru
          _
        // Predicated region
        $region97: #{bert_forward.1} parent=11 // pred_check
          %p716 = pneg %p560
        $region98: #{bert_forward.1} parent=11 // pred_check_branch
          %718 = sbr.rel (%p716) target = $region100
        $region99: #{bert_forward.1} parent=11 // pred_region
          _
        $region100: #{bert_forward.1} parent=11 // pred_fallthru
          _
      $region12: #{bert_forward.1} parent=5 // pred_fallthru
        _
      %p719 = scmp.lt.s32.totalorder %s46, 2
      // Predicated region
      $region101: #{bert_forward.1} parent=5 // pred_check
        %p720 = pneg %p719
      $region102: #{bert_forward.1} parent=5 // pred_check_branch
        %722 = sbr.rel (%p720) target = $region104
      $region103: #{bert_forward.1} parent=5 // pred_region
        // Predicated region
        $region105: #{bert_forward.1} parent=103 // pred_check
          %p723 = pneg %p66
        $region106: #{bert_forward.1} parent=103 // pred_check_branch
          %725 = sbr.rel (%p723) target = $region108
        $region107: #{bert_forward.1} parent=103 // pred_region
          %p726 = scmp.lt.s32.totalorder %s46, 1
          %s727 = scalar_select %p726, %s46, 1
          %s728 = smul.addr %s727, 8
          %s729 = scalar_lea.vmem %s1, %s728
        $region108: #{bert_forward.1} parent=103 // pred_fallthru
          _
        // Predicated region
        $region109: #{bert_forward.1} parent=103 // pred_check
          %p730 = pneg %p92
        $region110: #{bert_forward.1} parent=103 // pred_check_branch
          %732 = sbr.rel (%p730) target = $region112
        $region111: #{bert_forward.1} parent=103 // pred_region
          %p733 = scmp.lt.s32.totalorder %s46, 1
          %s734 = scalar_select %p733, %s46, 1
          %s735 = smul.addr %s734, 8
          %s736 = scalar_lea.vmem %s2, %s735
        $region112: #{bert_forward.1} parent=103 // pred_fallthru
          _
      $region104: #{bert_forward.1} parent=5 // pred_fallthru
        _
      %p737 = scmp.le.s32.totalorder 1, %s46
      %p738 = scmp.lt.s32.totalorder %s46, 3
      %p739 = pnand %p737, %p738
      %p740 = pneg %p739
      // Predicated region
      $region113: #{bert_forward.1} parent=5 // pred_check
        _
      $region114: #{bert_forward.1} parent=5 // pred_check_branch
        %742 = sbr.rel (%p739) target = $region116
      $region115: #{bert_forward.1} parent=5 // pred_region
        %s743 = ssub.s32 %s46, 1
        %p744 = scmp.lt.s32.totalorder %s51, 1
        %s745 = scalar_select %p744, %s51, 1
        %s746 = smul.addr %s745, 8
        %s747 = scalar_lea.vmem %s1, %s746
        %p748 = pneg %p72
        %p749 = pneg %p69
        %p750 = scmp.lt.s32.totalorder %s51, 1
        %s751 = scalar_select %p750, %s51, 1
        %s752 = smul.addr %s751, 8
        %s753 = scalar_lea.vmem %s2, %s752
        %p754 = pneg %p98
        %p755 = pneg %p95
        %p756 = pneg %p119
        %p757 = pneg %p116
        %p758 = pneg %p140
        %p759 = pneg %p137
        %p760 = pneg %p161
        %p761 = pneg %p158
        %p762 = pneg %p182
        %p763 = pneg %p179
        %p764 = pneg %p203
        %p765 = pneg %p200
        %p766 = pneg %p224
        %p767 = pneg %p221
        %p768 = pneg %p245
        %p769 = pneg %p242
        %p770 = pneg %p266
        %p771 = pneg %p263
        %p772 = pneg %p287
        %p773 = pneg %p284
        %p774 = pneg %p308
        %p775 = pneg %p305
        %p776 = pneg %p329
        %p777 = pneg %p326
        %p778 = pneg %p350
        %p779 = pneg %p347
        %p780 = pneg %p371
        %p781 = pneg %p368
        %p782 = pneg %p392
        %p783 = pneg %p389
        %p784 = pneg %p413
        %p785 = pneg %p410
        %p786 = pneg %p434
        %p787 = pneg %p431
        %p788 = pneg %p455
        %p789 = pneg %p452
        %p790 = pneg %p476
        %p791 = pneg %p473
        %p792 = pneg %p497
        %p793 = pneg %p494
        %p794 = pneg %p518
        %p795 = pneg %p515
        %p796 = pneg %p539
        %p797 = pneg %p536
        %p798 = pneg %p560
        %p799 = pneg %p557
        %p800 = pneg %p586
        %p801 = pneg %p583
        %s802 = sand.u32 %s573, 1
        %s803 = scalar_lea.sflag [#allocation5], %s802
        %s804 = sand.u32 %s573, 1
        %s805 = smul.addr %s804, 8
        %s806 = scalar_lea.vmem [#allocation4], %s805
        %p807 = pneg %p612
        %p808 = pneg %p609
        %s809 = sand.u32 %s51, 1
        %s810 = scalar_lea.sflag [#allocation7], %s809
        %s811 = sand.u32 %s599, 1
        %s812 = scalar_lea.vmem [#allocation6], %s811
        %p813 = pneg %p638
        %p814 = pneg %p635
        %s815 = sand.u32 %s51, 1
        %s816 = scalar_lea.sflag [#allocation7], %s815
        %s817 = sand.u32 %s625, 1
        %s818 = smul.addr %s817, 2
        %s819 = scalar_lea.vmem [#allocation8], %s818
        %p820 = scmp.lt.s32.totalorder %s51, 1
        %s821 = scalar_select %p820, %s51, 1
        %s822 = smul.addr %s821, 8
        %s823 = scalar_lea.vmem %s1, %s822
        %p824 = scmp.lt.s32.totalorder %s51, 1
        %s825 = scalar_select %p824, %s51, 1
        %s826 = smul.addr %s825, 8
        %s827 = scalar_lea.vmem %s2, %s826
        %v828 = vld [vmem:[%s827] sm:$0xff]
        %v829 = vld [vmem:[%s823] sm:$0xff]
        %v830 = vld [vmem:[%s3] sm:$0x1]
        %v831 = vld [vmem:[%s4] sm:$0x1]
        %vm832 = vcmask 261120
        %v833 = vsel %vm832, %v829, 0.0
        %834 = vadd.xlane.f32.xlu0 %v833
        %v835 = vpop.xlane.xlu0 %834
        %v836 = vrcp.pop 32.0
        %v837 = vmul.f32 %v835, %v836
        %v838 = vsub.f32 %v829, %v837
        %v839 = vmul.f32 %v838, %v838
        %v840 = vsel %vm832, %v839, 0.0
        %841 = vadd.xlane.f32.xlu0 %v840
        %v842 = vpop.xlane.xlu0 %841
        %v843 = vmul.f32 %v842, %v836
        %v844 = vadd.f32 %v843, 1e-05
        %v845 = vrsqrt.pop %v844
        %v846 = vmul.f32 %v838, %v845
        %v848 = vlaneseq
        %v849 = vshrl.u32 %v848, 7
        %v850 = vsub.s32 0, %v849
        %v851 = vrot.slane %v830, %v850
        %v853 = vmul.f32 %v846, %v851
        %v855 = vlaneseq
        %v856 = vshrl.u32 %v855, 7
        %v857 = vsub.s32 0, %v856
        %v858 = vrot.slane %v831, %v857
        %v860 = vadd.f32 %v853, %v858
        %v861 = vld [vmem:[%s5] sm:$0xff]
        %v862 = vld [vmem:[%s5 + $0x8] sm:$0xff]
        %v863 = vld [vmem:[%s5 + $0x10] sm:$0xff]
        %v864 = vld [vmem:[%s5 + $0x18] sm:$0xff]
        %v865 = vld [vmem:[%s6] sm:$0x1]
        %v866 = vld [vmem:[%s7] sm:$0xff]
        %v867 = vld [vmem:[%s7 + $0x8] sm:$0xff]
        %v868 = vld [vmem:[%s7 + $0x10] sm:$0xff]
        %v869 = vld [vmem:[%s7 + $0x18] sm:$0xff]
        %v870 = vld [vmem:[%s8] sm:$0x1]
        %v871 = vld [vmem:[%s9] sm:$0x1]
        %v872 = vld [vmem:[%s10] sm:$0x1]
        %v873 = vld [vmem:[%s11] sm:$0xff]
        %v874 = vld [vmem:[%s11 + $0x8] sm:$0xff]
        %v875 = vld [vmem:[%s11 + $0x10] sm:$0xff]
        %v876 = vld [vmem:[%s11 + $0x18] sm:$0xff]
        %v877 = vld [vmem:[%s12] sm:$0x1]
        %v878 = vld [vmem:[%s13] sm:$0xff]
        %v879 = vld [vmem:[%s13 + $0x8] sm:$0xff]
        %v880 = vld [vmem:[%s13 + $0x10] sm:$0xff]
        %v881 = vld [vmem:[%s13 + $0x18] sm:$0xff]
        %v882 = vld [vmem:[%s13 + $0x20] sm:$0xff]
        %v883 = vld [vmem:[%s13 + $0x28] sm:$0xff]
        %v884 = vld [vmem:[%s13 + $0x30] sm:$0xff]
        %v885 = vld [vmem:[%s13 + $0x38] sm:$0xff]
        %v886 = vld [vmem:[%s14] sm:$0x1]
        %v888 = vlaneseq
        %v889 = vshrl.u32 %v888, 7
        %v890 = vsub.s32 0, %v889
        %v891 = vrot.slane %v865, %v890
        %v894 = vsel %vm832, %v860, 0
        %896 = vmatprep.subr.mxu0 0.0
        %897 = vmatpush1.msra.mxu0 %v861
        %898 = vmatprep.subr.mxu0 0.0
        %899 = vmatpush1.msra.mxu0 %v862
        %900 = vmatprep.subr.mxu0 0.0
        %901 = vmatpush1.msra.mxu0 %v863
        %902 = vmatprep.subr.mxu0 0.0
        %903 = vmatpush1.msra.mxu0 %v864
        %904 = vmatprep.subr.mxu0 0.0
        %905 = vmatpush1.msra.mxu0 0.0
        %906 = vmatprep.subr.mxu0 0.0
        %907 = vmatpush1.msra.mxu0 0.0
        %908 = vmatprep.subr.mxu0 0.0
        %909 = vmatpush1.msra.mxu0 0.0
        %910 = vmatprep.subr.mxu0 0.0
        %911 = vmatpush1.msra.mxu0 0.0
        %912 = vmatprep.subr.mxu0 0.0
        %913 = vmatpush1.msra.mxu0 0.0
        %914 = vmatprep.subr.mxu0 0.0
        %915 = vmatpush1.msra.mxu0 0.0
        %916 = vmatprep.subr.mxu0 0.0
        %917 = vmatpush1.msra.mxu0 0.0
        %918 = vmatprep.subr.mxu0 0.0
        %919 = vmatpush1.msra.mxu0 0.0
        %920 = vmatprep.subr.mxu0 0.0
        %921 = vmatpush1.msra.mxu0 0.0
        %922 = vmatprep.subr.mxu0 0.0
        %923 = vmatpush1.msra.mxu0 0.0
        %924 = vmatprep.subr.mxu0 0.0
        %925 = vmatpush1.msra.mxu0 0.0
        %926 = vmatprep.subr.mxu0 0.0
        %927 = vmatpush1.msra.mxu0 0.0
        %928 = vmatprep.subr.mxu0 0.0
        %929 = vmatpush1.msra.mxu0 0.0
        %930 = vmatprep.subr.mxu0 0.0
        %931 = vmatpush1.msra.mxu0 0.0
        %932 = vmatprep.subr.mxu0 0.0
        %933 = vmatpush1.msra.mxu0 0.0
        %934 = vmatprep.subr.mxu0 0.0
        %935 = vmatpush1.msra.mxu0 0.0
        %936 = vmatprep.subr.mxu0 0.0
        %937 = vmatpush1.msra.mxu0 0.0
        %938 = vmatprep.subr.mxu0 0.0
        %939 = vmatpush1.msra.mxu0 0.0
        %940 = vmatprep.subr.mxu0 0.0
        %941 = vmatpush1.msra.mxu0 0.0
        %942 = vmatprep.subr.mxu0 0.0
        %943 = vmatpush1.msra.mxu0 0.0
        %944 = vmatprep.subr.mxu0 0.0
        %945 = vmatpush1.msra.mxu0 0.0
        %946 = vmatprep.subr.mxu0 0.0
        %947 = vmatpush1.msra.mxu0 0.0
        %948 = vmatprep.subr.mxu0 0.0
        %949 = vmatpush1.msra.mxu0 0.0
        %950 = vmatprep.subr.mxu0 0.0
        %951 = vmatpush1.msra.mxu0 0.0
        %952 = vmatprep.subr.mxu0 0.0
        %953 = vmatpush1.msra.mxu0 0.0
        %954 = vmatprep.subr.mxu0 0.0
        %955 = vmatpush1.msra.mxu0 0.0
        %956 = vmatprep.subr.mxu0 0.0
        %957 = vmatpush1.msra.mxu0 0.0
        %958 = vmatprep.subr.mxu0 0.0
        %959 = vmatpush1.msra.mxu0 0.0
        %960 = vmatprep.mubr.f32.mxu0 0.0
        %961 = vmatmul.mubr.f32.gmra.mrb[0].mxu0 %v894
        %v962 = vpop.f32.mrb[0].mxu0
        %v963 = vadd.f32 %v891, %v962
        %v964 = vpop.f32.mrb[0].mxu0
        %965 = vdwg.mxu0
        %967 = vrot.lane.b32.xlu0 %v963, 96
        %v968 = vpop.permute.xlu0 %967
        %vm969 = vcmask 64512
        %v970 = vsel %vm969, %v963, 0
        %v972 = vsel %vm969, %v968, 0
        %974 = vmatprep.subr.mxu0 0.0
        %975 = vmatpush1.xpose.msra.mxu0 %v972
        %976 = vmatprep.subr.mxu0 0.0
        %977 = vmatpush1.xpose.msra.mxu0 0.0
        %978 = vmatprep.subr.mxu0 0.0
        %979 = vmatpush1.xpose.msra.mxu0 0.0
        %980 = vmatprep.subr.mxu0 0.0
        %981 = vmatpush1.xpose.msra.mxu0 0.0
        %982 = vmatprep.subr.mxu0 0.0
        %983 = vmatpush1.xpose.msra.mxu0 0.0
        %984 = vmatprep.subr.mxu0 0.0
        %985 = vmatpush1.xpose.msra.mxu0 0.0
        %986 = vmatprep.subr.mxu0 0.0
        %987 = vmatpush1.xpose.msra.mxu0 0.0
        %988 = vmatprep.subr.mxu0 0.0
        %989 = vmatpush1.xpose.msra.mxu0 0.0
        %990 = vmatprep.subr.mxu0 0.0
        %991 = vmatpush1.xpose.msra.mxu0 0.0
        %992 = vmatprep.subr.mxu0 0.0
        %993 = vmatpush1.xpose.msra.mxu0 0.0
        %994 = vmatprep.subr.mxu0 0.0
        %995 = vmatpush1.xpose.msra.mxu0 0.0
        %996 = vmatprep.subr.mxu0 0.0
        %997 = vmatpush1.xpose.msra.mxu0 0.0
        %998 = vmatprep.subr.mxu0 0.0
        %999 = vmatpush1.xpose.msra.mxu0 0.0
        %1000 = vmatprep.subr.mxu0 0.0
        %1001 = vmatpush1.xpose.msra.mxu0 0.0
        %1002 = vmatprep.subr.mxu0 0.0
        %1003 = vmatpush1.xpose.msra.mxu0 0.0
        %1004 = vmatprep.subr.mxu0 0.0
        %1005 = vmatpush1.xpose.msra.mxu0 0.0
        %1006 = vmatprep.subr.mxu0 0.0
        %1007 = vmatpush1.xpose.msra.mxu0 0.0
        %1008 = vmatprep.subr.mxu0 0.0
        %1009 = vmatpush1.xpose.msra.mxu0 0.0
        %1010 = vmatprep.subr.mxu0 0.0
        %1011 = vmatpush1.xpose.msra.mxu0 0.0
        %1012 = vmatprep.subr.mxu0 0.0
        %1013 = vmatpush1.xpose.msra.mxu0 0.0
        %1014 = vmatprep.subr.mxu0 0.0
        %1015 = vmatpush1.xpose.msra.mxu0 0.0
        %1016 = vmatprep.subr.mxu0 0.0
        %1017 = vmatpush1.xpose.msra.mxu0 0.0
        %1018 = vmatprep.subr.mxu0 0.0
        %1019 = vmatpush1.xpose.msra.mxu0 0.0
        %1020 = vmatprep.subr.mxu0 0.0
        %1021 = vmatpush1.xpose.msra.mxu0 0.0
        %1022 = vmatprep.subr.mxu0 0.0
        %1023 = vmatpush1.xpose.msra.mxu0 0.0
        %1024 = vmatprep.subr.mxu0 0.0
        %1025 = vmatpush1.xpose.msra.mxu0 0.0
        %1026 = vmatprep.subr.mxu0 0.0
        %1027 = vmatpush1.xpose.msra.mxu0 0.0
        %1028 = vmatprep.subr.mxu0 0.0
        %1029 = vmatpush1.xpose.msra.mxu0 0.0
        %1030 = vmatprep.subr.mxu0 0.0
        %1031 = vmatpush1.xpose.msra.mxu0 0.0
        %1032 = vmatprep.subr.mxu0 0.0
        %1033 = vmatpush1.xpose.msra.mxu0 0.0
        %1034 = vmatprep.subr.mxu0 0.0
        %1035 = vmatpush1.xpose.msra.mxu0 0.0
        %1036 = vmatprep.subr.mxu0 0.0
        %1037 = vmatpush1.xpose.msra.mxu0 0.0
        %1038 = vmatprep.mubr.f32.mxu0 0.0
        %1039 = vmatmul.mubr.f32.gmra.mrb[0].mxu0 %v970
        %v1040 = vpop.f32.mrb[0].mxu0
        %v1041 = vadd.f32 0.0, %v1040
        %v1042 = vpop.f32.mrb[0].mxu0
        %1043 = vdwg.mxu0
        %v1044 = vmul.f32 %v1041, 0.35355338
        %v1045 = vadd.f32 %v1044, %v828
        %v1046 = vsel %vm969, %v1045, -inf
        %1047 = vmax.xlane.f32.xlu0 %v1046
        %v1048 = vpop.xlane.xlu0 %1047
        %v1049 = vsub.f32 %v1045, %v1048
        %v1050 = vmul.f32 %v1049, 1.442695
        %v1051 = vpow.pop %v1050
        %v1052 = vsel %vm969, %v1051, 0.0
        %1053 = vadd.xlane.f32.xlu0 %v1052
        %v1054 = vpop.xlane.xlu0 %1053
        %v1055 = vrcp.pop %v1054
        %v1056 = vmul.f32 %v1051, %v1055
        %1057 = vrot.lane.b32.xlu0 %v963, 64
        %v1058 = vpop.permute.xlu0 %1057
        %v1061 = vsel %vm969, %v1056, 0
        %1063 = vmatprep.subr.mxu0 0.0
        %1064 = vmatpush1.msra.mxu0 %v1058
        %1065 = vmatprep.subr.mxu0 0.0
        %1066 = vmatpush1.msra.mxu0 0.0
        %1067 = vmatprep.subr.mxu0 0.0
        %1068 = vmatpush1.msra.mxu0 0.0
        %1069 = vmatprep.subr.mxu0 0.0
        %1070 = vmatpush1.msra.mxu0 0.0
        %1071 = vmatprep.subr.mxu0 0.0
        %1072 = vmatpush1.msra.mxu0 0.0
        %1073 = vmatprep.subr.mxu0 0.0
        %1074 = vmatpush1.msra.mxu0 0.0
        %1075 = vmatprep.subr.mxu0 0.0
        %1076 = vmatpush1.msra.mxu0 0.0
        %1077 = vmatprep.subr.mxu0 0.0
        %1078 = vmatpush1.msra.mxu0 0.0
        %1079 = vmatprep.subr.mxu0 0.0
        %1080 = vmatpush1.msra.mxu0 0.0
        %1081 = vmatprep.subr.mxu0 0.0
        %1082 = vmatpush1.msra.mxu0 0.0
        %1083 = vmatprep.subr.mxu0 0.0
        %1084 = vmatpush1.msra.mxu0 0.0
        %1085 = vmatprep.subr.mxu0 0.0
        %1086 = vmatpush1.msra.mxu0 0.0
        %1087 = vmatprep.subr.mxu0 0.0
        %1088 = vmatpush1.msra.mxu0 0.0
        %1089 = vmatprep.subr.mxu0 0.0
        %1090 = vmatpush1.msra.mxu0 0.0
        %1091 = vmatprep.subr.mxu0 0.0
        %1092 = vmatpush1.msra.mxu0 0.0
        %1093 = vmatprep.subr.mxu0 0.0
        %1094 = vmatpush1.msra.mxu0 0.0
        %1095 = vmatprep.subr.mxu0 0.0
        %1096 = vmatpush1.msra.mxu0 0.0
        %1097 = vmatprep.subr.mxu0 0.0
        %1098 = vmatpush1.msra.mxu0 0.0
        %1099 = vmatprep.subr.mxu0 0.0
        %1100 = vmatpush1.msra.mxu0 0.0
        %1101 = vmatprep.subr.mxu0 0.0
        %1102 = vmatpush1.msra.mxu0 0.0
        %1103 = vmatprep.subr.mxu0 0.0
        %1104 = vmatpush1.msra.mxu0 0.0
        %1105 = vmatprep.subr.mxu0 0.0
        %1106 = vmatpush1.msra.mxu0 0.0
        %1107 = vmatprep.subr.mxu0 0.0
        %1108 = vmatpush1.msra.mxu0 0.0
        %1109 = vmatprep.subr.mxu0 0.0
        %1110 = vmatpush1.msra.mxu0 0.0
        %1111 = vmatprep.subr.mxu0 0.0
        %1112 = vmatpush1.msra.mxu0 0.0
        %1113 = vmatprep.subr.mxu0 0.0
        %1114 = vmatpush1.msra.mxu0 0.0
        %1115 = vmatprep.subr.mxu0 0.0
        %1116 = vmatpush1.msra.mxu0 0.0
        %1117 = vmatprep.subr.mxu0 0.0
        %1118 = vmatpush1.msra.mxu0 0.0
        %1119 = vmatprep.subr.mxu0 0.0
        %1120 = vmatpush1.msra.mxu0 0.0
        %1121 = vmatprep.subr.mxu0 0.0
        %1122 = vmatpush1.msra.mxu0 0.0
        %1123 = vmatprep.subr.mxu0 0.0
        %1124 = vmatpush1.msra.mxu0 0.0
        %1125 = vmatprep.subr.mxu0 0.0
        %1126 = vmatpush1.msra.mxu0 0.0
        %1127 = vmatprep.mubr.f32.mxu0 0.0
        %1128 = vmatmul.mubr.f32.gmra.mrb[0].mxu0 %v1061
        %v1129 = vpop.f32.mrb[0].mxu0
        %v1130 = vadd.f32 0.0, %v1129
        %v1131 = vpop.f32.mrb[0].mxu0
        %1132 = vdwg.mxu0
        %1133 = vrot.lane.b32.xlu0 %v963, 120
        %v1134 = vpop.permute.xlu0 %1133
        %1135 = vrot.lane.b32.xlu0 %v963, 88
        %v1136 = vpop.permute.xlu0 %1135
        %v1137 = vsel %vm969, %v1134, 0
        %v1139 = vsel %vm969, %v1136, 0
        %1141 = vmatprep.subr.mxu0 0.0
        %1142 = vmatpush1.xpose.msra.mxu0 %v1139
        %1143 = vmatprep.subr.mxu0 0.0
        %1144 = vmatpush1.xpose.msra.mxu0 0.0
        %1145 = vmatprep.subr.mxu0 0.0
        %1146 = vmatpush1.xpose.msra.mxu0 0.0
        %1147 = vmatprep.subr.mxu0 0.0
        %1148 = vmatpush1.xpose.msra.mxu0 0.0
        %1149 = vmatprep.subr.mxu0 0.0
        %1150 = vmatpush1.xpose.msra.mxu0 0.0
        %1151 = vmatprep.subr.mxu0 0.0
        %1152 = vmatpush1.xpose.msra.mxu0 0.0
        %1153 = vmatprep.subr.mxu0 0.0
        %1154 = vmatpush1.xpose.msra.mxu0 0.0
        %1155 = vmatprep.subr.mxu0 0.0
        %1156 = vmatpush1.xpose.msra.mxu0 0.0
        %1157 = vmatprep.subr.mxu0 0.0
        %1158 = vmatpush1.xpose.msra.mxu0 0.0
        %1159 = vmatprep.subr.mxu0 0.0
        %1160 = vmatpush1.xpose.msra.mxu0 0.0
        %1161 = vmatprep.subr.mxu0 0.0
        %1162 = vmatpush1.xpose.msra.mxu0 0.0
        %1163 = vmatprep.subr.mxu0 0.0
        %1164 = vmatpush1.xpose.msra.mxu0 0.0
        %1165 = vmatprep.subr.mxu0 0.0
        %1166 = vmatpush1.xpose.msra.mxu0 0.0
        %1167 = vmatprep.subr.mxu0 0.0
        %1168 = vmatpush1.xpose.msra.mxu0 0.0
        %1169 = vmatprep.subr.mxu0 0.0
        %1170 = vmatpush1.xpose.msra.mxu0 0.0
        %1171 = vmatprep.subr.mxu0 0.0
        %1172 = vmatpush1.xpose.msra.mxu0 0.0
        %1173 = vmatprep.subr.mxu0 0.0
        %1174 = vmatpush1.xpose.msra.mxu0 0.0
        %1175 = vmatprep.subr.mxu0 0.0
        %1176 = vmatpush1.xpose.msra.mxu0 0.0
        %1177 = vmatprep.subr.mxu0 0.0
        %1178 = vmatpush1.xpose.msra.mxu0 0.0
        %1179 = vmatprep.subr.mxu0 0.0
        %1180 = vmatpush1.xpose.msra.mxu0 0.0
        %1181 = vmatprep.subr.mxu0 0.0
        %1182 = vmatpush1.xpose.msra.mxu0 0.0
        %1183 = vmatprep.subr.mxu0 0.0
        %1184 = vmatpush1.xpose.msra.mxu0 0.0
        %1185 = vmatprep.subr.mxu0 0.0
        %1186 = vmatpush1.xpose.msra.mxu0 0.0
        %1187 = vmatprep.subr.mxu0 0.0
        %1188 = vmatpush1.xpose.msra.mxu0 0.0
        %1189 = vmatprep.subr.mxu0 0.0
        %1190 = vmatpush1.xpose.msra.mxu0 0.0
        %1191 = vmatprep.subr.mxu0 0.0
        %1192 = vmatpush1.xpose.msra.mxu0 0.0
        %1193 = vmatprep.subr.mxu0 0.0
        %1194 = vmatpush1.xpose.msra.mxu0 0.0
        %1195 = vmatprep.subr.mxu0 0.0
        %1196 = vmatpush1.xpose.msra.mxu0 0.0
        %1197 = vmatprep.subr.mxu0 0.0
        %1198 = vmatpush1.xpose.msra.mxu0 0.0
        %1199 = vmatprep.subr.mxu0 0.0
        %1200 = vmatpush1.xpose.msra.mxu0 0.0
        %1201 = vmatprep.subr.mxu0 0.0
        %1202 = vmatpush1.xpose.msra.mxu0 0.0
        %1203 = vmatprep.subr.mxu0 0.0
        %1204 = vmatpush1.xpose.msra.mxu0 0.0
        %1205 = vmatprep.mubr.f32.mxu0 0.0
        %1206 = vmatmul.mubr.f32.gmra.mrb[0].mxu0 %v1137
        %v1207 = vpop.f32.mrb[0].mxu0
        %v1208 = vadd.f32 0.0, %v1207
        %v1209 = vpop.f32.mrb[0].mxu0
        %1210 = vdwg.mxu0
        %v1211 = vmul.f32 %v1208, 0.35355338
        %v1212 = vadd.f32 %v1211, %v828
        %v1213 = vsel %vm969, %v1212, -inf
        %1214 = vmax.xlane.f32.xlu0 %v1213
        %v1215 = vpop.xlane.xlu0 %1214
        %v1216 = vsub.f32 %v1212, %v1215
        %v1217 = vmul.f32 %v1216, 1.442695
        %v1218 = vpow.pop %v1217
        %v1219 = vsel %vm969, %v1218, 0.0
        %1220 = vadd.xlane.f32.xlu0 %v1219
        %v1221 = vpop.xlane.xlu0 %1220
        %v1222 = vrcp.pop %v1221
        %v1223 = vmul.f32 %v1218, %v1222
        %1224 = vrot.lane.b32.xlu0 %v963, 56
        %v1225 = vpop.permute.xlu0 %1224
        %v1228 = vsel %vm969, %v1223, 0
        %1230 = vmatprep.subr.mxu0 0.0
        %1231 = vmatpush1.msra.mxu0 %v1225
        %1232 = vmatprep.subr.mxu0 0.0
        %1233 = vmatpush1.msra.mxu0 0.0
        %1234 = vmatprep.subr.mxu0 0.0
        %1235 = vmatpush1.msra.mxu0 0.0
        %1236 = vmatprep.subr.mxu0 0.0
        %1237 = vmatpush1.msra.mxu0 0.0
        %1238 = vmatprep.subr.mxu0 0.0
        %1239 = vmatpush1.msra.mxu0 0.0
        %1240 = vmatprep.subr.mxu0 0.0
        %1241 = vmatpush1.msra.mxu0 0.0
        %1242 = vmatprep.subr.mxu0 0.0
        %1243 = vmatpush1.msra.mxu0 0.0
        %1244 = vmatprep.subr.mxu0 0.0
        %1245 = vmatpush1.msra.mxu0 0.0
        %1246 = vmatprep.subr.mxu0 0.0
        %1247 = vmatpush1.msra.mxu0 0.0
        %1248 = vmatprep.subr.mxu0 0.0
        %1249 = vmatpush1.msra.mxu0 0.0
        %1250 = vmatprep.subr.mxu0 0.0
        %1251 = vmatpush1.msra.mxu0 0.0
        %1252 = vmatprep.subr.mxu0 0.0
        %1253 = vmatpush1.msra.mxu0 0.0
        %1254 = vmatprep.subr.mxu0 0.0
        %1255 = vmatpush1.msra.mxu0 0.0
        %1256 = vmatprep.subr.mxu0 0.0
        %1257 = vmatpush1.msra.mxu0 0.0
        %1258 = vmatprep.subr.mxu0 0.0
        %1259 = vmatpush1.msra.mxu0 0.0
        %1260 = vmatprep.subr.mxu0 0.0
        %1261 = vmatpush1.msra.mxu0 0.0
        %1262 = vmatprep.subr.mxu0 0.0
        %1263 = vmatpush1.msra.mxu0 0.0
        %1264 = vmatprep.subr.mxu0 0.0
        %1265 = vmatpush1.msra.mxu0 0.0
        %1266 = vmatprep.subr.mxu0 0.0
        %1267 = vmatpush1.msra.mxu0 0.0
        %1268 = vmatprep.subr.mxu0 0.0
        %1269 = vmatpush1.msra.mxu0 0.0
        %1270 = vmatprep.subr.mxu0 0.0
        %1271 = vmatpush1.msra.mxu0 0.0
        %1272 = vmatprep.subr.mxu0 0.0
        %1273 = vmatpush1.msra.mxu0 0.0
        %1274 = vmatprep.subr.mxu0 0.0
        %1275 = vmatpush1.msra.mxu0 0.0
        %1276 = vmatprep.subr.mxu0 0.0
        %1277 = vmatpush1.msra.mxu0 0.0
        %1278 = vmatprep.subr.mxu0 0.0
        %1279 = vmatpush1.msra.mxu0 0.0
        %1280 = vmatprep.subr.mxu0 0.0
        %1281 = vmatpush1.msra.mxu0 0.0
        %1282 = vmatprep.subr.mxu0 0.0
        %1283 = vmatpush1.msra.mxu0 0.0
        %1284 = vmatprep.subr.mxu0 0.0
        %1285 = vmatpush1.msra.mxu0 0.0
        %1286 = vmatprep.subr.mxu0 0.0
        %1287 = vmatpush1.msra.mxu0 0.0
        %1288 = vmatprep.subr.mxu0 0.0
        %1289 = vmatpush1.msra.mxu0 0.0
        %1290 = vmatprep.subr.mxu0 0.0
        %1291 = vmatpush1.msra.mxu0 0.0
        %1292 = vmatprep.subr.mxu0 0.0
        %1293 = vmatpush1.msra.mxu0 0.0
        %1294 = vmatprep.mubr.f32.mxu0 0.0
        %1295 = vmatmul.mubr.f32.gmra.mrb[0].mxu0 %v1228
        %v1296 = vpop.f32.mrb[0].mxu0
        %v1297 = vadd.f32 0.0, %v1296
        %v1298 = vpop.f32.mrb[0].mxu0
        %1299 = vdwg.mxu0
        %1300 = vrot.lane.b32.xlu0 %v963, 112
        %v1301 = vpop.permute.xlu0 %1300
        %1302 = vrot.lane.b32.xlu0 %v963, 80
        %v1303 = vpop.permute.xlu0 %1302
        %v1304 = vsel %vm969, %v1301, 0
        %v1306 = vsel %vm969, %v1303, 0
        %1308 = vmatprep.subr.mxu0 0.0
        %1309 = vmatpush1.xpose.msra.mxu0 %v1306
        %1310 = vmatprep.subr.mxu0 0.0
        %1311 = vmatpush1.xpose.msra.mxu0 0.0
        %1312 = vmatprep.subr.mxu0 0.0
        %1313 = vmatpush1.xpose.msra.mxu0 0.0
        %1314 = vmatprep.subr.mxu0 0.0
        %1315 = vmatpush1.xpose.msra.mxu0 0.0
        %1316 = vmatprep.subr.mxu0 0.0
        %1317 = vmatpush1.xpose.msra.mxu0 0.0
        %1318 = vmatprep.subr.mxu0 0.0
        %1319 = vmatpush1.xpose.msra.mxu0 0.0
        %1320 = vmatprep.subr.mxu0 0.0
        %1321 = vmatpush1.xpose.msra.mxu0 0.0
        %1322 = vmatprep.subr.mxu0 0.0
        %1323 = vmatpush1.xpose.msra.mxu0 0.0
        %1324 = vmatprep.subr.mxu0 0.0
        %1325 = vmatpush1.xpose.msra.mxu0 0.0
        %1326 = vmatprep.subr.mxu0 0.0
        %1327 = vmatpush1.xpose.msra.mxu0 0.0
        %1328 = vmatprep.subr.mxu0 0.0
        %1329 = vmatpush1.xpose.msra.mxu0 0.0
        %1330 = vmatprep.subr.mxu0 0.0
        %1331 = vmatpush1.xpose.msra.mxu0 0.0
        %1332 = vmatprep.subr.mxu0 0.0
        %1333 = vmatpush1.xpose.msra.mxu0 0.0
        %1334 = vmatprep.subr.mxu0 0.0
        %1335 = vmatpush1.xpose.msra.mxu0 0.0
        %1336 = vmatprep.subr.mxu0 0.0
        %1337 = vmatpush1.xpose.msra.mxu0 0.0
        %1338 = vmatprep.subr.mxu0 0.0
        %1339 = vmatpush1.xpose.msra.mxu0 0.0
        %1340 = vmatprep.subr.mxu0 0.0
        %1341 = vmatpush1.xpose.msra.mxu0 0.0
        %1342 = vmatprep.subr.mxu0 0.0
        %1343 = vmatpush1.xpose.msra.mxu0 0.0
        %1344 = vmatprep.subr.mxu0 0.0
        %1345 = vmatpush1.xpose.msra.mxu0 0.0
        %1346 = vmatprep.subr.mxu0 0.0
        %1347 = vmatpush1.xpose.msra.mxu0 0.0
        %1348 = vmatprep.subr.mxu0 0.0
        %1349 = vmatpush1.xpose.msra.mxu0 0.0
        %1350 = vmatprep.subr.mxu0 0.0
        %1351 = vmatpush1.xpose.msra.mxu0 0.0
        %1352 = vmatprep.subr.mxu0 0.0
        %1353 = vmatpush1.xpose.msra.mxu0 0.0
        %1354 = vmatprep.subr.mxu0 0.0
        %1355 = vmatpush1.xpose.msra.mxu0 0.0
        %1356 = vmatprep.subr.mxu0 0.0
        %1357 = vmatpush1.xpose.msra.mxu0 0.0
        %1358 = vmatprep.subr.mxu0 0.0
        %1359 = vmatpush1.xpose.msra.mxu0 0.0
        %1360 = vmatprep.subr.mxu0 0.0
        %1361 = vmatpush1.xpose.msra.mxu0 0.0
        %1362 = vmatprep.subr.mxu0 0.0
        %1363 = vmatpush1.xpose.msra.mxu0 0.0
        %1364 = vmatprep.subr.mxu0 0.0
        %1365 = vmatpush1.xpose.msra.mxu0 0.0
        %1366 = vmatprep.subr.mxu0 0.0
        %1367 = vmatpush1.xpose.msra.mxu0 0.0
        %1368 = vmatprep.subr.mxu0 0.0
        %1369 = vmatpush1.xpose.msra.mxu0 0.0
        %1370 = vmatprep.subr.mxu0 0.0
        %1371 = vmatpush1.xpose.msra.mxu0 0.0
        %1372 = vmatprep.mubr.f32.mxu0 0.0
        %1373 = vmatmul.mubr.f32.gmra.mrb[0].mxu0 %v1304
        %v1374 = vpop.f32.mrb[0].mxu0
        %v1375 = vadd.f32 0.0, %v1374
        %v1376 = vpop.f32.mrb[0].mxu0
        %1377 = vdwg.mxu0
        %v1378 = vmul.f32 %v1375, 0.35355338
        %v1379 = vadd.f32 %v1378, %v828
        %v1380 = vsel %vm969, %v1379, -inf
        %1381 = vmax.xlane.f32.xlu0 %v1380
        %v1382 = vpop.xlane.xlu0 %1381
        %v1383 = vsub.f32 %v1379, %v1382
        %v1384 = vmul.f32 %v1383, 1.442695
        %v1385 = vpow.pop %v1384
        %v1386 = vsel %vm969, %v1385, 0.0
        %1387 = vadd.xlane.f32.xlu0 %v1386
        %v1388 = vpop.xlane.xlu0 %1387
        %v1389 = vrcp.pop %v1388
        %v1390 = vmul.f32 %v1385, %v1389
        %1391 = vrot.lane.b32.xlu0 %v963, 48
        %v1392 = vpop.permute.xlu0 %1391
        %v1395 = vsel %vm969, %v1390, 0
        %1397 = vmatprep.subr.mxu0 0.0
        %1398 = vmatpush1.msra.mxu0 %v1392
        %1399 = vmatprep.subr.mxu0 0.0
        %1400 = vmatpush1.msra.mxu0 0.0
        %1401 = vmatprep.subr.mxu0 0.0
        %1402 = vmatpush1.msra.mxu0 0.0
        %1403 = vmatprep.subr.mxu0 0.0
        %1404 = vmatpush1.msra.mxu0 0.0
        %1405 = vmatprep.subr.mxu0 0.0
        %1406 = vmatpush1.msra.mxu0 0.0
        %1407 = vmatprep.subr.mxu0 0.0
        %1408 = vmatpush1.msra.mxu0 0.0
        %1409 = vmatprep.subr.mxu0 0.0
        %1410 = vmatpush1.msra.mxu0 0.0
        %1411 = vmatprep.subr.mxu0 0.0
        %1412 = vmatpush1.msra.mxu0 0.0
        %1413 = vmatprep.subr.mxu0 0.0
        %1414 = vmatpush1.msra.mxu0 0.0
        %1415 = vmatprep.subr.mxu0 0.0
        %1416 = vmatpush1.msra.mxu0 0.0
        %1417 = vmatprep.subr.mxu0 0.0
        %1418 = vmatpush1.msra.mxu0 0.0
        %1419 = vmatprep.subr.mxu0 0.0
        %1420 = vmatpush1.msra.mxu0 0.0
        %1421 = vmatprep.subr.mxu0 0.0
        %1422 = vmatpush1.msra.mxu0 0.0
        %1423 = vmatprep.subr.mxu0 0.0
        %1424 = vmatpush1.msra.mxu0 0.0
        %1425 = vmatprep.subr.mxu0 0.0
        %1426 = vmatpush1.msra.mxu0 0.0
        %1427 = vmatprep.subr.mxu0 0.0
        %1428 = vmatpush1.msra.mxu0 0.0
        %1429 = vmatprep.subr.mxu0 0.0
        %1430 = vmatpush1.msra.mxu0 0.0
        %1431 = vmatprep.subr.mxu0 0.0
        %1432 = vmatpush1.msra.mxu0 0.0
        %1433 = vmatprep.subr.mxu0 0.0
        %1434 = vmatpush1.msra.mxu0 0.0
        %1435 = vmatprep.subr.mxu0 0.0
        %1436 = vmatpush1.msra.mxu0 0.0
        %1437 = vmatprep.subr.mxu0 0.0
        %1438 = vmatpush1.msra.mxu0 0.0
        %1439 = vmatprep.subr.mxu0 0.0
        %1440 = vmatpush1.msra.mxu0 0.0
        %1441 = vmatprep.subr.mxu0 0.0
        %1442 = vmatpush1.msra.mxu0 0.0
        %1443 = vmatprep.subr.mxu0 0.0
        %1444 = vmatpush1.msra.mxu0 0.0
        %1445 = vmatprep.subr.mxu0 0.0
        %1446 = vmatpush1.msra.mxu0 0.0
        %1447 = vmatprep.subr.mxu0 0.0
        %1448 = vmatpush1.msra.mxu0 0.0
        %1449 = vmatprep.subr.mxu0 0.0
        %1450 = vmatpush1.msra.mxu0 0.0
        %1451 = vmatprep.subr.mxu0 0.0
        %1452 = vmatpush1.msra.mxu0 0.0
        %1453 = vmatprep.subr.mxu0 0.0
        %1454 = vmatpush1.msra.mxu0 0.0
        %1455 = vmatprep.subr.mxu0 0.0
        %1456 = vmatpush1.msra.mxu0 0.0
        %1457 = vmatprep.subr.mxu0 0.0
        %1458 = vmatpush1.msra.mxu0 0.0
        %1459 = vmatprep.subr.mxu0 0.0
        %1460 = vmatpush1.msra.mxu0 0.0
        %1461 = vmatprep.mubr.f32.mxu0 0.0
        %1462 = vmatmul.mubr.f32.gmra.mrb[0].mxu0 %v1395
        %v1463 = vpop.f32.mrb[0].mxu0
        %v1464 = vadd.f32 0.0, %v1463
        %v1465 = vpop.f32.mrb[0].mxu0
        %1466 = vdwg.mxu0
        %1467 = vrot.lane.b32.xlu0 %v963, 104
        %v1468 = vpop.permute.xlu0 %1467
        %1469 = vrot.lane.b32.xlu0 %v963, 72
        %v1470 = vpop.permute.xlu0 %1469
        %v1471 = vsel %vm969, %v1468, 0
        %v1473 = vsel %vm969, %v1470, 0
        %1475 = vmatprep.subr.mxu0 0.0
        %1476 = vmatpush1.xpose.msra.mxu0 %v1473
        %1477 = vmatprep.subr.mxu0 0.0
        %1478 = vmatpush1.xpose.msra.mxu0 0.0
        %1479 = vmatprep.subr.mxu0 0.0
        %1480 = vmatpush1.xpose.msra.mxu0 0.0
        %1481 = vmatprep.subr.mxu0 0.0
        %1482 = vmatpush1.xpose.msra.mxu0 0.0
        %1483 = vmatprep.subr.mxu0 0.0
        %1484 = vmatpush1.xpose.msra.mxu0 0.0
        %1485 = vmatprep.subr.mxu0 0.0
        %1486 = vmatpush1.xpose.msra.mxu0 0.0
        %1487 = vmatprep.subr.mxu0 0.0
        %1488 = vmatpush1.xpose.msra.mxu0 0.0
        %1489 = vmatprep.subr.mxu0 0.0
        %1490 = vmatpush1.xpose.msra.mxu0 0.0
        %1491 = vmatprep.subr.mxu0 0.0
        %1492 = vmatpush1.xpose.msra.mxu0 0.0
        %1493 = vmatprep.subr.mxu0 0.0
        %1494 = vmatpush1.xpose.msra.mxu0 0.0
        %1495 = vmatprep.subr.mxu0 0.0
        %1496 = vmatpush1.xpose.msra.mxu0 0.0
        %1497 = vmatprep.subr.mxu0 0.0
        %1498 = vmatpush1.xpose.msra.mxu0 0.0
        %1499 = vmatprep.subr.mxu0 0.0
        %1500 = vmatpush1.xpose.msra.mxu0 0.0
        %1501 = vmatprep.subr.mxu0 0.0
        %1502 = vmatpush1.xpose.msra.mxu0 0.0
        %1503 = vmatprep.subr.mxu0 0.0
        %1504 = vmatpush1.xpose.msra.mxu0 0.0
        %1505 = vmatprep.subr.mxu0 0.0
        %1506 = vmatpush1.xpose.msra.mxu0 0.0
        %1507 = vmatprep.subr.mxu0 0.0
        %1508 = vmatpush1.xpose.msra.mxu0 0.0
        %1509 = vmatprep.subr.mxu0 0.0
        %1510 = vmatpush1.xpose.msra.mxu0 0.0
        %1511 = vmatprep.subr.mxu0 0.0
        %1512 = vmatpush1.xpose.msra.mxu0 0.0
        %1513 = vmatprep.subr.mxu0 0.0
        %1514 = vmatpush1.xpose.msra.mxu0 0.0
        %1515 = vmatprep.subr.mxu0 0.0
        %1516 = vmatpush1.xpose.msra.mxu0 0.0
        %1517 = vmatprep.subr.mxu0 0.0
        %1518 = vmatpush1.xpose.msra.mxu0 0.0
        %1519 = vmatprep.subr.mxu0 0.0
        %1520 = vmatpush1.xpose.msra.mxu0 0.0
        %1521 = vmatprep.subr.mxu0 0.0
        %1522 = vmatpush1.xpose.msra.mxu0 0.0
        %1523 = vmatprep.subr.mxu0 0.0
        %1524 = vmatpush1.xpose.msra.mxu0 0.0
        %1525 = vmatprep.subr.mxu0 0.0
        %1526 = vmatpush1.xpose.msra.mxu0 0.0
        %1527 = vmatprep.subr.mxu0 0.0
        %1528 = vmatpush1.xpose.msra.mxu0 0.0
        %1529 = vmatprep.subr.mxu0 0.0
        %1530 = vmatpush1.xpose.msra.mxu0 0.0
        %1531 = vmatprep.subr.mxu0 0.0
        %1532 = vmatpush1.xpose.msra.mxu0 0.0
        %1533 = vmatprep.subr.mxu0 0.0
        %1534 = vmatpush1.xpose.msra.mxu0 0.0
        %1535 = vmatprep.subr.mxu0 0.0
        %1536 = vmatpush1.xpose.msra.mxu0 0.0
        %1537 = vmatprep.subr.mxu0 0.0
        %1538 = vmatpush1.xpose.msra.mxu0 0.0
        %1539 = vmatprep.mubr.f32.mxu0 0.0
        %1540 = vmatmul.mubr.f32.gmra.mrb[0].mxu0 %v1471
        %v1541 = vpop.f32.mrb[0].mxu0
        %v1542 = vadd.f32 0.0, %v1541
        %v1543 = vpop.f32.mrb[0].mxu0
        %1544 = vdwg.mxu0
        %v1545 = vmul.f32 %v1542, 0.35355338
        %v1546 = vadd.f32 %v1545, %v828
        %v1547 = vsel %vm969, %v1546, -inf
        %1548 = vmax.xlane.f32.xlu0 %v1547
        %v1549 = vpop.xlane.xlu0 %1548
        %v1550 = vsub.f32 %v1546, %v1549
        %v1551 = vmul.f32 %v1550, 1.442695
        %v1552 = vpow.pop %v1551
        %v1553 = vsel %vm969, %v1552, 0.0
        %1554 = vadd.xlane.f32.xlu0 %v1553
        %v1555 = vpop.xlane.xlu0 %1554
        %v1556 = vrcp.pop %v1555
        %v1557 = vmul.f32 %v1552, %v1556
        %1558 = vrot.lane.b32.xlu0 %v963, 40
        %v1559 = vpop.permute.xlu0 %1558
        %v1562 = vsel %vm969, %v1557, 0
        %1564 = vmatprep.subr.mxu0 0.0
        %1565 = vmatpush1.msra.mxu0 %v1559
        %1566 = vmatprep.subr.mxu0 0.0
        %1567 = vmatpush1.msra.mxu0 0.0
        %1568 = vmatprep.subr.mxu0 0.0
        %1569 = vmatpush1.msra.mxu0 0.0
        %1570 = vmatprep.subr.mxu0 0.0
        %1571 = vmatpush1.msra.mxu0 0.0
        %1572 = vmatprep.subr.mxu0 0.0
        %1573 = vmatpush1.msra.mxu0 0.0
        %1574 = vmatprep.subr.mxu0 0.0
        %1575 = vmatpush1.msra.mxu0 0.0
        %1576 = vmatprep.subr.mxu0 0.0
        %1577 = vmatpush1.msra.mxu0 0.0
        %1578 = vmatprep.subr.mxu0 0.0
        %1579 = vmatpush1.msra.mxu0 0.0
        %1580 = vmatprep.subr.mxu0 0.0
        %1581 = vmatpush1.msra.mxu0 0.0
        %1582 = vmatprep.subr.mxu0 0.0
        %1583 = vmatpush1.msra.mxu0 0.0
        %1584 = vmatprep.subr.mxu0 0.0
        %1585 = vmatpush1.msra.mxu0 0.0
        %1586 = vmatprep.subr.mxu0 0.0
        %1587 = vmatpush1.msra.mxu0 0.0
        %1588 = vmatprep.subr.mxu0 0.0
        %1589 = vmatpush1.msra.mxu0 0.0
        %1590 = vmatprep.subr.mxu0 0.0
        %1591 = vmatpush1.msra.mxu0 0.0
        %1592 = vmatprep.subr.mxu0 0.0
        %1593 = vmatpush1.msra.mxu0 0.0
        %1594 = vmatprep.subr.mxu0 0.0
        %1595 = vmatpush1.msra.mxu0 0.0
        %1596 = vmatprep.subr.mxu0 0.0
        %1597 = vmatpush1.msra.mxu0 0.0
        %1598 = vmatprep.subr.mxu0 0.0
        %1599 = vmatpush1.msra.mxu0 0.0
        %1600 = vmatprep.subr.mxu0 0.0
        %1601 = vmatpush1.msra.mxu0 0.0
        %1602 = vmatprep.subr.mxu0 0.0
        %1603 = vmatpush1.msra.mxu0 0.0
        %1604 = vmatprep.subr.mxu0 0.0
        %1605 = vmatpush1.msra.mxu0 0.0
        %1606 = vmatprep.subr.mxu0 0.0
        %1607 = vmatpush1.msra.mxu0 0.0
        %1608 = vmatprep.subr.mxu0 0.0
        %1609 = vmatpush1.msra.mxu0 0.0
        %1610 = vmatprep.subr.mxu0 0.0
        %1611 = vmatpush1.msra.mxu0 0.0
        %1612 = vmatprep.subr.mxu0 0.0
        %1613 = vmatpush1.msra.mxu0 0.0
        %1614 = vmatprep.subr.mxu0 0.0
        %1615 = vmatpush1.msra.mxu0 0.0
        %1616 = vmatprep.subr.mxu0 0.0
        %1617 = vmatpush1.msra.mxu0 0.0
        %1618 = vmatprep.subr.mxu0 0.0
        %1619 = vmatpush1.msra.mxu0 0.0
        %1620 = vmatprep.subr.mxu0 0.0
        %1621 = vmatpush1.msra.mxu0 0.0
        %1622 = vmatprep.subr.mxu0 0.0
        %1623 = vmatpush1.msra.mxu0 0.0
        %1624 = vmatprep.subr.mxu0 0.0
        %1625 = vmatpush1.msra.mxu0 0.0
        %1626 = vmatprep.subr.mxu0 0.0
        %1627 = vmatpush1.msra.mxu0 0.0
        %1628 = vmatprep.mubr.f32.mxu0 0.0
        %1629 = vmatmul.mubr.f32.gmra.mrb[0].mxu0 %v1562
        %v1630 = vpop.f32.mrb[0].mxu0
        %v1631 = vadd.f32 0.0, %v1630
        %v1632 = vpop.f32.mrb[0].mxu0
        %1633 = vdwg.mxu0
        %1635 = vrot.lane.b32.xlu0 %v1297, 8
        %v1636 = vpop.permute.xlu0 %1635
        %1639 = vrot.lane.b32.xlu0 %v1464, 16
        %v1640 = vpop.permute.xlu0 %1639
        %1643 = vrot.lane.b32.xlu0 %v1631, 24
        %v1644 = vpop.permute.xlu0 %1643
        %v1646 = vsel %vm969, %v1130, %v1636
        %vm1647 = vcmask 130048
        %v1648 = vsel %vm1647, %v1646, %v1640
        %vm1649 = vcmask 195584
        %v1650 = vsel %vm1649, %v1648, %v1644
        %v1652 = vlaneseq
        %v1653 = vshrl.u32 %v1652, 7
        %v1654 = vsub.s32 0, %v1653
        %v1655 = vrot.slane %v870, %v1654
        %v1658 = vsel %vm832, %v1650, 0
        %1660 = vmatprep.subr.mxu0 0.0
        %1661 = vmatpush1.msra.mxu0 %v866
        %1662 = vmatprep.subr.mxu0 0.0
        %1663 = vmatpush1.msra.mxu0 %v867
        %1664 = vmatprep.subr.mxu0 0.0
        %1665 = vmatpush1.msra.mxu0 %v868
        %1666 = vmatprep.subr.mxu0 0.0
        %1667 = vmatpush1.msra.mxu0 %v869
        %1668 = vmatprep.subr.mxu0 0.0
        %1669 = vmatpush1.msra.mxu0 0.0
        %1670 = vmatprep.subr.mxu0 0.0
        %1671 = vmatpush1.msra.mxu0 0.0
        %1672 = vmatprep.subr.mxu0 0.0
        %1673 = vmatpush1.msra.mxu0 0.0
        %1674 = vmatprep.subr.mxu0 0.0
        %1675 = vmatpush1.msra.mxu0 0.0
        %1676 = vmatprep.subr.mxu0 0.0
        %1677 = vmatpush1.msra.mxu0 0.0
        %1678 = vmatprep.subr.mxu0 0.0
        %1679 = vmatpush1.msra.mxu0 0.0
        %1680 = vmatprep.subr.mxu0 0.0
        %1681 = vmatpush1.msra.mxu0 0.0
        %1682 = vmatprep.subr.mxu0 0.0
        %1683 = vmatpush1.msra.mxu0 0.0
        %1684 = vmatprep.subr.mxu0 0.0
        %1685 = vmatpush1.msra.mxu0 0.0
        %1686 = vmatprep.subr.mxu0 0.0
        %1687 = vmatpush1.msra.mxu0 0.0
        %1688 = vmatprep.subr.mxu0 0.0
        %1689 = vmatpush1.msra.mxu0 0.0
        %1690 = vmatprep.subr.mxu0 0.0
        %1691 = vmatpush1.msra.mxu0 0.0
        %1692 = vmatprep.subr.mxu0 0.0
        %1693 = vmatpush1.msra.mxu0 0.0
        %1694 = vmatprep.subr.mxu0 0.0
        %1695 = vmatpush1.msra.mxu0 0.0
        %1696 = vmatprep.subr.mxu0 0.0
        %1697 = vmatpush1.msra.mxu0 0.0
        %1698 = vmatprep.subr.mxu0 0.0
        %1699 = vmatpush1.msra.mxu0 0.0
        %1700 = vmatprep.subr.mxu0 0.0
        %1701 = vmatpush1.msra.mxu0 0.0
        %1702 = vmatprep.subr.mxu0 0.0
        %1703 = vmatpush1.msra.mxu0 0.0
        %1704 = vmatprep.subr.mxu0 0.0
        %1705 = vmatpush1.msra.mxu0 0.0
        %1706 = vmatprep.subr.mxu0 0.0
        %1707 = vmatpush1.msra.mxu0 0.0
        %1708 = vmatprep.subr.mxu0 0.0
        %1709 = vmatpush1.msra.mxu0 0.0
        %1710 = vmatprep.subr.mxu0 0.0
        %1711 = vmatpush1.msra.mxu0 0.0
        %1712 = vmatprep.subr.mxu0 0.0
        %1713 = vmatpush1.msra.mxu0 0.0
        %1714 = vmatprep.subr.mxu0 0.0
        %1715 = vmatpush1.msra.mxu0 0.0
        %1716 = vmatprep.subr.mxu0 0.0
        %1717 = vmatpush1.msra.mxu0 0.0
        %1718 = vmatprep.subr.mxu0 0.0
        %1719 = vmatpush1.msra.mxu0 0.0
        %1720 = vmatprep.subr.mxu0 0.0
        %1721 = vmatpush1.msra.mxu0 0.0
        %1722 = vmatprep.subr.mxu0 0.0
        %1723 = vmatpush1.msra.mxu0 0.0
        %1724 = vmatprep.mubr.f32.mxu0 0.0
        %1725 = vmatmul.mubr.f32.gmra.mrb[0].mxu0 %v1658
        %v1726 = vpop.f32.mrb[0].mxu0
        %v1727 = vadd.f32 %v1655, %v1726
        %v1728 = vpop.f32.mrb[0].mxu0
        %1729 = vdwg.mxu0
        %v1730 = vadd.f32 %v1727, %v860
        %v1731 = vsel %vm832, %v1730, 0.0
        %1732 = vadd.xlane.f32.xlu0 %v1731
        %v1733 = vpop.xlane.xlu0 %1732
        %v1734 = vmul.f32 %v1733, %v836
        %v1735 = vsub.f32 %v1730, %v1734
        %v1736 = vmul.f32 %v1735, %v1735
        %v1737 = vsel %vm832, %v1736, 0.0
        %1738 = vadd.xlane.f32.xlu0 %v1737
        %v1739 = vpop.xlane.xlu0 %1738
        %v1740 = vmul.f32 %v1739, %v836
        %v1741 = vadd.f32 %v1740, 1e-05
        %v1742 = vrsqrt.pop %v1741
        %v1743 = vmul.f32 %v1735, %v1742
        %v1745 = vlaneseq
        %v1746 = vshrl.u32 %v1745, 7
        %v1747 = vsub.s32 0, %v1746
        %v1748 = vrot.slane %v871, %v1747
        %v1750 = vmul.f32 %v1743, %v1748
        %v1752 = vlaneseq
        %v1753 = vshrl.u32 %v1752, 7
        %v1754 = vsub.s32 0, %v1753
        %v1755 = vrot.slane %v872, %v1754
        %v1757 = vadd.f32 %v1750, %v1755
        %v1759 = vlaneseq
        %v1760 = vshrl.u32 %v1759, 7
        %v1761 = vsub.s32 0, %v1760
        %v1762 = vrot.slane %v877, %v1761
        %v1765 = vsel %vm832, %v1757, 0
        %1767 = vmatprep.subr.mxu0 0.0
        %1768 = vmatpush1.msra.mxu0 %v873
        %1769 = vmatprep.subr.mxu0 0.0
        %1770 = vmatpush1.msra.mxu0 %v874
        %1771 = vmatprep.subr.mxu0 0.0
        %1772 = vmatpush1.msra.mxu0 %v875
        %1773 = vmatprep.subr.mxu0 0.0
        %1774 = vmatpush1.msra.mxu0 %v876
        %1775 = vmatprep.subr.mxu0 0.0
        %1776 = vmatpush1.msra.mxu0 0.0
        %1777 = vmatprep.subr.mxu0 0.0
        %1778 = vmatpush1.msra.mxu0 0.0
        %1779 = vmatprep.subr.mxu0 0.0
        %1780 = vmatpush1.msra.mxu0 0.0
        %1781 = vmatprep.subr.mxu0 0.0
        %1782 = vmatpush1.msra.mxu0 0.0
        %1783 = vmatprep.subr.mxu0 0.0
        %1784 = vmatpush1.msra.mxu0 0.0
        %1785 = vmatprep.subr.mxu0 0.0
        %1786 = vmatpush1.msra.mxu0 0.0
        %1787 = vmatprep.subr.mxu0 0.0
        %1788 = vmatpush1.msra.mxu0 0.0
        %1789 = vmatprep.subr.mxu0 0.0
        %1790 = vmatpush1.msra.mxu0 0.0
        %1791 = vmatprep.subr.mxu0 0.0
        %1792 = vmatpush1.msra.mxu0 0.0
        %1793 = vmatprep.subr.mxu0 0.0
        %1794 = vmatpush1.msra.mxu0 0.0
        %1795 = vmatprep.subr.mxu0 0.0
        %1796 = vmatpush1.msra.mxu0 0.0
        %1797 = vmatprep.subr.mxu0 0.0
        %1798 = vmatpush1.msra.mxu0 0.0
        %1799 = vmatprep.subr.mxu0 0.0
        %1800 = vmatpush1.msra.mxu0 0.0
        %1801 = vmatprep.subr.mxu0 0.0
        %1802 = vmatpush1.msra.mxu0 0.0
        %1803 = vmatprep.subr.mxu0 0.0
        %1804 = vmatpush1.msra.mxu0 0.0
        %1805 = vmatprep.subr.mxu0 0.0
        %1806 = vmatpush1.msra.mxu0 0.0
        %1807 = vmatprep.subr.mxu0 0.0
        %1808 = vmatpush1.msra.mxu0 0.0
        %1809 = vmatprep.subr.mxu0 0.0
        %1810 = vmatpush1.msra.mxu0 0.0
        %1811 = vmatprep.subr.mxu0 0.0
        %1812 = vmatpush1.msra.mxu0 0.0
        %1813 = vmatprep.subr.mxu0 0.0
        %1814 = vmatpush1.msra.mxu0 0.0
        %1815 = vmatprep.subr.mxu0 0.0
        %1816 = vmatpush1.msra.mxu0 0.0
        %1817 = vmatprep.subr.mxu0 0.0
        %1818 = vmatpush1.msra.mxu0 0.0
        %1819 = vmatprep.subr.mxu0 0.0
        %1820 = vmatpush1.msra.mxu0 0.0
        %1821 = vmatprep.subr.mxu0 0.0
        %1822 = vmatpush1.msra.mxu0 0.0
        %1823 = vmatprep.subr.mxu0 0.0
        %1824 = vmatpush1.msra.mxu0 0.0
        %1825 = vmatprep.subr.mxu0 0.0
        %1826 = vmatpush1.msra.mxu0 0.0
        %1827 = vmatprep.subr.mxu0 0.0
        %1828 = vmatpush1.msra.mxu0 0.0
        %1829 = vmatprep.subr.mxu0 0.0
        %1830 = vmatpush1.msra.mxu0 0.0
        %1831 = vmatprep.mubr.f32.mxu0 0.0
        %1832 = vmatmul.mubr.f32.gmra.mrb[0].mxu0 %v1765
        %v1833 = vpop.f32.mrb[0].mxu0
        %v1834 = vadd.f32 %v1762, %v1833
        %v1835 = vpop.f32.mrb[0].mxu0
        %1836 = vdwg.mxu0
        %v1837 = vmul.f32 %v1834, 0.5
        %v1838 = vmul.f32 %v1834, 0.70710677
        %vm1839 = vcmp.ge.f32.partialorder %v1838, 0.0
        %v1840 = vsel %vm1839, 1.0, -1.0
        %v1841 = vand.u32 2147483647, %v1838
        %v1842 = vmul.f32 %v1841, 0.3275911
        %v1843 = vadd.f32 %v1842, 1.0
        %v1844 = vrcp.pop %v1843
        %v1845 = vmul.f32 1.0, %v1844
        %v1846 = vmul.f32 %v1845, 1.0614054
        %v1847 = vadd.f32 %v1846, -1.4531521
        %v1848 = vmul.f32 %v1847, %v1845
        %v1849 = vadd.f32 %v1848, 1.4214138
        %v1850 = vmul.f32 %v1849, %v1845
        %v1851 = vadd.f32 %v1850, -0.28449672
        %v1852 = vmul.f32 %v1851, %v1845
        %v1853 = vadd.f32 %v1852, 0.2548296
        %v1854 = vmul.f32 %v1853, %v1845
        %v1855 = vsub.f32 0.0, %v1841
        %v1856 = vmul.f32 %v1855, %v1841
        %v1857 = vmul.f32 %v1856, 1.442695
        %v1858 = vpow.pop %v1857
        %v1859 = vmul.f32 %v1854, %v1858
        %v1860 = vsub.f32 1.0, %v1859
        %v1861 = vmul.f32 %v1840, %v1860
        %v1862 = vadd.f32 %v1861, 1.0
        %v1863 = vmul.f32 %v1837, %v1862
        %v1865 = vlaneseq
        %v1866 = vshrl.u32 %v1865, 7
        %v1867 = vsub.s32 0, %v1866
        %v1868 = vrot.slane %v886, %v1867
        %vm1870 = vcmask 523264
        %v1872 = vsel %vm1870, %v1863, 0
        %1874 = vmatprep.subr.mxu0 0.0
        %1875 = vmatpush1.msra.mxu0 %v878
        %1876 = vmatprep.subr.mxu0 0.0
        %1877 = vmatpush1.msra.mxu0 %v879
        %1878 = vmatprep.subr.mxu0 0.0
        %1879 = vmatpush1.msra.mxu0 %v880
        %1880 = vmatprep.subr.mxu0 0.0
        %1881 = vmatpush1.msra.mxu0 %v881
        %1882 = vmatprep.subr.mxu0 0.0
        %1883 = vmatpush1.msra.mxu0 %v882
        %1884 = vmatprep.subr.mxu0 0.0
        %1885 = vmatpush1.msra.mxu0 %v883
        %1886 = vmatprep.subr.mxu0 0.0
        %1887 = vmatpush1.msra.mxu0 %v884
        %1888 = vmatprep.subr.mxu0 0.0
        %1889 = vmatpush1.msra.mxu0 %v885
        %1890 = vmatprep.subr.mxu0 0.0
        %1891 = vmatpush1.msra.mxu0 0.0
        %1892 = vmatprep.subr.mxu0 0.0
        %1893 = vmatpush1.msra.mxu0 0.0
        %1894 = vmatprep.subr.mxu0 0.0
        %1895 = vmatpush1.msra.mxu0 0.0
        %1896 = vmatprep.subr.mxu0 0.0
        %1897 = vmatpush1.msra.mxu0 0.0
        %1898 = vmatprep.subr.mxu0 0.0
        %1899 = vmatpush1.msra.mxu0 0.0
        %1900 = vmatprep.subr.mxu0 0.0
        %1901 = vmatpush1.msra.mxu0 0.0
        %1902 = vmatprep.subr.mxu0 0.0
        %1903 = vmatpush1.msra.mxu0 0.0
        %1904 = vmatprep.subr.mxu0 0.0
        %1905 = vmatpush1.msra.mxu0 0.0
        %1906 = vmatprep.subr.mxu0 0.0
        %1907 = vmatpush1.msra.mxu0 0.0
        %1908 = vmatprep.subr.mxu0 0.0
        %1909 = vmatpush1.msra.mxu0 0.0
        %1910 = vmatprep.subr.mxu0 0.0
        %1911 = vmatpush1.msra.mxu0 0.0
        %1912 = vmatprep.subr.mxu0 0.0
        %1913 = vmatpush1.msra.mxu0 0.0
        %1914 = vmatprep.subr.mxu0 0.0
        %1915 = vmatpush1.msra.mxu0 0.0
        %1916 = vmatprep.subr.mxu0 0.0
        %1917 = vmatpush1.msra.mxu0 0.0
        %1918 = vmatprep.subr.mxu0 0.0
        %1919 = vmatpush1.msra.mxu0 0.0
        %1920 = vmatprep.subr.mxu0 0.0
        %1921 = vmatpush1.msra.mxu0 0.0
        %1922 = vmatprep.subr.mxu0 0.0
        %1923 = vmatpush1.msra.mxu0 0.0
        %1924 = vmatprep.subr.mxu0 0.0
        %1925 = vmatpush1.msra.mxu0 0.0
        %1926 = vmatprep.subr.mxu0 0.0
        %1927 = vmatpush1.msra.mxu0 0.0
        %1928 = vmatprep.subr.mxu0 0.0
        %1929 = vmatpush1.msra.mxu0 0.0
        %1930 = vmatprep.subr.mxu0 0.0
        %1931 = vmatpush1.msra.mxu0 0.0
        %1932 = vmatprep.subr.mxu0 0.0
        %1933 = vmatpush1.msra.mxu0 0.0
        %1934 = vmatprep.subr.mxu0 0.0
        %1935 = vmatpush1.msra.mxu0 0.0
        %1936 = vmatprep.subr.mxu0 0.0
        %1937 = vmatpush1.msra.mxu0 0.0
        %1938 = vmatprep.mubr.f32.mxu0 0.0
        %1939 = vmatmul.mubr.f32.gmra.mrb[0].mxu0 %v1872
        %v1940 = vpop.f32.mrb[0].mxu0
        %v1941 = vadd.f32 %v1868, %v1940
        %v1942 = vpop.f32.mrb[0].mxu0
        %1943 = vdwg.mxu0
        %s1944 = scalar_lea.vmem %s5, 32
        %v1945 = vld [vmem:[%s1944] sm:$0xff]
        %v1946 = vld [vmem:[%s1944 + $0x8] sm:$0xff]
        %v1947 = vld [vmem:[%s1944 + $0x10] sm:$0xff]
        %v1948 = vld [vmem:[%s1944 + $0x18] sm:$0xff]
        %s1949 = scalar_lea.vmem %s6, 1
        %v1950 = vld [vmem:[%s1949] sm:$0x1]
        %s1951 = scalar_lea.vmem %s7, 32
        %v1952 = vld [vmem:[%s1951] sm:$0xff]
        %v1953 = vld [vmem:[%s1951 + $0x8] sm:$0xff]
        %v1954 = vld [vmem:[%s1951 + $0x10] sm:$0xff]
        %v1955 = vld [vmem:[%s1951 + $0x18] sm:$0xff]
        %s1956 = scalar_lea.vmem %s8, 1
        %v1957 = vld [vmem:[%s1956] sm:$0x1]
        %s1958 = scalar_lea.vmem %s9, 1
        %v1959 = vld [vmem:[%s1958] sm:$0x1]
        %s1960 = scalar_lea.vmem %s10, 1
        %v1961 = vld [vmem:[%s1960] sm:$0x1]
        %s1962 = scalar_lea.vmem %s11, 32
        %v1963 = vld [vmem:[%s1962] sm:$0xff]
        %v1964 = vld [vmem:[%s1962 + $0x8] sm:$0xff]
        %v1965 = vld [vmem:[%s1962 + $0x10] sm:$0xff]
        %v1966 = vld [vmem:[%s1962 + $0x18] sm:$0xff]
        %s1967 = scalar_lea.vmem %s12, 1
        %v1968 = vld [vmem:[%s1967] sm:$0x1]
        %s1969 = scalar_lea.vmem %s13, 64
        %v1970 = vld [vmem:[%s1969] sm:$0xff]
        %v1971 = vld [vmem:[%s1969 + $0x8] sm:$0xff]
        %v1972 = vld [vmem:[%s1969 + $0x10] sm:$0xff]
        %v1973 = vld [vmem:[%s1969 + $0x18] sm:$0xff]
        %v1974 = vld [vmem:[%s1969 + $0x20] sm:$0xff]
        %v1975 = vld [vmem:[%s1969 + $0x28] sm:$0xff]
        %v1976 = vld [vmem:[%s1969 + $0x30] sm:$0xff]
        %v1977 = vld [vmem:[%s1969 + $0x38] sm:$0xff]
        %s1978 = scalar_lea.vmem %s14, 1
        %v1979 = vld [vmem:[%s1978] sm:$0x1]
        %v1981 = vlaneseq
        %v1982 = vshrl.u32 %v1981, 7
        %v1983 = vsub.s32 0, %v1982
        %v1984 = vrot.slane %v1950, %v1983
        %v1987 = vsel %vm832, %v1941, 0
        %1989 = vmatprep.subr.mxu0 0.0
        %1990 = vmatpush1.msra.mxu0 %v1945
        %1991 = vmatprep.subr.mxu0 0.0
        %1992 = vmatpush1.msra.mxu0 %v1946
        %1993 = vmatprep.subr.mxu0 0.0
        %1994 = vmatpush1.msra.mxu0 %v1947
        %1995 = vmatprep.subr.mxu0 0.0
        %1996 = vmatpush1.msra.mxu0 %v1948
        %1997 = vmatprep.subr.mxu0 0.0
        %1998 = vmatpush1.msra.mxu0 0.0
        %1999 = vmatprep.subr.mxu0 0.0
        %2000 = vmatpush1.msra.mxu0 0.0
        %2001 = vmatprep.subr.mxu0 0.0
        %2002 = vmatpush1.msra.mxu0 0.0
        %2003 = vmatprep.subr.mxu0 0.0
        %2004 = vmatpush1.msra.mxu0 0.0
        %2005 = vmatprep.subr.mxu0 0.0
        %2006 = vmatpush1.msra.mxu0 0.0
        %2007 = vmatprep.subr.mxu0 0.0
        %2008 = vmatpush1.msra.mxu0 0.0
        %2009 = vmatprep.subr.mxu0 0.0
        %2010 = vmatpush1.msra.mxu0 0.0
        %2011 = vmatprep.subr.mxu0 0.0
        %2012 = vmatpush1.msra.mxu0 0.0
        %2013 = vmatprep.subr.mxu0 0.0
        %2014 = vmatpush1.msra.mxu0 0.0
        %2015 = vmatprep.subr.mxu0 0.0
        %2016 = vmatpush1.msra.mxu0 0.0
        %2017 = vmatprep.subr.mxu0 0.0
        %2018 = vmatpush1.msra.mxu0 0.0
        %2019 = vmatprep.subr.mxu0 0.0
        %2020 = vmatpush1.msra.mxu0 0.0
        %2021 = vmatprep.subr.mxu0 0.0
        %2022 = vmatpush1.msra.mxu0 0.0
        %2023 = vmatprep.subr.mxu0 0.0
        %2024 = vmatpush1.msra.mxu0 0.0
        %2025 = vmatprep.subr.mxu0 0.0
        %2026 = vmatpush1.msra.mxu0 0.0
        %2027 = vmatprep.subr.mxu0 0.0
        %2028 = vmatpush1.msra.mxu0 0.0
        %2029 = vmatprep.subr.mxu0 0.0
        %2030 = vmatpush1.msra.mxu0 0.0
        %2031 = vmatprep.subr.mxu0 0.0
        %2032 = vmatpush1.msra.mxu0 0.0
        %2033 = vmatprep.subr.mxu0 0.0
        %2034 = vmatpush1.msra.mxu0 0.0
        %2035 = vmatprep.subr.mxu0 0.0
        %2036 = vmatpush1.msra.mxu0 0.0
        %2037 = vmatprep.subr.mxu0 0.0
        %2038 = vmatpush1.msra.mxu0 0.0
        %2039 = vmatprep.subr.mxu0 0.0
        %2040 = vmatpush1.msra.mxu0 0.0
        %2041 = vmatprep.subr.mxu0 0.0
        %2042 = vmatpush1.msra.mxu0 0.0
        %2043 = vmatprep.subr.mxu0 0.0
        %2044 = vmatpush1.msra.mxu0 0.0
        %2045 = vmatprep.subr.mxu0 0.0
        %2046 = vmatpush1.msra.mxu0 0.0
        %2047 = vmatprep.subr.mxu0 0.0
        %2048 = vmatpush1.msra.mxu0 0.0
        %2049 = vmatprep.subr.mxu0 0.0
        %2050 = vmatpush1.msra.mxu0 0.0
        %2051 = vmatprep.subr.mxu0 0.0
        %2052 = vmatpush1.msra.mxu0 0.0
        %2053 = vmatprep.mubr.f32.mxu0 0.0
        %2054 = vmatmul.mubr.f32.gmra.mrb[0].mxu0 %v1987
        %v2055 = vpop.f32.mrb[0].mxu0
        %v2056 = vadd.f32 %v1984, %v2055
        %v2057 = vpop.f32.mrb[0].mxu0
        %2058 = vdwg.mxu0
        %2060 = vrot.lane.b32.xlu0 %v2056, 96
        %v2061 = vpop.permute.xlu0 %2060
        %v2062 = vsel %vm969, %v2056, 0
        %v2064 = vsel %vm969, %v2061, 0
        %2066 = vmatprep.subr.mxu0 0.0
        %2067 = vmatpush1.xpose.msra.mxu0 %v2064
        %2068 = vmatprep.subr.mxu0 0.0
        %2069 = vmatpush1.xpose.msra.mxu0 0.0
        %2070 = vmatprep.subr.mxu0 0.0
        %2071 = vmatpush1.xpose.msra.mxu0 0.0
        %2072 = vmatprep.subr.mxu0 0.0
        %2073 = vmatpush1.xpose.msra.mxu0 0.0
        %2074 = vmatprep.subr.mxu0 0.0
        %2075 = vmatpush1.xpose.msra.mxu0 0.0
        %2076 = vmatprep.subr.mxu0 0.0
        %2077 = vmatpush1.xpose.msra.mxu0 0.0
        %2078 = vmatprep.subr.mxu0 0.0
        %2079 = vmatpush1.xpose.msra.mxu0 0.0
        %2080 = vmatprep.subr.mxu0 0.0
        %2081 = vmatpush1.xpose.msra.mxu0 0.0
        %2082 = vmatprep.subr.mxu0 0.0
        %2083 = vmatpush1.xpose.msra.mxu0 0.0
        %2084 = vmatprep.subr.mxu0 0.0
        %2085 = vmatpush1.xpose.msra.mxu0 0.0
        %2086 = vmatprep.subr.mxu0 0.0
        %2087 = vmatpush1.xpose.msra.mxu0 0.0
        %2088 = vmatprep.subr.mxu0 0.0
        %2089 = vmatpush1.xpose.msra.mxu0 0.0
        %2090 = vmatprep.subr.mxu0 0.0
        %2091 = vmatpush1.xpose.msra.mxu0 0.0
        %2092 = vmatprep.subr.mxu0 0.0
        %2093 = vmatpush1.xpose.msra.mxu0 0.0
        %2094 = vmatprep.subr.mxu0 0.0
        %2095 = vmatpush1.xpose.msra.mxu0 0.0
        %2096 = vmatprep.subr.mxu0 0.0
        %2097 = vmatpush1.xpose.msra.mxu0 0.0
        %2098 = vmatprep.subr.mxu0 0.0
        %2099 = vmatpush1.xpose.msra.mxu0 0.0
        %2100 = vmatprep.subr.mxu0 0.0
        %2101 = vmatpush1.xpose.msra.mxu0 0.0
        %2102 = vmatprep.subr.mxu0 0.0
        %2103 = vmatpush1.xpose.msra.mxu0 0.0
        %2104 = vmatprep.subr.mxu0 0.0
        %2105 = vmatpush1.xpose.msra.mxu0 0.0
        %2106 = vmatprep.subr.mxu0 0.0
        %2107 = vmatpush1.xpose.msra.mxu0 0.0
        %2108 = vmatprep.subr.mxu0 0.0
        %2109 = vmatpush1.xpose.msra.mxu0 0.0
        %2110 = vmatprep.subr.mxu0 0.0
        %2111 = vmatpush1.xpose.msra.mxu0 0.0
        %2112 = vmatprep.subr.mxu0 0.0
        %2113 = vmatpush1.xpose.msra.mxu0 0.0
        %2114 = vmatprep.subr.mxu0 0.0
        %2115 = vmatpush1.xpose.msra.mxu0 0.0
        %2116 = vmatprep.subr.mxu0 0.0
        %2117 = vmatpush1.xpose.msra.mxu0 0.0
        %2118 = vmatprep.subr.mxu0 0.0
        %2119 = vmatpush1.xpose.msra.mxu0 0.0
        %2120 = vmatprep.subr.mxu0 0.0
        %2121 = vmatpush1.xpose.msra.mxu0 0.0
        %2122 = vmatprep.subr.mxu0 0.0
        %2123 = vmatpush1.xpose.msra.mxu0 0.0
        %2124 = vmatprep.subr.mxu0 0.0
        %2125 = vmatpush1.xpose.msra.mxu0 0.0
        %2126 = vmatprep.subr.mxu0 0.0
        %2127 = vmatpush1.xpose.msra.mxu0 0.0
        %2128 = vmatprep.subr.mxu0 0.0
        %2129 = vmatpush1.xpose.msra.mxu0 0.0
        %2130 = vmatprep.mubr.f32.mxu0 0.0
        %2131 = vmatmul.mubr.f32.gmra.mrb[0].mxu0 %v2062
        %v2132 = vpop.f32.mrb[0].mxu0
        %v2133 = vadd.f32 0.0, %v2132
        %v2134 = vpop.f32.mrb[0].mxu0
        %2135 = vdwg.mxu0
        %v2136 = vmul.f32 %v2133, 0.35355338
        %v2137 = vadd.f32 %v2136, %v828
        %v2138 = vsel %vm969, %v2137, -inf
        %2139 = vmax.xlane.f32.xlu0 %v2138
        %v2140 = vpop.xlane.xlu0 %2139
        %v2141 = vsub.f32 %v2137, %v2140
        %v2142 = vmul.f32 %v2141, 1.442695
        %v2143 = vpow.pop %v2142
        %v2144 = vsel %vm969, %v2143, 0.0
        %2145 = vadd.xlane.f32.xlu0 %v2144
        %v2146 = vpop.xlane.xlu0 %2145
        %v2147 = vrcp.pop %v2146
        %v2148 = vmul.f32 %v2143, %v2147
        %2149 = vrot.lane.b32.xlu0 %v2056, 64
        %v2150 = vpop.permute.xlu0 %2149
        %v2153 = vsel %vm969, %v2148, 0
        %2155 = vmatprep.subr.mxu0 0.0
        %2156 = vmatpush1.msra.mxu0 %v2150
        %2157 = vmatprep.subr.mxu0 0.0
        %2158 = vmatpush1.msra.mxu0 0.0
        %2159 = vmatprep.subr.mxu0 0.0
        %2160 = vmatpush1.msra.mxu0 0.0
        %2161 = vmatprep.subr.mxu0 0.0
        %2162 = vmatpush1.msra.mxu0 0.0
        %2163 = vmatprep.subr.mxu0 0.0
        %2164 = vmatpush1.msra.mxu0 0.0
        %2165 = vmatprep.subr.mxu0 0.0
        %2166 = vmatpush1.msra.mxu0 0.0
        %2167 = vmatprep.subr.mxu0 0.0
        %2168 = vmatpush1.msra.mxu0 0.0
        %2169 = vmatprep.subr.mxu0 0.0
        %2170 = vmatpush1.msra.mxu0 0.0
        %2171 = vmatprep.subr.mxu0 0.0
        %2172 = vmatpush1.msra.mxu0 0.0
        %2173 = vmatprep.subr.mxu0 0.0
        %2174 = vmatpush1.msra.mxu0 0.0
        %2175 = vmatprep.subr.mxu0 0.0
        %2176 = vmatpush1.msra.mxu0 0.0
        %2177 = vmatprep.subr.mxu0 0.0
        %2178 = vmatpush1.msra.mxu0 0.0
        %2179 = vmatprep.subr.mxu0 0.0
        %2180 = vmatpush1.msra.mxu0 0.0
        %2181 = vmatprep.subr.mxu0 0.0
        %2182 = vmatpush1.msra.mxu0 0.0
        %2183 = vmatprep.subr.mxu0 0.0
        %2184 = vmatpush1.msra.mxu0 0.0
        %2185 = vmatprep.subr.mxu0 0.0
        %2186 = vmatpush1.msra.mxu0 0.0
        %2187 = vmatprep.subr.mxu0 0.0
        %2188 = vmatpush1.msra.mxu0 0.0
        %2189 = vmatprep.subr.mxu0 0.0
        %2190 = vmatpush1.msra.mxu0 0.0
        %2191 = vmatprep.subr.mxu0 0.0
        %2192 = vmatpush1.msra.mxu0 0.0
        %2193 = vmatprep.subr.mxu0 0.0
        %2194 = vmatpush1.msra.mxu0 0.0
        %2195 = vmatprep.subr.mxu0 0.0
        %2196 = vmatpush1.msra.mxu0 0.0
        %2197 = vmatprep.subr.mxu0 0.0
        %2198 = vmatpush1.msra.mxu0 0.0
        %2199 = vmatprep.subr.mxu0 0.0
        %2200 = vmatpush1.msra.mxu0 0.0
        %2201 = vmatprep.subr.mxu0 0.0
        %2202 = vmatpush1.msra.mxu0 0.0
        %2203 = vmatprep.subr.mxu0 0.0
        %2204 = vmatpush1.msra.mxu0 0.0
        %2205 = vmatprep.subr.mxu0 0.0
        %2206 = vmatpush1.msra.mxu0 0.0
        %2207 = vmatprep.subr.mxu0 0.0
        %2208 = vmatpush1.msra.mxu0 0.0
        %2209 = vmatprep.subr.mxu0 0.0
        %2210 = vmatpush1.msra.mxu0 0.0
        %2211 = vmatprep.subr.mxu0 0.0
        %2212 = vmatpush1.msra.mxu0 0.0
        %2213 = vmatprep.subr.mxu0 0.0
        %2214 = vmatpush1.msra.mxu0 0.0
        %2215 = vmatprep.subr.mxu0 0.0
        %2216 = vmatpush1.msra.mxu0 0.0
        %2217 = vmatprep.subr.mxu0 0.0
        %2218 = vmatpush1.msra.mxu0 0.0
        %2219 = vmatprep.mubr.f32.mxu0 0.0
        %2220 = vmatmul.mubr.f32.gmra.mrb[0].mxu0 %v2153
        %v2221 = vpop.f32.mrb[0].mxu0
        %v2222 = vadd.f32 0.0, %v2221
        %v2223 = vpop.f32.mrb[0].mxu0
        %2224 = vdwg.mxu0
        %2225 = vrot.lane.b32.xlu0 %v2056, 120
        %v2226 = vpop.permute.xlu0 %2225
        %2227 = vrot.lane.b32.xlu0 %v2056, 88
        %v2228 = vpop.permute.xlu0 %2227
        %v2229 = vsel %vm969, %v2226, 0
        %v2231 = vsel %vm969, %v2228, 0
        %2233 = vmatprep.subr.mxu0 0.0
        %2234 = vmatpush1.xpose.msra.mxu0 %v2231
        %2235 = vmatprep.subr.mxu0 0.0
        %2236 = vmatpush1.xpose.msra.mxu0 0.0
        %2237 = vmatprep.subr.mxu0 0.0
        %2238 = vmatpush1.xpose.msra.mxu0 0.0
        %2239 = vmatprep.subr.mxu0 0.0
        %2240 = vmatpush1.xpose.msra.mxu0 0.0
        %2241 = vmatprep.subr.mxu0 0.0
        %2242 = vmatpush1.xpose.msra.mxu0 0.0
        %2243 = vmatprep.subr.mxu0 0.0
        %2244 = vmatpush1.xpose.msra.mxu0 0.0
        %2245 = vmatprep.subr.mxu0 0.0
        %2246 = vmatpush1.xpose.msra.mxu0 0.0
        %2247 = vmatprep.subr.mxu0 0.0
        %2248 = vmatpush1.xpose.msra.mxu0 0.0
        %2249 = vmatprep.subr.mxu0 0.0
        %2250 = vmatpush1.xpose.msra.mxu0 0.0
        %2251 = vmatprep.subr.mxu0 0.0
        %2252 = vmatpush1.xpose.msra.mxu0 0.0
        %2253 = vmatprep.subr.mxu0 0.0
        %2254 = vmatpush1.xpose.msra.mxu0 0.0
        %2255 = vmatprep.subr.mxu0 0.0
        %2256 = vmatpush1.xpose.msra.mxu0 0.0
        %2257 = vmatprep.subr.mxu0 0.0
        %2258 = vmatpush1.xpose.msra.mxu0 0.0
        %2259 = vmatprep.subr.mxu0 0.0
        %2260 = vmatpush1.xpose.msra.mxu0 0.0
        %2261 = vmatprep.subr.mxu0 0.0
        %2262 = vmatpush1.xpose.msra.mxu0 0.0
        %2263 = vmatprep.subr.mxu0 0.0
        %2264 = vmatpush1.xpose.msra.mxu0 0.0
        %2265 = vmatprep.subr.mxu0 0.0
        %2266 = vmatpush1.xpose.msra.mxu0 0.0
        %2267 = vmatprep.subr.mxu0 0.0
        %2268 = vmatpush1.xpose.msra.mxu0 0.0
        %2269 = vmatprep.subr.mxu0 0.0
        %2270 = vmatpush1.xpose.msra.mxu0 0.0
        %2271 = vmatprep.subr.mxu0 0.0
        %2272 = vmatpush1.xpose.msra.mxu0 0.0
        %2273 = vmatprep.subr.mxu0 0.0
        %2274 = vmatpush1.xpose.msra.mxu0 0.0
        %2275 = vmatprep.subr.mxu0 0.0
        %2276 = vmatpush1.xpose.msra.mxu0 0.0
        %2277 = vmatprep.subr.mxu0 0.0
        %2278 = vmatpush1.xpose.msra.mxu0 0.0
        %2279 = vmatprep.subr.mxu0 0.0
        %2280 = vmatpush1.xpose.msra.mxu0 0.0
        %2281 = vmatprep.subr.mxu0 0.0
        %2282 = vmatpush1.xpose.msra.mxu0 0.0
        %2283 = vmatprep.subr.mxu0 0.0
        %2284 = vmatpush1.xpose.msra.mxu0 0.0
        %2285 = vmatprep.subr.mxu0 0.0
        %2286 = vmatpush1.xpose.msra.mxu0 0.0
        %2287 = vmatprep.subr.mxu0 0.0
        %2288 = vmatpush1.xpose.msra.mxu0 0.0
        %2289 = vmatprep.subr.mxu0 0.0
        %2290 = vmatpush1.xpose.msra.mxu0 0.0
        %2291 = vmatprep.subr.mxu0 0.0
        %2292 = vmatpush1.xpose.msra.mxu0 0.0
        %2293 = vmatprep.subr.mxu0 0.0
        %2294 = vmatpush1.xpose.msra.mxu0 0.0
        %2295 = vmatprep.subr.mxu0 0.0
        %2296 = vmatpush1.xpose.msra.mxu0 0.0
        %2297 = vmatprep.mubr.f32.mxu0 0.0
        %2298 = vmatmul.mubr.f32.gmra.mrb[0].mxu0 %v2229
        %v2299 = vpop.f32.mrb[0].mxu0
        %v2300 = vadd.f32 0.0, %v2299
        %v2301 = vpop.f32.mrb[0].mxu0
        %2302 = vdwg.mxu0
        %v2303 = vmul.f32 %v2300, 0.35355338
        %v2304 = vadd.f32 %v2303, %v828
        %v2305 = vsel %vm969, %v2304, -inf
        %2306 = vmax.xlane.f32.xlu0 %v2305
        %v2307 = vpop.xlane.xlu0 %2306
        %v2308 = vsub.f32 %v2304, %v2307
        %v2309 = vmul.f32 %v2308, 1.442695
        %v2310 = vpow.pop %v2309
        %v2311 = vsel %vm969, %v2310, 0.0
        %2312 = vadd.xlane.f32.xlu0 %v2311
        %v2313 = vpop.xlane.xlu0 %2312
        %v2314 = vrcp.pop %v2313
        %v2315 = vmul.f32 %v2310, %v2314
        %2316 = vrot.lane.b32.xlu0 %v2056, 56
        %v2317 = vpop.permute.xlu0 %2316
        %v2320 = vsel %vm969, %v2315, 0
        %2322 = vmatprep.subr.mxu0 0.0
        %2323 = vmatpush1.msra.mxu0 %v2317
        %2324 = vmatprep.subr.mxu0 0.0
        %2325 = vmatpush1.msra.mxu0 0.0
        %2326 = vmatprep.subr.mxu0 0.0
        %2327 = vmatpush1.msra.mxu0 0.0
        %2328 = vmatprep.subr.mxu0 0.0
        %2329 = vmatpush1.msra.mxu0 0.0
        %2330 = vmatprep.subr.mxu0 0.0
        %2331 = vmatpush1.msra.mxu0 0.0
        %2332 = vmatprep.subr.mxu0 0.0
        %2333 = vmatpush1.msra.mxu0 0.0
        %2334 = vmatprep.subr.mxu0 0.0
        %2335 = vmatpush1.msra.mxu0 0.0
        %2336 = vmatprep.subr.mxu0 0.0
        %2337 = vmatpush1.msra.mxu0 0.0
        %2338 = vmatprep.subr.mxu0 0.0
        %2339 = vmatpush1.msra.mxu0 0.0
        %2340 = vmatprep.subr.mxu0 0.0
        %2341 = vmatpush1.msra.mxu0 0.0
        %2342 = vmatprep.subr.mxu0 0.0
        %2343 = vmatpush1.msra.mxu0 0.0
        %2344 = vmatprep.subr.mxu0 0.0
        %2345 = vmatpush1.msra.mxu0 0.0
        %2346 = vmatprep.subr.mxu0 0.0
        %2347 = vmatpush1.msra.mxu0 0.0
        %2348 = vmatprep.subr.mxu0 0.0
        %2349 = vmatpush1.msra.mxu0 0.0
        %2350 = vmatprep.subr.mxu0 0.0
        %2351 = vmatpush1.msra.mxu0 0.0
        %2352 = vmatprep.subr.mxu0 0.0
        %2353 = vmatpush1.msra.mxu0 0.0
        %2354 = vmatprep.subr.mxu0 0.0
        %2355 = vmatpush1.msra.mxu0 0.0
        %2356 = vmatprep.subr.mxu0 0.0
        %2357 = vmatpush1.msra.mxu0 0.0
        %2358 = vmatprep.subr.mxu0 0.0
        %2359 = vmatpush1.msra.mxu0 0.0
        %2360 = vmatprep.subr.mxu0 0.0
        %2361 = vmatpush1.msra.mxu0 0.0
        %2362 = vmatprep.subr.mxu0 0.0
        %2363 = vmatpush1.msra.mxu0 0.0
        %2364 = vmatprep.subr.mxu0 0.0
        %2365 = vmatpush1.msra.mxu0 0.0
        %2366 = vmatprep.subr.mxu0 0.0
        %2367 = vmatpush1.msra.mxu0 0.0
        %2368 = vmatprep.subr.mxu0 0.0
        %2369 = vmatpush1.msra.mxu0 0.0
        %2370 = vmatprep.subr.mxu0 0.0
        %2371 = vmatpush1.msra.mxu0 0.0
        %2372 = vmatprep.subr.mxu0 0.0
        %2373 = vmatpush1.msra.mxu0 0.0
        %2374 = vmatprep.subr.mxu0 0.0
        %2375 = vmatpush1.msra.mxu0 0.0
        %2376 = vmatprep.subr.mxu0 0.0
        %2377 = vmatpush1.msra.mxu0 0.0
        %2378 = vmatprep.subr.mxu0 0.0
        %2379 = vmatpush1.msra.mxu0 0.0
        %2380 = vmatprep.subr.mxu0 0.0
        %2381 = vmatpush1.msra.mxu0 0.0
        %2382 = vmatprep.subr.mxu0 0.0
        %2383 = vmatpush1.msra.mxu0 0.0
        %2384 = vmatprep.subr.mxu0 0.0
        %2385 = vmatpush1.msra.mxu0 0.0
        %2386 = vmatprep.mubr.f32.mxu0 0.0
        %2387 = vmatmul.mubr.f32.gmra.mrb[0].mxu0 %v2320
        %v2388 = vpop.f32.mrb[0].mxu0
        %v2389 = vadd.f32 0.0, %v2388
        %v2390 = vpop.f32.mrb[0].mxu0
        %2391 = vdwg.mxu0
        %2392 = vrot.lane.b32.xlu0 %v2056, 112
        %v2393 = vpop.permute.xlu0 %2392
        %2394 = vrot.lane.b32.xlu0 %v2056, 80
        %v2395 = vpop.permute.xlu0 %2394
        %v2396 = vsel %vm969, %v2393, 0
        %v2398 = vsel %vm969, %v2395, 0
        %2400 = vmatprep.subr.mxu0 0.0
        %2401 = vmatpush1.xpose.msra.mxu0 %v2398
        %2402 = vmatprep.subr.mxu0 0.0
        %2403 = vmatpush1.xpose.msra.mxu0 0.0
        %2404 = vmatprep.subr.mxu0 0.0
        %2405 = vmatpush1.xpose.msra.mxu0 0.0
        %2406 = vmatprep.subr.mxu0 0.0
        %2407 = vmatpush1.xpose.msra.mxu0 0.0
        %2408 = vmatprep.subr.mxu0 0.0
        %2409 = vmatpush1.xpose.msra.mxu0 0.0
        %2410 = vmatprep.subr.mxu0 0.0
        %2411 = vmatpush1.xpose.msra.mxu0 0.0
        %2412 = vmatprep.subr.mxu0 0.0
        %2413 = vmatpush1.xpose.msra.mxu0 0.0
        %2414 = vmatprep.subr.mxu0 0.0
        %2415 = vmatpush1.xpose.msra.mxu0 0.0
        %2416 = vmatprep.subr.mxu0 0.0
        %2417 = vmatpush1.xpose.msra.mxu0 0.0
        %2418 = vmatprep.subr.mxu0 0.0
        %2419 = vmatpush1.xpose.msra.mxu0 0.0
        %2420 = vmatprep.subr.mxu0 0.0
        %2421 = vmatpush1.xpose.msra.mxu0 0.0
        %2422 = vmatprep.subr.mxu0 0.0
        %2423 = vmatpush1.xpose.msra.mxu0 0.0
        %2424 = vmatprep.subr.mxu0 0.0
        %2425 = vmatpush1.xpose.msra.mxu0 0.0
        %2426 = vmatprep.subr.mxu0 0.0
        %2427 = vmatpush1.xpose.msra.mxu0 0.0
        %2428 = vmatprep.subr.mxu0 0.0
        %2429 = vmatpush1.xpose.msra.mxu0 0.0
        %2430 = vmatprep.subr.mxu0 0.0
        %2431 = vmatpush1.xpose.msra.mxu0 0.0
        %2432 = vmatprep.subr.mxu0 0.0
        %2433 = vmatpush1.xpose.msra.mxu0 0.0
        %2434 = vmatprep.subr.mxu0 0.0
        %2435 = vmatpush1.xpose.msra.mxu0 0.0
        %2436 = vmatprep.subr.mxu0 0.0
        %2437 = vmatpush1.xpose.msra.mxu0 0.0
        %2438 = vmatprep.subr.mxu0 0.0
        %2439 = vmatpush1.xpose.msra.mxu0 0.0
        %2440 = vmatprep.subr.mxu0 0.0
        %2441 = vmatpush1.xpose.msra.mxu0 0.0
        %2442 = vmatprep.subr.mxu0 0.0
        %2443 = vmatpush1.xpose.msra.mxu0 0.0
        %2444 = vmatprep.subr.mxu0 0.0
        %2445 = vmatpush1.xpose.msra.mxu0 0.0
        %2446 = vmatprep.subr.mxu0 0.0
        %2447 = vmatpush1.xpose.msra.mxu0 0.0
        %2448 = vmatprep.subr.mxu0 0.0
        %2449 = vmatpush1.xpose.msra.mxu0 0.0
        %2450 = vmatprep.subr.mxu0 0.0
        %2451 = vmatpush1.xpose.msra.mxu0 0.0
        %2452 = vmatprep.subr.mxu0 0.0
        %2453 = vmatpush1.xpose.msra.mxu0 0.0
        %2454 = vmatprep.subr.mxu0 0.0
        %2455 = vmatpush1.xpose.msra.mxu0 0.0
        %2456 = vmatprep.subr.mxu0 0.0
        %2457 = vmatpush1.xpose.msra.mxu0 0.0
        %2458 = vmatprep.subr.mxu0 0.0
        %2459 = vmatpush1.xpose.msra.mxu0 0.0
        %2460 = vmatprep.subr.mxu0 0.0
        %2461 = vmatpush1.xpose.msra.mxu0 0.0
        %2462 = vmatprep.subr.mxu0 0.0
        %2463 = vmatpush1.xpose.msra.mxu0 0.0
        %2464 = vmatprep.mubr.f32.mxu0 0.0
        %2465 = vmatmul.mubr.f32.gmra.mrb[0].mxu0 %v2396
        %v2466 = vpop.f32.mrb[0].mxu0
        %v2467 = vadd.f32 0.0, %v2466
        %v2468 = vpop.f32.mrb[0].mxu0
        %2469 = vdwg.mxu0
        %v2470 = vmul.f32 %v2467, 0.35355338
        %v2471 = vadd.f32 %v2470, %v828
        %v2472 = vsel %vm969, %v2471, -inf
        %2473 = vmax.xlane.f32.xlu0 %v2472
        %v2474 = vpop.xlane.xlu0 %2473
        %v2475 = vsub.f32 %v2471, %v2474
        %v2476 = vmul.f32 %v2475, 1.442695
        %v2477 = vpow.pop %v2476
        %v2478 = vsel %vm969, %v2477, 0.0
        %2479 = vadd.xlane.f32.xlu0 %v2478
        %v2480 = vpop.xlane.xlu0 %2479
        %v2481 = vrcp.pop %v2480
        %v2482 = vmul.f32 %v2477, %v2481
        %2483 = vrot.lane.b32.xlu0 %v2056, 48
        %v2484 = vpop.permute.xlu0 %2483
        %v2487 = vsel %vm969, %v2482, 0
        %2489 = vmatprep.subr.mxu0 0.0
        %2490 = vmatpush1.msra.mxu0 %v2484
        %2491 = vmatprep.subr.mxu0 0.0
        %2492 = vmatpush1.msra.mxu0 0.0
        %2493 = vmatprep.subr.mxu0 0.0
        %2494 = vmatpush1.msra.mxu0 0.0
        %2495 = vmatprep.subr.mxu0 0.0
        %2496 = vmatpush1.msra.mxu0 0.0
        %2497 = vmatprep.subr.mxu0 0.0
        %2498 = vmatpush1.msra.mxu0 0.0
        %2499 = vmatprep.subr.mxu0 0.0
        %2500 = vmatpush1.msra.mxu0 0.0
        %2501 = vmatprep.subr.mxu0 0.0
        %2502 = vmatpush1.msra.mxu0 0.0
        %2503 = vmatprep.subr.mxu0 0.0
        %2504 = vmatpush1.msra.mxu0 0.0
        %2505 = vmatprep.subr.mxu0 0.0
        %2506 = vmatpush1.msra.mxu0 0.0
        %2507 = vmatprep.subr.mxu0 0.0
        %2508 = vmatpush1.msra.mxu0 0.0
        %2509 = vmatprep.subr.mxu0 0.0
        %2510 = vmatpush1.msra.mxu0 0.0
        %2511 = vmatprep.subr.mxu0 0.0
        %2512 = vmatpush1.msra.mxu0 0.0
        %2513 = vmatprep.subr.mxu0 0.0
        %2514 = vmatpush1.msra.mxu0 0.0
        %2515 = vmatprep.subr.mxu0 0.0
        %2516 = vmatpush1.msra.mxu0 0.0
        %2517 = vmatprep.subr.mxu0 0.0
        %2518 = vmatpush1.msra.mxu0 0.0
        %2519 = vmatprep.subr.mxu0 0.0
        %2520 = vmatpush1.msra.mxu0 0.0
        %2521 = vmatprep.subr.mxu0 0.0
        %2522 = vmatpush1.msra.mxu0 0.0
        %2523 = vmatprep.subr.mxu0 0.0
        %2524 = vmatpush1.msra.mxu0 0.0
        %2525 = vmatprep.subr.mxu0 0.0
        %2526 = vmatpush1.msra.mxu0 0.0
        %2527 = vmatprep.subr.mxu0 0.0
        %2528 = vmatpush1.msra.mxu0 0.0
        %2529 = vmatprep.subr.mxu0 0.0
        %2530 = vmatpush1.msra.mxu0 0.0
        %2531 = vmatprep.subr.mxu0 0.0
        %2532 = vmatpush1.msra.mxu0 0.0
        %2533 = vmatprep.subr.mxu0 0.0
        %2534 = vmatpush1.msra.mxu0 0.0
        %2535 = vmatprep.subr.mxu0 0.0
        %2536 = vmatpush1.msra.mxu0 0.0
        %2537 = vmatprep.subr.mxu0 0.0
        %2538 = vmatpush1.msra.mxu0 0.0
        %2539 = vmatprep.subr.mxu0 0.0
        %2540 = vmatpush1.msra.mxu0 0.0
        %2541 = vmatprep.subr.mxu0 0.0
        %2542 = vmatpush1.msra.mxu0 0.0
        %2543 = vmatprep.subr.mxu0 0.0
        %2544 = vmatpush1.msra.mxu0 0.0
        %2545 = vmatprep.subr.mxu0 0.0
        %2546 = vmatpush1.msra.mxu0 0.0
        %2547 = vmatprep.subr.mxu0 0.0
        %2548 = vmatpush1.msra.mxu0 0.0
        %2549 = vmatprep.subr.mxu0 0.0
        %2550 = vmatpush1.msra.mxu0 0.0
        %2551 = vmatprep.subr.mxu0 0.0
        %2552 = vmatpush1.msra.mxu0 0.0
        %2553 = vmatprep.mubr.f32.mxu0 0.0
        %2554 = vmatmul.mubr.f32.gmra.mrb[0].mxu0 %v2487
        %v2555 = vpop.f32.mrb[0].mxu0
        %v2556 = vadd.f32 0.0, %v2555
        %v2557 = vpop.f32.mrb[0].mxu0
        %2558 = vdwg.mxu0
        %2559 = vrot.lane.b32.xlu0 %v2056, 104
        %v2560 = vpop.permute.xlu0 %2559
        %2561 = vrot.lane.b32.xlu0 %v2056, 72
        %v2562 = vpop.permute.xlu0 %2561
        %v2563 = vsel %vm969, %v2560, 0
        %v2565 = vsel %vm969, %v2562, 0
        %2567 = vmatprep.subr.mxu0 0.0
        %2568 = vmatpush1.xpose.msra.mxu0 %v2565
        %2569 = vmatprep.subr.mxu0 0.0
        %2570 = vmatpush1.xpose.msra.mxu0 0.0
        %2571 = vmatprep.subr.mxu0 0.0
        %2572 = vmatpush1.xpose.msra.mxu0 0.0
        %2573 = vmatprep.subr.mxu0 0.0
        %2574 = vmatpush1.xpose.msra.mxu0 0.0
        %2575 = vmatprep.subr.mxu0 0.0
        %2576 = vmatpush1.xpose.msra.mxu0 0.0
        %2577 = vmatprep.subr.mxu0 0.0
        %2578 = vmatpush1.xpose.msra.mxu0 0.0
        %2579 = vmatprep.subr.mxu0 0.0
        %2580 = vmatpush1.xpose.msra.mxu0 0.0
        %2581 = vmatprep.subr.mxu0 0.0
        %2582 = vmatpush1.xpose.msra.mxu0 0.0
        %2583 = vmatprep.subr.mxu0 0.0
        %2584 = vmatpush1.xpose.msra.mxu0 0.0
        %2585 = vmatprep.subr.mxu0 0.0
        %2586 = vmatpush1.xpose.msra.mxu0 0.0
        %2587 = vmatprep.subr.mxu0 0.0
        %2588 = vmatpush1.xpose.msra.mxu0 0.0
        %2589 = vmatprep.subr.mxu0 0.0
        %2590 = vmatpush1.xpose.msra.mxu0 0.0
        %2591 = vmatprep.subr.mxu0 0.0
        %2592 = vmatpush1.xpose.msra.mxu0 0.0
        %2593 = vmatprep.subr.mxu0 0.0
        %2594 = vmatpush1.xpose.msra.mxu0 0.0
        %2595 = vmatprep.subr.mxu0 0.0
        %2596 = vmatpush1.xpose.msra.mxu0 0.0
        %2597 = vmatprep.subr.mxu0 0.0
        %2598 = vmatpush1.xpose.msra.mxu0 0.0
        %2599 = vmatprep.subr.mxu0 0.0
        %2600 = vmatpush1.xpose.msra.mxu0 0.0
        %2601 = vmatprep.subr.mxu0 0.0
        %2602 = vmatpush1.xpose.msra.mxu0 0.0
        %2603 = vmatprep.subr.mxu0 0.0
        %2604 = vmatpush1.xpose.msra.mxu0 0.0
        %2605 = vmatprep.subr.mxu0 0.0
        %2606 = vmatpush1.xpose.msra.mxu0 0.0
        %2607 = vmatprep.subr.mxu0 0.0
        %2608 = vmatpush1.xpose.msra.mxu0 0.0
        %2609 = vmatprep.subr.mxu0 0.0
        %2610 = vmatpush1.xpose.msra.mxu0 0.0
        %2611 = vmatprep.subr.mxu0 0.0
        %2612 = vmatpush1.xpose.msra.mxu0 0.0
        %2613 = vmatprep.subr.mxu0 0.0
        %2614 = vmatpush1.xpose.msra.mxu0 0.0
        %2615 = vmatprep.subr.mxu0 0.0
        %2616 = vmatpush1.xpose.msra.mxu0 0.0
        %2617 = vmatprep.subr.mxu0 0.0
        %2618 = vmatpush1.xpose.msra.mxu0 0.0
        %2619 = vmatprep.subr.mxu0 0.0
        %2620 = vmatpush1.xpose.msra.mxu0 0.0
        %2621 = vmatprep.subr.mxu0 0.0
        %2622 = vmatpush1.xpose.msra.mxu0 0.0
        %2623 = vmatprep.subr.mxu0 0.0
        %2624 = vmatpush1.xpose.msra.mxu0 0.0
        %2625 = vmatprep.subr.mxu0 0.0
        %2626 = vmatpush1.xpose.msra.mxu0 0.0
        %2627 = vmatprep.subr.mxu0 0.0
        %2628 = vmatpush1.xpose.msra.mxu0 0.0
        %2629 = vmatprep.subr.mxu0 0.0
        %2630 = vmatpush1.xpose.msra.mxu0 0.0
        %2631 = vmatprep.mubr.f32.mxu0 0.0
        %2632 = vmatmul.mubr.f32.gmra.mrb[0].mxu0 %v2563
        %v2633 = vpop.f32.mrb[0].mxu0
        %v2634 = vadd.f32 0.0, %v2633
        %v2635 = vpop.f32.mrb[0].mxu0
        %2636 = vdwg.mxu0
        %v2637 = vmul.f32 %v2634, 0.35355338
        %v2638 = vadd.f32 %v2637, %v828
        %v2639 = vsel %vm969, %v2638, -inf
        %2640 = vmax.xlane.f32.xlu0 %v2639
        %v2641 = vpop.xlane.xlu0 %2640
        %v2642 = vsub.f32 %v2638, %v2641
        %v2643 = vmul.f32 %v2642, 1.442695
        %v2644 = vpow.pop %v2643
        %v2645 = vsel %vm969, %v2644, 0.0
        %2646 = vadd.xlane.f32.xlu0 %v2645
        %v2647 = vpop.xlane.xlu0 %2646
        %v2648 = vrcp.pop %v2647
        %v2649 = vmul.f32 %v2644, %v2648
        %2650 = vrot.lane.b32.xlu0 %v2056, 40
        %v2651 = vpop.permute.xlu0 %2650
        %v2654 = vsel %vm969, %v2649, 0
        %2656 = vmatprep.subr.mxu0 0.0
        %2657 = vmatpush1.msra.mxu0 %v2651
        %2658 = vmatprep.subr.mxu0 0.0
        %2659 = vmatpush1.msra.mxu0 0.0
        %2660 = vmatprep.subr.mxu0 0.0
        %2661 = vmatpush1.msra.mxu0 0.0
        %2662 = vmatprep.subr.mxu0 0.0
        %2663 = vmatpush1.msra.mxu0 0.0
        %2664 = vmatprep.subr.mxu0 0.0
        %2665 = vmatpush1.msra.mxu0 0.0
        %2666 = vmatprep.subr.mxu0 0.0
        %2667 = vmatpush1.msra.mxu0 0.0
        %2668 = vmatprep.subr.mxu0 0.0
        %2669 = vmatpush1.msra.mxu0 0.0
        %2670 = vmatprep.subr.mxu0 0.0
        %2671 = vmatpush1.msra.mxu0 0.0
        %2672 = vmatprep.subr.mxu0 0.0
        %2673 = vmatpush1.msra.mxu0 0.0
        %2674 = vmatprep.subr.mxu0 0.0
        %2675 = vmatpush1.msra.mxu0 0.0
        %2676 = vmatprep.subr.mxu0 0.0
        %2677 = vmatpush1.msra.mxu0 0.0
        %2678 = vmatprep.subr.mxu0 0.0
        %2679 = vmatpush1.msra.mxu0 0.0
        %2680 = vmatprep.subr.mxu0 0.0
        %2681 = vmatpush1.msra.mxu0 0.0
        %2682 = vmatprep.subr.mxu0 0.0
        %2683 = vmatpush1.msra.mxu0 0.0
        %2684 = vmatprep.subr.mxu0 0.0
        %2685 = vmatpush1.msra.mxu0 0.0
        %2686 = vmatprep.subr.mxu0 0.0
        %2687 = vmatpush1.msra.mxu0 0.0
        %2688 = vmatprep.subr.mxu0 0.0
        %2689 = vmatpush1.msra.mxu0 0.0
        %2690 = vmatprep.subr.mxu0 0.0
        %2691 = vmatpush1.msra.mxu0 0.0
        %2692 = vmatprep.subr.mxu0 0.0
        %2693 = vmatpush1.msra.mxu0 0.0
        %2694 = vmatprep.subr.mxu0 0.0
        %2695 = vmatpush1.msra.mxu0 0.0
        %2696 = vmatprep.subr.mxu0 0.0
        %2697 = vmatpush1.msra.mxu0 0.0
        %2698 = vmatprep.subr.mxu0 0.0
        %2699 = vmatpush1.msra.mxu0 0.0
        %2700 = vmatprep.subr.mxu0 0.0
        %2701 = vmatpush1.msra.mxu0 0.0
        %2702 = vmatprep.subr.mxu0 0.0
        %2703 = vmatpush1.msra.mxu0 0.0
        %2704 = vmatprep.subr.mxu0 0.0
        %2705 = vmatpush1.msra.mxu0 0.0
        %2706 = vmatprep.subr.mxu0 0.0
        %2707 = vmatpush1.msra.mxu0 0.0
        %2708 = vmatprep.subr.mxu0 0.0
        %2709 = vmatpush1.msra.mxu0 0.0
        %2710 = vmatprep.subr.mxu0 0.0
        %2711 = vmatpush1.msra.mxu0 0.0
        %2712 = vmatprep.subr.mxu0 0.0
        %2713 = vmatpush1.msra.mxu0 0.0
        %2714 = vmatprep.subr.mxu0 0.0
        %2715 = vmatpush1.msra.mxu0 0.0
        %2716 = vmatprep.subr.mxu0 0.0
        %2717 = vmatpush1.msra.mxu0 0.0
        %2718 = vmatprep.subr.mxu0 0.0
        %2719 = vmatpush1.msra.mxu0 0.0
        %2720 = vmatprep.mubr.f32.mxu0 0.0
        %2721 = vmatmul.mubr.f32.gmra.mrb[0].mxu0 %v2654
        %v2722 = vpop.f32.mrb[0].mxu0
        %v2723 = vadd.f32 0.0, %v2722
        %v2724 = vpop.f32.mrb[0].mxu0
        %2725 = vdwg.mxu0
        %2727 = vrot.lane.b32.xlu0 %v2389, 8
        %v2728 = vpop.permute.xlu0 %2727
        %2731 = vrot.lane.b32.xlu0 %v2556, 16
        %v2732 = vpop.permute.xlu0 %2731
        %2735 = vrot.lane.b32.xlu0 %v2723, 24
        %v2736 = vpop.permute.xlu0 %2735
        %v2738 = vsel %vm969, %v2222, %v2728
        %v2739 = vsel %vm1647, %v2738, %v2732
        %v2740 = vsel %vm1649, %v2739, %v2736
        %v2742 = vlaneseq
        %v2743 = vshrl.u32 %v2742, 7
        %v2744 = vsub.s32 0, %v2743
        %v2745 = vrot.slane %v1957, %v2744
        %v2748 = vsel %vm832, %v2740, 0
        %2750 = vmatprep.subr.mxu0 0.0
        %2751 = vmatpush1.msra.mxu0 %v1952
        %2752 = vmatprep.subr.mxu0 0.0
        %2753 = vmatpush1.msra.mxu0 %v1953
        %2754 = vmatprep.subr.mxu0 0.0
        %2755 = vmatpush1.msra.mxu0 %v1954
        %2756 = vmatprep.subr.mxu0 0.0
        %2757 = vmatpush1.msra.mxu0 %v1955
        %2758 = vmatprep.subr.mxu0 0.0
        %2759 = vmatpush1.msra.mxu0 0.0
        %2760 = vmatprep.subr.mxu0 0.0
        %2761 = vmatpush1.msra.mxu0 0.0
        %2762 = vmatprep.subr.mxu0 0.0
        %2763 = vmatpush1.msra.mxu0 0.0
        %2764 = vmatprep.subr.mxu0 0.0
        %2765 = vmatpush1.msra.mxu0 0.0
        %2766 = vmatprep.subr.mxu0 0.0
        %2767 = vmatpush1.msra.mxu0 0.0
        %2768 = vmatprep.subr.mxu0 0.0
        %2769 = vmatpush1.msra.mxu0 0.0
        %2770 = vmatprep.subr.mxu0 0.0
        %2771 = vmatpush1.msra.mxu0 0.0
        %2772 = vmatprep.subr.mxu0 0.0
        %2773 = vmatpush1.msra.mxu0 0.0
        %2774 = vmatprep.subr.mxu0 0.0
        %2775 = vmatpush1.msra.mxu0 0.0
        %2776 = vmatprep.subr.mxu0 0.0
        %2777 = vmatpush1.msra.mxu0 0.0
        %2778 = vmatprep.subr.mxu0 0.0
        %2779 = vmatpush1.msra.mxu0 0.0
        %2780 = vmatprep.subr.mxu0 0.0
        %2781 = vmatpush1.msra.mxu0 0.0
        %2782 = vmatprep.subr.mxu0 0.0
        %2783 = vmatpush1.msra.mxu0 0.0
        %2784 = vmatprep.subr.mxu0 0.0
        %2785 = vmatpush1.msra.mxu0 0.0
        %2786 = vmatprep.subr.mxu0 0.0
        %2787 = vmatpush1.msra.mxu0 0.0
        %2788 = vmatprep.subr.mxu0 0.0
        %2789 = vmatpush1.msra.mxu0 0.0
        %2790 = vmatprep.subr.mxu0 0.0
        %2791 = vmatpush1.msra.mxu0 0.0
        %2792 = vmatprep.subr.mxu0 0.0
        %2793 = vmatpush1.msra.mxu0 0.0
        %2794 = vmatprep.subr.mxu0 0.0
        %2795 = vmatpush1.msra.mxu0 0.0
        %2796 = vmatprep.subr.mxu0 0.0
        %2797 = vmatpush1.msra.mxu0 0.0
        %2798 = vmatprep.subr.mxu0 0.0
        %2799 = vmatpush1.msra.mxu0 0.0
        %2800 = vmatprep.subr.mxu0 0.0
        %2801 = vmatpush1.msra.mxu0 0.0
        %2802 = vmatprep.subr.mxu0 0.0
        %2803 = vmatpush1.msra.mxu0 0.0
        %2804 = vmatprep.subr.mxu0 0.0
        %2805 = vmatpush1.msra.mxu0 0.0
        %2806 = vmatprep.subr.mxu0 0.0
        %2807 = vmatpush1.msra.mxu0 0.0
        %2808 = vmatprep.subr.mxu0 0.0
        %2809 = vmatpush1.msra.mxu0 0.0
        %2810 = vmatprep.subr.mxu0 0.0
        %2811 = vmatpush1.msra.mxu0 0.0
        %2812 = vmatprep.subr.mxu0 0.0
        %2813 = vmatpush1.msra.mxu0 0.0
        %2814 = vmatprep.mubr.f32.mxu0 0.0
        %2815 = vmatmul.mubr.f32.gmra.mrb[0].mxu0 %v2748
        %v2816 = vpop.f32.mrb[0].mxu0
        %v2817 = vadd.f32 %v2745, %v2816
        %v2818 = vpop.f32.mrb[0].mxu0
        %2819 = vdwg.mxu0
        %v2820 = vadd.f32 %v2817, %v1941
        %v2821 = vsel %vm832, %v2820, 0.0
        %2822 = vadd.xlane.f32.xlu0 %v2821
        %v2823 = vpop.xlane.xlu0 %2822
        %v2824 = vmul.f32 %v2823, %v836
        %v2825 = vsub.f32 %v2820, %v2824
        %v2826 = vmul.f32 %v2825, %v2825
        %v2827 = vsel %vm832, %v2826, 0.0
        %2828 = vadd.xlane.f32.xlu0 %v2827
        %v2829 = vpop.xlane.xlu0 %2828
        %v2830 = vmul.f32 %v2829, %v836
        %v2831 = vadd.f32 %v2830, 1e-05
        %v2832 = vrsqrt.pop %v2831
        %v2833 = vmul.f32 %v2825, %v2832
        %v2835 = vlaneseq
        %v2836 = vshrl.u32 %v2835, 7
        %v2837 = vsub.s32 0, %v2836
        %v2838 = vrot.slane %v1959, %v2837
        %v2840 = vmul.f32 %v2833, %v2838
        %v2842 = vlaneseq
        %v2843 = vshrl.u32 %v2842, 7
        %v2844 = vsub.s32 0, %v2843
        %v2845 = vrot.slane %v1961, %v2844
        %v2847 = vadd.f32 %v2840, %v2845
        %v2849 = vlaneseq
        %v2850 = vshrl.u32 %v2849, 7
        %v2851 = vsub.s32 0, %v2850
        %v2852 = vrot.slane %v1968, %v2851
        %v2855 = vsel %vm832, %v2847, 0
        %2857 = vmatprep.subr.mxu0 0.0
        %2858 = vmatpush1.msra.mxu0 %v1963
        %2859 = vmatprep.subr.mxu0 0.0
        %2860 = vmatpush1.msra.mxu0 %v1964
        %2861 = vmatprep.subr.mxu0 0.0
        %2862 = vmatpush1.msra.mxu0 %v1965
        %2863 = vmatprep.subr.mxu0 0.0
        %2864 = vmatpush1.msra.mxu0 %v1966
        %2865 = vmatprep.subr.mxu0 0.0
        %2866 = vmatpush1.msra.mxu0 0.0
        %2867 = vmatprep.subr.mxu0 0.0
        %2868 = vmatpush1.msra.mxu0 0.0
        %2869 = vmatprep.subr.mxu0 0.0
        %2870 = vmatpush1.msra.mxu0 0.0
        %2871 = vmatprep.subr.mxu0 0.0
        %2872 = vmatpush1.msra.mxu0 0.0
        %2873 = vmatprep.subr.mxu0 0.0
        %2874 = vmatpush1.msra.mxu0 0.0
        %2875 = vmatprep.subr.mxu0 0.0
        %2876 = vmatpush1.msra.mxu0 0.0
        %2877 = vmatprep.subr.mxu0 0.0
        %2878 = vmatpush1.msra.mxu0 0.0
        %2879 = vmatprep.subr.mxu0 0.0
        %2880 = vmatpush1.msra.mxu0 0.0
        %2881 = vmatprep.subr.mxu0 0.0
        %2882 = vmatpush1.msra.mxu0 0.0
        %2883 = vmatprep.subr.mxu0 0.0
        %2884 = vmatpush1.msra.mxu0 0.0
        %2885 = vmatprep.subr.mxu0 0.0
        %2886 = vmatpush1.msra.mxu0 0.0
        %2887 = vmatprep.subr.mxu0 0.0
        %2888 = vmatpush1.msra.mxu0 0.0
        %2889 = vmatprep.subr.mxu0 0.0
        %2890 = vmatpush1.msra.mxu0 0.0
        %2891 = vmatprep.subr.mxu0 0.0
        %2892 = vmatpush1.msra.mxu0 0.0
        %2893 = vmatprep.subr.mxu0 0.0
        %2894 = vmatpush1.msra.mxu0 0.0
        %2895 = vmatprep.subr.mxu0 0.0
        %2896 = vmatpush1.msra.mxu0 0.0
        %2897 = vmatprep.subr.mxu0 0.0
        %2898 = vmatpush1.msra.mxu0 0.0
        %2899 = vmatprep.subr.mxu0 0.0
        %2900 = vmatpush1.msra.mxu0 0.0
        %2901 = vmatprep.subr.mxu0 0.0
        %2902 = vmatpush1.msra.mxu0 0.0
        %2903 = vmatprep.subr.mxu0 0.0
        %2904 = vmatpush1.msra.mxu0 0.0
        %2905 = vmatprep.subr.mxu0 0.0
        %2906 = vmatpush1.msra.mxu0 0.0
        %2907 = vmatprep.subr.mxu0 0.0
        %2908 = vmatpush1.msra.mxu0 0.0
        %2909 = vmatprep.subr.mxu0 0.0
        %2910 = vmatpush1.msra.mxu0 0.0
        %2911 = vmatprep.subr.mxu0 0.0
        %2912 = vmatpush1.msra.mxu0 0.0
        %2913 = vmatprep.subr.mxu0 0.0
        %2914 = vmatpush1.msra.mxu0 0.0
        %2915 = vmatprep.subr.mxu0 0.0
        %2916 = vmatpush1.msra.mxu0 0.0
        %2917 = vmatprep.subr.mxu0 0.0
        %2918 = vmatpush1.msra.mxu0 0.0
        %2919 = vmatprep.subr.mxu0 0.0
        %2920 = vmatpush1.msra.mxu0 0.0
        %2921 = vmatprep.mubr.f32.mxu0 0.0
        %2922 = vmatmul.mubr.f32.gmra.mrb[0].mxu0 %v2855
        %v2923 = vpop.f32.mrb[0].mxu0
        %v2924 = vadd.f32 %v2852, %v2923
        %v2925 = vpop.f32.mrb[0].mxu0
        %2926 = vdwg.mxu0
        %v2927 = vmul.f32 %v2924, 0.5
        %v2928 = vmul.f32 %v2924, 0.70710677
        %vm2929 = vcmp.ge.f32.partialorder %v2928, 0.0
        %v2930 = vsel %vm2929, 1.0, -1.0
        %v2931 = vand.u32 2147483647, %v2928
        %v2932 = vmul.f32 %v2931, 0.3275911
        %v2933 = vadd.f32 %v2932, 1.0
        %v2934 = vrcp.pop %v2933
        %v2935 = vmul.f32 1.0, %v2934
        %v2936 = vmul.f32 %v2935, 1.0614054
        %v2937 = vadd.f32 %v2936, -1.4531521
        %v2938 = vmul.f32 %v2937, %v2935
        %v2939 = vadd.f32 %v2938, 1.4214138
        %v2940 = vmul.f32 %v2939, %v2935
        %v2941 = vadd.f32 %v2940, -0.28449672
        %v2942 = vmul.f32 %v2941, %v2935
        %v2943 = vadd.f32 %v2942, 0.2548296
        %v2944 = vmul.f32 %v2943, %v2935
        %v2945 = vsub.f32 0.0, %v2931
        %v2946 = vmul.f32 %v2945, %v2931
        %v2947 = vmul.f32 %v2946, 1.442695
        %v2948 = vpow.pop %v2947
        %v2949 = vmul.f32 %v2944, %v2948
        %v2950 = vsub.f32 1.0, %v2949
        %v2951 = vmul.f32 %v2930, %v2950
        %v2952 = vadd.f32 %v2951, 1.0
        %v2953 = vmul.f32 %v2927, %v2952
        %v2955 = vlaneseq
        %v2956 = vshrl.u32 %v2955, 7
        %v2957 = vsub.s32 0, %v2956
        %v2958 = vrot.slane %v1979, %v2957
        %v2961 = vsel %vm1870, %v2953, 0
        %2963 = vmatprep.subr.mxu0 0.0
        %2964 = vmatpush1.msra.mxu0 %v1970
        %2965 = vmatprep.subr.mxu0 0.0
        %2966 = vmatpush1.msra.mxu0 %v1971
        %2967 = vmatprep.subr.mxu0 0.0
        %2968 = vmatpush1.msra.mxu0 %v1972
        %2969 = vmatprep.subr.mxu0 0.0
        %2970 = vmatpush1.msra.mxu0 %v1973
        %2971 = vmatprep.subr.mxu0 0.0
        %2972 = vmatpush1.msra.mxu0 %v1974
        %2973 = vmatprep.subr.mxu0 0.0
        %2974 = vmatpush1.msra.mxu0 %v1975
        %2975 = vmatprep.subr.mxu0 0.0
        %2976 = vmatpush1.msra.mxu0 %v1976
        %2977 = vmatprep.subr.mxu0 0.0
        %2978 = vmatpush1.msra.mxu0 %v1977
        %2979 = vmatprep.subr.mxu0 0.0
        %2980 = vmatpush1.msra.mxu0 0.0
        %2981 = vmatprep.subr.mxu0 0.0
        %2982 = vmatpush1.msra.mxu0 0.0
        %2983 = vmatprep.subr.mxu0 0.0
        %2984 = vmatpush1.msra.mxu0 0.0
        %2985 = vmatprep.subr.mxu0 0.0
        %2986 = vmatpush1.msra.mxu0 0.0
        %2987 = vmatprep.subr.mxu0 0.0
        %2988 = vmatpush1.msra.mxu0 0.0
        %2989 = vmatprep.subr.mxu0 0.0
        %2990 = vmatpush1.msra.mxu0 0.0
        %2991 = vmatprep.subr.mxu0 0.0
        %2992 = vmatpush1.msra.mxu0 0.0
        %2993 = vmatprep.subr.mxu0 0.0
        %2994 = vmatpush1.msra.mxu0 0.0
        %2995 = vmatprep.subr.mxu0 0.0
        %2996 = vmatpush1.msra.mxu0 0.0
        %2997 = vmatprep.subr.mxu0 0.0
        %2998 = vmatpush1.msra.mxu0 0.0
        %2999 = vmatprep.subr.mxu0 0.0
        %3000 = vmatpush1.msra.mxu0 0.0
        %3001 = vmatprep.subr.mxu0 0.0
        %3002 = vmatpush1.msra.mxu0 0.0
        %3003 = vmatprep.subr.mxu0 0.0
        %3004 = vmatpush1.msra.mxu0 0.0
        %3005 = vmatprep.subr.mxu0 0.0
        %3006 = vmatpush1.msra.mxu0 0.0
        %3007 = vmatprep.subr.mxu0 0.0
        %3008 = vmatpush1.msra.mxu0 0.0
        %3009 = vmatprep.subr.mxu0 0.0
        %3010 = vmatpush1.msra.mxu0 0.0
        %3011 = vmatprep.subr.mxu0 0.0
        %3012 = vmatpush1.msra.mxu0 0.0
        %3013 = vmatprep.subr.mxu0 0.0
        %3014 = vmatpush1.msra.mxu0 0.0
        %3015 = vmatprep.subr.mxu0 0.0
        %3016 = vmatpush1.msra.mxu0 0.0
        %3017 = vmatprep.subr.mxu0 0.0
        %3018 = vmatpush1.msra.mxu0 0.0
        %3019 = vmatprep.subr.mxu0 0.0
        %3020 = vmatpush1.msra.mxu0 0.0
        %3021 = vmatprep.subr.mxu0 0.0
        %3022 = vmatpush1.msra.mxu0 0.0
        %3023 = vmatprep.subr.mxu0 0.0
        %3024 = vmatpush1.msra.mxu0 0.0
        %3025 = vmatprep.subr.mxu0 0.0
        %3026 = vmatpush1.msra.mxu0 0.0
        %3027 = vmatprep.mubr.f32.mxu0 0.0
        %3028 = vmatmul.mubr.f32.gmra.mrb[0].mxu0 %v2961
        %v3029 = vpop.f32.mrb[0].mxu0
        %v3030 = vadd.f32 %v2958, %v3029
        %v3031 = vpop.f32.mrb[0].mxu0
        %3032 = vdwg.mxu0
        %3033 = vst.msk [vmem:[%s806] sm:$0xff] %vm832, %v3030
        %v3034 = vld [vmem:[%s15] sm:$0xff]
        %v3035 = vld [vmem:[%s15 + $0x8] sm:$0xff]
        %v3036 = vld [vmem:[%s15 + $0x10] sm:$0xff]
        %v3037 = vld [vmem:[%s15 + $0x18] sm:$0xff]
        %v3038 = vld [vmem:[%s16] sm:$0x1]
        %v3040 = vsel %vm832, %v3030, 0
        %3042 = vmatprep.subr.mxu0 0.0
        %3043 = vmatpush1.msra.mxu0 %v3034
        %3044 = vmatprep.subr.mxu0 0.0
        %3045 = vmatpush1.msra.mxu0 %v3035
        %3046 = vmatprep.subr.mxu0 0.0
        %3047 = vmatpush1.msra.mxu0 %v3036
        %3048 = vmatprep.subr.mxu0 0.0
        %3049 = vmatpush1.msra.mxu0 %v3037
        %3050 = vmatprep.subr.mxu0 0.0
        %3051 = vmatpush1.msra.mxu0 0.0
        %3052 = vmatprep.subr.mxu0 0.0
        %3053 = vmatpush1.msra.mxu0 0.0
        %3054 = vmatprep.subr.mxu0 0.0
        %3055 = vmatpush1.msra.mxu0 0.0
        %3056 = vmatprep.subr.mxu0 0.0
        %3057 = vmatpush1.msra.mxu0 0.0
        %3058 = vmatprep.subr.mxu0 0.0
        %3059 = vmatpush1.msra.mxu0 0.0
        %3060 = vmatprep.subr.mxu0 0.0
        %3061 = vmatpush1.msra.mxu0 0.0
        %3062 = vmatprep.subr.mxu0 0.0
        %3063 = vmatpush1.msra.mxu0 0.0
        %3064 = vmatprep.subr.mxu0 0.0
        %3065 = vmatpush1.msra.mxu0 0.0
        %3066 = vmatprep.subr.mxu0 0.0
        %3067 = vmatpush1.msra.mxu0 0.0
        %3068 = vmatprep.subr.mxu0 0.0
        %3069 = vmatpush1.msra.mxu0 0.0
        %3070 = vmatprep.subr.mxu0 0.0
        %3071 = vmatpush1.msra.mxu0 0.0
        %3072 = vmatprep.subr.mxu0 0.0
        %3073 = vmatpush1.msra.mxu0 0.0
        %3074 = vmatprep.subr.mxu0 0.0
        %3075 = vmatpush1.msra.mxu0 0.0
        %3076 = vmatprep.subr.mxu0 0.0
        %3077 = vmatpush1.msra.mxu0 0.0
        %3078 = vmatprep.subr.mxu0 0.0
        %3079 = vmatpush1.msra.mxu0 0.0
        %3080 = vmatprep.subr.mxu0 0.0
        %3081 = vmatpush1.msra.mxu0 0.0
        %3082 = vmatprep.subr.mxu0 0.0
        %3083 = vmatpush1.msra.mxu0 0.0
        %3084 = vmatprep.subr.mxu0 0.0
        %3085 = vmatpush1.msra.mxu0 0.0
        %3086 = vmatprep.subr.mxu0 0.0
        %3087 = vmatpush1.msra.mxu0 0.0
        %3088 = vmatprep.subr.mxu0 0.0
        %3089 = vmatpush1.msra.mxu0 0.0
        %3090 = vmatprep.subr.mxu0 0.0
        %3091 = vmatpush1.msra.mxu0 0.0
        %3092 = vmatprep.subr.mxu0 0.0
        %3093 = vmatpush1.msra.mxu0 0.0
        %3094 = vmatprep.subr.mxu0 0.0
        %3095 = vmatpush1.msra.mxu0 0.0
        %3096 = vmatprep.subr.mxu0 0.0
        %3097 = vmatpush1.msra.mxu0 0.0
        %3098 = vmatprep.subr.mxu0 0.0
        %3099 = vmatpush1.msra.mxu0 0.0
        %3100 = vmatprep.subr.mxu0 0.0
        %3101 = vmatpush1.msra.mxu0 0.0
        %3102 = vmatprep.subr.mxu0 0.0
        %3103 = vmatpush1.msra.mxu0 0.0
        %3104 = vmatprep.subr.mxu0 0.0
        %3105 = vmatpush1.msra.mxu0 0.0
        %3106 = vmatprep.mubr.f32.mxu0 0.0
        %3107 = vmatmul.mubr.f32.gmra.mrb[0].mxu0 %v3040
        %v3108 = vpop.f32.mrb[0].mxu0
        %v3109 = vadd.f32 %v3038, %v3108
        %v3110 = vpop.f32.mrb[0].mxu0
        %3111 = vdwg.mxu0
        %v3112 = vtanh.pop %v3109
        %v3113 = vld [vmem:[%s17] sm:$0xff]
        %v3114 = vld [vmem:[%s17 + $0x8] sm:$0xff]
        %v3115 = vld [vmem:[%s17 + $0x10] sm:$0xff]
        %v3116 = vld [vmem:[%s17 + $0x18] sm:$0xff]
        %v3117 = vld [vmem:[%s18] sm:$0x1]
        %v3119 = vsel %vm832, %v3112, 0
        %3121 = vmatprep.subr.mxu0 0.0
        %3122 = vmatpush1.msra.mxu0 %v3113
        %3123 = vmatprep.subr.mxu0 0.0
        %3124 = vmatpush1.msra.mxu0 %v3114
        %3125 = vmatprep.subr.mxu0 0.0
        %3126 = vmatpush1.msra.mxu0 %v3115
        %3127 = vmatprep.subr.mxu0 0.0
        %3128 = vmatpush1.msra.mxu0 %v3116
        %3129 = vmatprep.subr.mxu0 0.0
        %3130 = vmatpush1.msra.mxu0 0.0
        %3131 = vmatprep.subr.mxu0 0.0
        %3132 = vmatpush1.msra.mxu0 0.0
        %3133 = vmatprep.subr.mxu0 0.0
        %3134 = vmatpush1.msra.mxu0 0.0
        %3135 = vmatprep.subr.mxu0 0.0
        %3136 = vmatpush1.msra.mxu0 0.0
        %3137 = vmatprep.subr.mxu0 0.0
        %3138 = vmatpush1.msra.mxu0 0.0
        %3139 = vmatprep.subr.mxu0 0.0
        %3140 = vmatpush1.msra.mxu0 0.0
        %3141 = vmatprep.subr.mxu0 0.0
        %3142 = vmatpush1.msra.mxu0 0.0
        %3143 = vmatprep.subr.mxu0 0.0
        %3144 = vmatpush1.msra.mxu0 0.0
        %3145 = vmatprep.subr.mxu0 0.0
        %3146 = vmatpush1.msra.mxu0 0.0
        %3147 = vmatprep.subr.mxu0 0.0
        %3148 = vmatpush1.msra.mxu0 0.0
        %3149 = vmatprep.subr.mxu0 0.0
        %3150 = vmatpush1.msra.mxu0 0.0
        %3151 = vmatprep.subr.mxu0 0.0
        %3152 = vmatpush1.msra.mxu0 0.0
        %3153 = vmatprep.subr.mxu0 0.0
        %3154 = vmatpush1.msra.mxu0 0.0
        %3155 = vmatprep.subr.mxu0 0.0
        %3156 = vmatpush1.msra.mxu0 0.0
        %3157 = vmatprep.subr.mxu0 0.0
        %3158 = vmatpush1.msra.mxu0 0.0
        %3159 = vmatprep.subr.mxu0 0.0
        %3160 = vmatpush1.msra.mxu0 0.0
        %3161 = vmatprep.subr.mxu0 0.0
        %3162 = vmatpush1.msra.mxu0 0.0
        %3163 = vmatprep.subr.mxu0 0.0
        %3164 = vmatpush1.msra.mxu0 0.0
        %3165 = vmatprep.subr.mxu0 0.0
        %3166 = vmatpush1.msra.mxu0 0.0
        %3167 = vmatprep.subr.mxu0 0.0
        %3168 = vmatpush1.msra.mxu0 0.0
        %3169 = vmatprep.subr.mxu0 0.0
        %3170 = vmatpush1.msra.mxu0 0.0
        %3171 = vmatprep.subr.mxu0 0.0
        %3172 = vmatpush1.msra.mxu0 0.0
        %3173 = vmatprep.subr.mxu0 0.0
        %3174 = vmatpush1.msra.mxu0 0.0
        %3175 = vmatprep.subr.mxu0 0.0
        %3176 = vmatpush1.msra.mxu0 0.0
        %3177 = vmatprep.subr.mxu0 0.0
        %3178 = vmatpush1.msra.mxu0 0.0
        %3179 = vmatprep.subr.mxu0 0.0
        %3180 = vmatpush1.msra.mxu0 0.0
        %3181 = vmatprep.subr.mxu0 0.0
        %3182 = vmatpush1.msra.mxu0 0.0
        %3183 = vmatprep.subr.mxu0 0.0
        %3184 = vmatpush1.msra.mxu0 0.0
        %3185 = vmatprep.mubr.f32.mxu0 0.0
        %3186 = vmatmul.mubr.f32.gmra.mrb[0].mxu0 %v3119
        %v3187 = vpop.f32.mrb[0].mxu0
        %v3188 = vadd.f32 %v3117, %v3187
        %v3189 = vpop.f32.mrb[0].mxu0
        %3190 = vdwg.mxu0
        %vm3191 = vcmask 8192
        %3192 = vst.msk [vmem:[%s812] sm:$0x1] %vm3191, %v3188
        %v3193 = vlaneseq
        %v3194 = vand.u32 %v3193, 127
        %s3195 = smul.u32 %s51, 128
        %s3196 = sld [smem:[#allocation3 + %s3195]]
        %v3197 = vstv %s3196
        %vm3198 = vcmp.eq.s32.totalorder %v3194, %v3197
        %v3199 = vsel %vm3198, 1, 0
        %v3200 = vcvt.s32.f32 %v3199
        %s3201 = sadd.s32 %s3195, 1
        %s3202 = sld [smem:[#allocation3 + %s3201]]
        %v3203 = vstv %s3202
        %vm3204 = vcmp.eq.s32.totalorder %v3194, %v3203
        %v3205 = vsel %vm3204, 1, 0
        %v3206 = vcvt.s32.f32 %v3205
        %vm3207 = vcmask 1040384
        %v3208 = vsel %vm3207, %v3200, %v3206
        %v3210 = vsel %vm969, %v3208, 0
        %3212 = vmatprep.subr.mxu0 0.0
        %3213 = vmatpush1.msra.mxu0 %v3030
        %3214 = vmatprep.subr.mxu0 0.0
        %3215 = vmatpush1.msra.mxu0 0.0
        %3216 = vmatprep.subr.mxu0 0.0
        %3217 = vmatpush1.msra.mxu0 0.0
        %3218 = vmatprep.subr.mxu0 0.0
        %3219 = vmatpush1.msra.mxu0 0.0
        %3220 = vmatprep.subr.mxu0 0.0
        %3221 = vmatpush1.msra.mxu0 0.0
        %3222 = vmatprep.subr.mxu0 0.0
        %3223 = vmatpush1.msra.mxu0 0.0
        %3224 = vmatprep.subr.mxu0 0.0
        %3225 = vmatpush1.msra.mxu0 0.0
        %3226 = vmatprep.subr.mxu0 0.0
        %3227 = vmatpush1.msra.mxu0 0.0
        %3228 = vmatprep.subr.mxu0 0.0
        %3229 = vmatpush1.msra.mxu0 0.0
        %3230 = vmatprep.subr.mxu0 0.0
        %3231 = vmatpush1.msra.mxu0 0.0
        %3232 = vmatprep.subr.mxu0 0.0
        %3233 = vmatpush1.msra.mxu0 0.0
        %3234 = vmatprep.subr.mxu0 0.0
        %3235 = vmatpush1.msra.mxu0 0.0
        %3236 = vmatprep.subr.mxu0 0.0
        %3237 = vmatpush1.msra.mxu0 0.0
        %3238 = vmatprep.subr.mxu0 0.0
        %3239 = vmatpush1.msra.mxu0 0.0
        %3240 = vmatprep.subr.mxu0 0.0
        %3241 = vmatpush1.msra.mxu0 0.0
        %3242 = vmatprep.subr.mxu0 0.0
        %3243 = vmatpush1.msra.mxu0 0.0
        %3244 = vmatprep.subr.mxu0 0.0
        %3245 = vmatpush1.msra.mxu0 0.0
        %3246 = vmatprep.subr.mxu0 0.0
        %3247 = vmatpush1.msra.mxu0 0.0
        %3248 = vmatprep.subr.mxu0 0.0
        %3249 = vmatpush1.msra.mxu0 0.0
        %3250 = vmatprep.subr.mxu0 0.0
        %3251 = vmatpush1.msra.mxu0 0.0
        %3252 = vmatprep.subr.mxu0 0.0
        %3253 = vmatpush1.msra.mxu0 0.0
        %3254 = vmatprep.subr.mxu0 0.0
        %3255 = vmatpush1.msra.mxu0 0.0
        %3256 = vmatprep.subr.mxu0 0.0
        %3257 = vmatpush1.msra.mxu0 0.0
        %3258 = vmatprep.subr.mxu0 0.0
        %3259 = vmatpush1.msra.mxu0 0.0
        %3260 = vmatprep.subr.mxu0 0.0
        %3261 = vmatpush1.msra.mxu0 0.0
        %3262 = vmatprep.subr.mxu0 0.0
        %3263 = vmatpush1.msra.mxu0 0.0
        %3264 = vmatprep.subr.mxu0 0.0
        %3265 = vmatpush1.msra.mxu0 0.0
        %3266 = vmatprep.subr.mxu0 0.0
        %3267 = vmatpush1.msra.mxu0 0.0
        %3268 = vmatprep.subr.mxu0 0.0
        %3269 = vmatpush1.msra.mxu0 0.0
        %3270 = vmatprep.subr.mxu0 0.0
        %3271 = vmatpush1.msra.mxu0 0.0
        %3272 = vmatprep.subr.mxu0 0.0
        %3273 = vmatpush1.msra.mxu0 0.0
        %3274 = vmatprep.subr.mxu0 0.0
        %3275 = vmatpush1.msra.mxu0 0.0
        %3276 = vmatprep.mubr.f32.mxu0 0.0
        %3277 = vmatmul.mubr.f32.gmra.mrb[0].mxu0 %v3210
        %v3278 = vpop.f32.mrb[0].mxu0
        %v3279 = vadd.f32 0.0, %v3278
        %v3280 = vpop.f32.mrb[0].mxu0
        %3281 = vdwg.mxu0
        %v3282 = vld [vmem:[%s19] sm:$0xff]
        %v3283 = vld [vmem:[%s19 + $0x8] sm:$0xff]
        %v3284 = vld [vmem:[%s19 + $0x10] sm:$0xff]
        %v3285 = vld [vmem:[%s19 + $0x18] sm:$0xff]
        %v3286 = vld [vmem:[%s20] sm:$0x1]
        %v3288 = vlaneseq
        %v3289 = vshrl.u32 %v3288, 7
        %v3290 = vsub.s32 0, %v3289
        %v3291 = vrot.slane %v3286, %v3290
        %v3294 = vsel %vm832, %v3279, 0
        %3296 = vmatprep.subr.mxu0 0.0
        %3297 = vmatpush1.msra.mxu0 %v3282
        %3298 = vmatprep.subr.mxu0 0.0
        %3299 = vmatpush1.msra.mxu0 %v3283
        %3300 = vmatprep.subr.mxu0 0.0
        %3301 = vmatpush1.msra.mxu0 %v3284
        %3302 = vmatprep.subr.mxu0 0.0
        %3303 = vmatpush1.msra.mxu0 %v3285
        %3304 = vmatprep.subr.mxu0 0.0
        %3305 = vmatpush1.msra.mxu0 0.0
        %3306 = vmatprep.subr.mxu0 0.0
        %3307 = vmatpush1.msra.mxu0 0.0
        %3308 = vmatprep.subr.mxu0 0.0
        %3309 = vmatpush1.msra.mxu0 0.0
        %3310 = vmatprep.subr.mxu0 0.0
        %3311 = vmatpush1.msra.mxu0 0.0
        %3312 = vmatprep.subr.mxu0 0.0
        %3313 = vmatpush1.msra.mxu0 0.0
        %3314 = vmatprep.subr.mxu0 0.0
        %3315 = vmatpush1.msra.mxu0 0.0
        %3316 = vmatprep.subr.mxu0 0.0
        %3317 = vmatpush1.msra.mxu0 0.0
        %3318 = vmatprep.subr.mxu0 0.0
        %3319 = vmatpush1.msra.mxu0 0.0
        %3320 = vmatprep.subr.mxu0 0.0
        %3321 = vmatpush1.msra.mxu0 0.0
        %3322 = vmatprep.subr.mxu0 0.0
        %3323 = vmatpush1.msra.mxu0 0.0
        %3324 = vmatprep.subr.mxu0 0.0
        %3325 = vmatpush1.msra.mxu0 0.0
        %3326 = vmatprep.subr.mxu0 0.0
        %3327 = vmatpush1.msra.mxu0 0.0
        %3328 = vmatprep.subr.mxu0 0.0
        %3329 = vmatpush1.msra.mxu0 0.0
        %3330 = vmatprep.subr.mxu0 0.0
        %3331 = vmatpush1.msra.mxu0 0.0
        %3332 = vmatprep.subr.mxu0 0.0
        %3333 = vmatpush1.msra.mxu0 0.0
        %3334 = vmatprep.subr.mxu0 0.0
        %3335 = vmatpush1.msra.mxu0 0.0
        %3336 = vmatprep.subr.mxu0 0.0
        %3337 = vmatpush1.msra.mxu0 0.0
        %3338 = vmatprep.subr.mxu0 0.0
        %3339 = vmatpush1.msra.mxu0 0.0
        %3340 = vmatprep.subr.mxu0 0.0
        %3341 = vmatpush1.msra.mxu0 0.0
        %3342 = vmatprep.subr.mxu0 0.0
        %3343 = vmatpush1.msra.mxu0 0.0
        %3344 = vmatprep.subr.mxu0 0.0
        %3345 = vmatpush1.msra.mxu0 0.0
        %3346 = vmatprep.subr.mxu0 0.0
        %3347 = vmatpush1.msra.mxu0 0.0
        %3348 = vmatprep.subr.mxu0 0.0
        %3349 = vmatpush1.msra.mxu0 0.0
        %3350 = vmatprep.subr.mxu0 0.0
        %3351 = vmatpush1.msra.mxu0 0.0
        %3352 = vmatprep.subr.mxu0 0.0
        %3353 = vmatpush1.msra.mxu0 0.0
        %3354 = vmatprep.subr.mxu0 0.0
        %3355 = vmatpush1.msra.mxu0 0.0
        %3356 = vmatprep.subr.mxu0 0.0
        %3357 = vmatpush1.msra.mxu0 0.0
        %3358 = vmatprep.subr.mxu0 0.0
        %3359 = vmatpush1.msra.mxu0 0.0
        %3360 = vmatprep.mubr.f32.mxu0 0.0
        %3361 = vmatmul.mubr.f32.gmra.mrb[0].mxu0 %v3294
        %v3362 = vpop.f32.mrb[0].mxu0
        %v3363 = vadd.f32 %v3291, %v3362
        %v3364 = vpop.f32.mrb[0].mxu0
        %3365 = vdwg.mxu0
        %v3366 = vmul.f32 %v3363, 0.5
        %v3367 = vmul.f32 %v3363, 0.70710677
        %vm3368 = vcmp.ge.f32.partialorder %v3367, 0.0
        %v3369 = vsel %vm3368, 1.0, -1.0
        %v3370 = vand.u32 2147483647, %v3367
        %v3371 = vmul.f32 %v3370, 0.3275911
        %v3372 = vadd.f32 %v3371, 1.0
        %v3373 = vrcp.pop %v3372
        %v3374 = vmul.f32 1.0, %v3373
        %v3375 = vmul.f32 %v3374, 1.0614054
        %v3376 = vadd.f32 %v3375, -1.4531521
        %v3377 = vmul.f32 %v3376, %v3374
        %v3378 = vadd.f32 %v3377, 1.4214138
        %v3379 = vmul.f32 %v3378, %v3374
        %v3380 = vadd.f32 %v3379, -0.28449672
        %v3381 = vmul.f32 %v3380, %v3374
        %v3382 = vadd.f32 %v3381, 0.2548296
        %v3383 = vmul.f32 %v3382, %v3374
        %v3384 = vsub.f32 0.0, %v3370
        %v3385 = vmul.f32 %v3384, %v3370
        %v3386 = vmul.f32 %v3385, 1.442695
        %v3387 = vpow.pop %v3386
        %v3388 = vmul.f32 %v3383, %v3387
        %v3389 = vsub.f32 1.0, %v3388
        %v3390 = vmul.f32 %v3369, %v3389
        %v3391 = vadd.f32 %v3390, 1.0
        %v3392 = vmul.f32 %v3366, %v3391
        %v3393 = vld [vmem:[%s21] sm:$0x1]
        %v3394 = vld [vmem:[%s22] sm:$0x1]
        %vm3395 = vcmask 254976
        %v3396 = vsel %vm3395, %v3392, 0.0
        %3397 = vadd.xlane.f32.xlu0 %v3396
        %v3398 = vpop.xlane.xlu0 %3397
        %v3399 = vmul.f32 %v3398, %v836
        %v3400 = vsub.f32 %v3392, %v3399
        %v3401 = vmul.f32 %v3400, %v3400
        %v3402 = vsel %vm3395, %v3401, 0.0
        %3403 = vadd.xlane.f32.xlu0 %v3402
        %v3404 = vpop.xlane.xlu0 %3403
        %v3405 = vmul.f32 %v3404, %v836
        %v3406 = vadd.f32 %v3405, 1e-05
        %v3407 = vrsqrt.pop %v3406
        %v3408 = vmul.f32 %v3400, %v3407
        %v3410 = vlaneseq
        %v3411 = vshrl.u32 %v3410, 7
        %v3412 = vsub.s32 0, %v3411
        %v3413 = vrot.slane %v3393, %v3412
        %v3415 = vmul.f32 %v3408, %v3413
        %v3417 = vlaneseq
        %v3418 = vshrl.u32 %v3417, 7
        %v3419 = vsub.s32 0, %v3418
        %v3420 = vrot.slane %v3394, %v3419
        %v3422 = vadd.f32 %v3415, %v3420
        %v3423 = vld [vmem:[%s23] sm:$0xff]
        %v3424 = vld [vmem:[%s23 + $0x8] sm:$0xff]
        %v3425 = vld [vmem:[%s23 + $0x10] sm:$0xff]
        %v3426 = vld [vmem:[%s23 + $0x18] sm:$0xff]
        %v3427 = vld [vmem:[%s23 + $0x20] sm:$0xff]
        %v3428 = vld [vmem:[%s23 + $0x28] sm:$0xff]
        %v3429 = vld [vmem:[%s23 + $0x30] sm:$0xff]
        %v3430 = vld [vmem:[%s23 + $0x38] sm:$0xff]
        %v3431 = vld [vmem:[%s24] sm:$0x1]
        %v3433 = vlaneseq
        %v3434 = vshrl.u32 %v3433, 7
        %v3435 = vsub.s32 0, %v3434
        %v3436 = vrot.slane %v3431, %v3435
        %v3439 = vsel %vm832, %v3422, 0
        %v3442 = vsel %vm832, %v3423, 0
        %v3445 = vsel %vm832, %v3424, 0
        %v3448 = vsel %vm832, %v3425, 0
        %v3451 = vsel %vm832, %v3426, 0
        %v3454 = vsel %vm832, %v3427, 0
        %v3457 = vsel %vm832, %v3428, 0
        %v3460 = vsel %vm832, %v3429, 0
        %v3463 = vsel %vm832, %v3430, 0
        %3465 = vmatprep.subr.mxu0 0.0
        %3466 = vmatpush1.xpose.msra.mxu0 %v3442
        %3467 = vmatprep.subr.mxu0 0.0
        %3468 = vmatpush1.xpose.msra.mxu0 %v3445
        %3469 = vmatprep.subr.mxu0 0.0
        %3470 = vmatpush1.xpose.msra.mxu0 %v3448
        %3471 = vmatprep.subr.mxu0 0.0
        %3472 = vmatpush1.xpose.msra.mxu0 %v3451
        %3473 = vmatprep.subr.mxu0 0.0
        %3474 = vmatpush1.xpose.msra.mxu0 %v3454
        %3475 = vmatprep.subr.mxu0 0.0
        %3476 = vmatpush1.xpose.msra.mxu0 %v3457
        %3477 = vmatprep.subr.mxu0 0.0
        %3478 = vmatpush1.xpose.msra.mxu0 %v3460
        %3479 = vmatprep.subr.mxu0 0.0
        %3480 = vmatpush1.xpose.msra.mxu0 %v3463
        %3481 = vmatprep.subr.mxu0 0.0
        %3482 = vmatpush1.xpose.msra.mxu0 0.0
        %3483 = vmatprep.subr.mxu0 0.0
        %3484 = vmatpush1.xpose.msra.mxu0 0.0
        %3485 = vmatprep.subr.mxu0 0.0
        %3486 = vmatpush1.xpose.msra.mxu0 0.0
        %3487 = vmatprep.subr.mxu0 0.0
        %3488 = vmatpush1.xpose.msra.mxu0 0.0
        %3489 = vmatprep.subr.mxu0 0.0
        %3490 = vmatpush1.xpose.msra.mxu0 0.0
        %3491 = vmatprep.subr.mxu0 0.0
        %3492 = vmatpush1.xpose.msra.mxu0 0.0
        %3493 = vmatprep.subr.mxu0 0.0
        %3494 = vmatpush1.xpose.msra.mxu0 0.0
        %3495 = vmatprep.subr.mxu0 0.0
        %3496 = vmatpush1.xpose.msra.mxu0 0.0
        %3497 = vmatprep.subr.mxu0 0.0
        %3498 = vmatpush1.xpose.msra.mxu0 0.0
        %3499 = vmatprep.subr.mxu0 0.0
        %3500 = vmatpush1.xpose.msra.mxu0 0.0
        %3501 = vmatprep.subr.mxu0 0.0
        %3502 = vmatpush1.xpose.msra.mxu0 0.0
        %3503 = vmatprep.subr.mxu0 0.0
        %3504 = vmatpush1.xpose.msra.mxu0 0.0
        %3505 = vmatprep.subr.mxu0 0.0
        %3506 = vmatpush1.xpose.msra.mxu0 0.0
        %3507 = vmatprep.subr.mxu0 0.0
        %3508 = vmatpush1.xpose.msra.mxu0 0.0
        %3509 = vmatprep.subr.mxu0 0.0
        %3510 = vmatpush1.xpose.msra.mxu0 0.0
        %3511 = vmatprep.subr.mxu0 0.0
        %3512 = vmatpush1.xpose.msra.mxu0 0.0
        %3513 = vmatprep.subr.mxu0 0.0
        %3514 = vmatpush1.xpose.msra.mxu0 0.0
        %3515 = vmatprep.subr.mxu0 0.0
        %3516 = vmatpush1.xpose.msra.mxu0 0.0
        %3517 = vmatprep.subr.mxu0 0.0
        %3518 = vmatpush1.xpose.msra.mxu0 0.0
        %3519 = vmatprep.subr.mxu0 0.0
        %3520 = vmatpush1.xpose.msra.mxu0 0.0
        %3521 = vmatprep.subr.mxu0 0.0
        %3522 = vmatpush1.xpose.msra.mxu0 0.0
        %3523 = vmatprep.subr.mxu0 0.0
        %3524 = vmatpush1.xpose.msra.mxu0 0.0
        %3525 = vmatprep.subr.mxu0 0.0
        %3526 = vmatpush1.xpose.msra.mxu0 0.0
        %3527 = vmatprep.subr.mxu0 0.0
        %3528 = vmatpush1.xpose.msra.mxu0 0.0
        %3529 = vmatprep.mubr.f32.mxu0 0.0
        %3530 = vmatmul.mubr.f32.gmra.mrb[0].mxu0 %v3439
        %v3531 = vpop.f32.mrb[0].mxu0
        %v3532 = vadd.f32 %v3436, %v3531
        %v3533 = vpop.f32.mrb[0].mxu0
        %3534 = vdwg.mxu0
        %vm3535 = vcmask 517120
        %3536 = vst.msk [vmem:[%s819] sm:$0x3] %vm3535, %v3532
        %s3537 = sand.u32 %s573, 1
        %s3538 = scalar_lea.sflag [#allocation5], %s3537
        %s3539 = sand.u32 %s573, 1
        %s3540 = smul.addr %s3539, 8
        %s3541 = scalar_lea.vmem [#allocation4], %s3540
        %s3542 = sand.u32 %s51, 1
        %s3543 = scalar_lea.sflag [#allocation7], %s3542
        %s3544 = sand.u32 %s599, 1
        %s3545 = scalar_lea.vmem [#allocation6], %s3544
        %s3546 = sand.u32 %s51, 1
        %s3547 = scalar_lea.sflag [#allocation7], %s3546
        %s3548 = sand.u32 %s625, 1
        %s3549 = smul.addr %s3548, 2
        %s3550 = scalar_lea.vmem [#allocation8], %s3549
        // Predicated region
        $region117: #{bert_forward.1} parent=115 // pred_check
          %p3551 = pneg %p583
        $region118: #{bert_forward.1} parent=115 // pred_check_branch
          %3553 = sbr.rel (%p3551) target = $region120
        $region119: #{bert_forward.1} parent=115 // pred_region
          %s3555 = ssub.s32 128, 128
          %3556 = vsyncadd %s3538, %s3555
          %s3557 = smul.addr %s51, 128
          %s3558 = scalar_lea.hbm %s25, %s3557
          %s3560 = sshll.u32 %s3541, 4
          %s3561 = int_to_ptr.vmem [resolvable:$true] %s3560
          %3563 = dma.vmem_to_hbm [thread:$0]  %s3561, 128, %s3558, %s3538
        $region120: #{bert_forward.1} parent=115 // pred_fallthru
          _
        // Predicated region
        $region121: #{bert_forward.1} parent=115 // pred_check
          %p3564 = pneg %p609
        $region122: #{bert_forward.1} parent=115 // pred_check_branch
          %3566 = sbr.rel (%p3564) target = $region124
        $region123: #{bert_forward.1} parent=115 // pred_region
          %s3568 = ssub.s32 16, 16
          %3569 = vsyncadd %s3543, %s3568
          %s3570 = smul.addr %s51, 16
          %s3571 = scalar_lea.hbm %s26, %s3570
          %s3573 = sshll.u32 %s3545, 4
          %s3574 = int_to_ptr.vmem [resolvable:$true] %s3573
          %3576 = dma.vmem_to_hbm [thread:$0]  %s3574, 16, %s3571, %s3543
        $region124: #{bert_forward.1} parent=115 // pred_fallthru
          _
        // Predicated region
        $region125: #{bert_forward.1} parent=115 // pred_check
          %p3577 = pneg %p635
        $region126: #{bert_forward.1} parent=115 // pred_check_branch
          %3579 = sbr.rel (%p3577) target = $region128
        $region127: #{bert_forward.1} parent=115 // pred_region
          %s3581 = ssub.s32 32, 32
          %3582 = vsyncadd %s3547, %s3581
          %s3583 = smul.addr %s51, 32
          %s3584 = scalar_lea.hbm %s27, %s3583
          %s3586 = sshll.u32 %s3550, 4
          %s3587 = int_to_ptr.vmem [resolvable:$true] %s3586
          %3589 = dma.vmem_to_hbm [thread:$0]  %s3587, 32, %s3584, %s3547
        $region128: #{bert_forward.1} parent=115 // pred_fallthru
          _
      $region116: #{bert_forward.1} parent=5 // pred_fallthru
        _
      %p3590 = scmp.le.s32.totalorder 2, %s46
      // Predicated region
      $region129: #{bert_forward.1} parent=5 // pred_check
        %p3591 = pneg %p3590
      $region130: #{bert_forward.1} parent=5 // pred_check_branch
        %3593 = sbr.rel (%p3591) target = $region132
      $region131: #{bert_forward.1} parent=5 // pred_region
        %s3594 = ssub.s32 %s46, 2
        // Predicated region
        $region133: #{bert_forward.1} parent=131 // pred_check
          %p3595 = pneg %p589
        $region134: #{bert_forward.1} parent=131 // pred_check_branch
          %3597 = sbr.rel (%p3595) target = $region136
        $region135: #{bert_forward.1} parent=131 // pred_region
          %s3598 = sand.u32 %s574, 1
          %s3599 = scalar_lea.sflag [#allocation5], %s3598
          %s3600 = sand.u32 %s574, 1
          %s3601 = smul.addr %s3600, 8
          %s3602 = scalar_lea.vmem [#allocation4], %s3601
          %3603 = dma.done %s3599, 128
        $region136: #{bert_forward.1} parent=131 // pred_fallthru
          _
        // Predicated region
        $region137: #{bert_forward.1} parent=131 // pred_check
          %p3604 = pneg %p615
        $region138: #{bert_forward.1} parent=131 // pred_check_branch
          %3606 = sbr.rel (%p3604) target = $region140
        $region139: #{bert_forward.1} parent=131 // pred_region
          %s3607 = sand.u32 %s52, 1
          %s3608 = scalar_lea.sflag [#allocation7], %s3607
          %s3609 = sand.u32 %s600, 1
          %s3610 = scalar_lea.vmem [#allocation6], %s3609
          %3611 = dma.done %s3608, 16
        $region140: #{bert_forward.1} parent=131 // pred_fallthru
          _
        // Predicated region
        $region141: #{bert_forward.1} parent=131 // pred_check
          %p3612 = pneg %p641
        $region142: #{bert_forward.1} parent=131 // pred_check_branch
          %3614 = sbr.rel (%p3612) target = $region144
        $region143: #{bert_forward.1} parent=131 // pred_region
          %s3615 = sand.u32 %s52, 1
          %s3616 = scalar_lea.sflag [#allocation7], %s3615
          %s3617 = sand.u32 %s626, 1
          %s3618 = smul.addr %s3617, 2
          %s3619 = scalar_lea.vmem [#allocation8], %s3618
          %3620 = dma.done %s3616, 32
        $region144: #{bert_forward.1} parent=131 // pred_fallthru
          _
      $region132: #{bert_forward.1} parent=5 // pred_fallthru
        _
    $region6: #{bert_forward.1} parent=1 // loop_footer
      %s50 = sadd.s32 1, %s46
    $region7: #{bert_forward.1} parent=1 // loop_footer_branch
      %45 = sbr.rel target = $region3
    $region8: #{bert_forward.1} parent=1 // loop_exit
      _
    %3621 = vsyncpa [#allocation5], 1
    %s3622 = scalar_lea.sflag [#allocation5], 1
    %3623 = vsyncpa %s3622, 1
    %3624 = vsyncpa [#allocation7], 1
    %s3625 = scalar_lea.sflag [#allocation7], 1
    %3626 = vsyncpa %s3625, 1

</llo_original>
